<compile_context>
chip_gen: v7x
topology: tpu7x:2x2x1
jax: 0.10.0
libtpu: 0.0.40
codegen_flags: <defaults>
</compile_context>

<pallas_src>
import functools
import math

import numpy as np
import jax
import jax.numpy as jnp
from jax.experimental import pallas as pl
from jax.experimental.pallas import tpu as pltpu

D_MODEL = 64
N_HEAD = 4
HEAD_DIM = D_MODEL // N_HEAD
DIM_FF = 128
NUM_LAYERS = 2
LN_EPS = 1e-5
LOGIT_PAD = 128                     # lane-dense classifier output slab width


def _layer_norm(x, gamma, beta):
    mu = jnp.mean(x, axis=-1, keepdims=True)
    var = jnp.mean(jnp.square(x - mu), axis=-1, keepdims=True)
    return (x - mu) * jax.lax.rsqrt(var + LN_EPS) * gamma + beta


def fused_transformer_kernel(tok_ref, emb_ref,
                             wqkv_ref, bqkv_ref, wo_ref, bo_ref,
                             g1_ref, be1_ref, w1_ref, bf1_ref,
                             w2_ref, bf2_ref, g2_ref, be2_ref,
                             wc_ref, bc_ref, mask_ref, o_ref, *, tb, seq):
    rows = tb * seq
    vocab = emb_ref.shape[0]
    bf16 = jnp.bfloat16
    hs = N_HEAD * seq

    # 0/1 head mask (hs, 64): row j = h*seq + k keeps only head h's 16 feature
    # lanes.  Shared by the score masking, the context masking and the
    # softmax-denominator matmul; loaded once, reused by both layers.
    mask_bf = mask_ref[...]

    # ---- embedding gather fused in-kernel: bf16 one-hot @ bf16 table
    # (single MXU pass; 0/1 one-hot is exact in bf16).
    # TODO(synk): for large vocabularies use a DMA gather instead of one-hot.
    tok = tok_ref[...]                                            # (rows, 1) i32
    onehot = (jax.lax.broadcasted_iota(jnp.int32, (rows, vocab), 1)
              == tok).astype(bf16)
    x = jnp.dot(onehot, emb_ref[...].astype(bf16),
                preferred_element_type=jnp.float32)               # (rows, 64) f32

    scale = 1.0 / math.sqrt(HEAD_DIM)

    for l in range(NUM_LAYERS):      # static unroll; layer weights VMEM-resident
        # Fused QKV projection: one (rows,64) @ (64,192) MXU pass.
        qkv = jnp.dot(x.astype(bf16), wqkv_ref[l],
                      preferred_element_type=jnp.float32) + bqkv_ref[l]
        # Only three 64-lane-aligned slices (no per-head 16-lane slicing).
        q = (qkv[:, :D_MODEL] * scale).astype(bf16)
        k = qkv[:, D_MODEL:2 * D_MODEL].astype(bf16)
        v = qkv[:, 2 * D_MODEL:].astype(bf16)

        # (rows, 64) -> (tb, seq, 64): sublane-axis reshape only, lanes untouched.
        q3 = q.reshape(tb, seq, D_MODEL)
        k3 = k.reshape(tb, seq, D_MODEL)
        v3 = v.reshape(tb, seq, D_MODEL)

        # Head separation via replicate + mask: column j = h*seq + k of km/vm
        # only carries head h's 16 feature lanes, so a single full-width
        # contraction produces every head's scores / context at once.
        km = jnp.concatenate([k3] * N_HEAD, axis=1) * mask_bf     # (tb, hs, 64)
        vm = jnp.concatenate([v3] * N_HEAD, axis=1) * mask_bf     # (tb, hs, 64)

        # All-head scores: lane axis = hs (>= 32 even for tiny seq).
        s = jnp.einsum('bqc,bkc->bqk', q3, km,
                       preferred_element_type=jnp.float32)        # (tb, seq, hs)
        # Subtracting the per-query global max (over all heads) is a uniform
        # shift inside each head block, so the per-head softmax is unchanged.
        s = s - jnp.max(s, axis=-1, keepdims=True)
        p = jnp.exp(s)                                            # f32
        p_bf = p.astype(bf16)

        # Per-head softmax denominators broadcast directly into the output
        # (head-dim) layout: the head mask doubles as the block-sum matrix.
        denom = jnp.dot(p_bf.reshape(rows, hs), mask_bf,
                        preferred_element_type=jnp.float32)       # (rows, 64)
        ctx = jnp.einsum('bqk,bkc->bqc', p_bf, vm,
                         preferred_element_type=jnp.float32)      # (tb, seq, 64)
        ctx = ctx.reshape(rows, D_MODEL) / denom                  # exact normalize

        attn = jnp.dot(ctx.astype(bf16), wo_ref[l],
                       preferred_element_type=jnp.float32) + bo_ref[l]

        # TODO(synk): dropout (p=0.1) omitted -- eval-mode forward semantics.
        x1 = _layer_norm(x + attn, g1_ref[l], be1_ref[l])

        h1 = jnp.dot(x1.astype(bf16), w1_ref[l],
                     preferred_element_type=jnp.float32) + bf1_ref[l]
        h1 = jnp.maximum(h1, 0.0)                                 # ReLU (PyTorch default)
        ff = jnp.dot(h1.astype(bf16), w2_ref[l],
                     preferred_element_type=jnp.float32) + bf2_ref[l]
        x = _layer_norm(x1 + ff, g2_ref[l], be2_ref[l])

    # cls token (== encoded[0] in PyTorch's seq-first layout) + classifier,
    # written into a lane-dense 128-wide padded output slab.
    cls = x.reshape(tb, seq, D_MODEL)[:, 0, :]
    o_ref[...] = jnp.dot(cls.astype(bf16), wc_ref[...],
                         preferred_element_type=jnp.float32) + bc_ref[...]


def _vmem_limit_and_budget():
    """Scoped-VMEM limit to request and the share the tile estimate may use."""
    phys = 64 << 20                          # conservative default (v7x physical)
    try:
        phys = pltpu.get_tpu_info().vmem_capacity_bytes
    except Exception:
        pass
    limit = int(min((phys * 3) // 4, 96 << 20))   # ~48 MiB v7x, ~96 MiB v5e/v6e
    budget = (limit * 3) // 5                      # headroom for double-buffering
    return limit, budget


def _pick_batch_tile(b_pad, s, budget_bytes):
    """Seq- and VMEM-aware batch-tile picker.

    rows = tb * s per grid step; we want rows large (>= 512 ideally, multiples
    of 8 always) to fill the MXU M dimension, while the f32 score/prob tensors
    (~40*s bytes/row), the replicated bf16 K/V (~1 KB/row) and the f32
    activations (~6.5 KB/row) fit the scoped-VMEM budget.  tb is a multiple of
    8 (output block second-minor constraint).  We also prefer >= 2 grid steps
    so v7x's two TensorCores both get work (dimension_semantics=("parallel",)),
    as long as that keeps the per-step M reasonable.
    """
    bytes_per_row = 8192 + 56 * s
    max_rows = max(8 * s, budget_bytes // bytes_per_row)
    cands = [d for d in range(8, b_pad + 1, 8) if b_pad % d == 0]
    fitting = [d for d in cands if d * s <= max_rows] or [cands[0]]
    tb = max(fitting)
    if b_pad // tb < 2:
        smaller = [d for d in fitting if b_pad // d >= 2]
        if smaller:
            cand = max(smaller)
            if cand * s >= 512 or tb * s < 512:
                tb = cand
    return tb


def _forward_padded(tokens, params):
    b, s = tokens.shape
    b_pad = ((b + 7) // 8) * 8               # batch padded so tb can be 8-aligned
    if b_pad != b:
        tokens = jnp.pad(tokens, ((0, b_pad - b), (0, 0)))   # token 0 is valid

    vmem_limit, budget = _vmem_limit_and_budget()
    tb = _pick_batch_tile(b_pad, s, budget)
    grid = (b_pad // tb,)

    # Constant head/block mask (compile-time numpy constant).
    hm = (np.arange(N_HEAD * s)[:, None] // s ==
          np.arange(D_MODEL)[None, :] // HEAD_DIM)
    head_mask = jnp.asarray(hm, jnp.bfloat16)

    kernel = functools.partial(fused_transformer_kernel, tb=tb, seq=s)

    def resident(arr):
        nd = arr.ndim
        return pl.BlockSpec(arr.shape, lambda i, _n=nd: (0,) * _n)

    weight_names = ('embedding', 'wqkv', 'bqkv', 'wo', 'bo', 'g1', 'be1',
                    'w1', 'bf1', 'w2', 'bf2', 'g2', 'be2', 'wc', 'bc')
    weights = [params[n] for n in weight_names] + [head_mask]

    tok2 = tokens.reshape(b_pad * s, 1).astype(jnp.int32)

    out = pl.pallas_call(
        kernel,
        out_shape=jax.ShapeDtypeStruct((b_pad, LOGIT_PAD), jnp.float32),
        grid=grid,
        in_specs=[pl.BlockSpec((tb * s, 1), lambda i: (i, 0))]
                 + [resident(w) for w in weights],
        out_specs=pl.BlockSpec((tb, LOGIT_PAD), lambda i: (i, 0)),
        compiler_params=pltpu.CompilerParams(
            dimension_semantics=("parallel",),
            vmem_limit_bytes=vmem_limit),
    )(tok2, *weights)
    return out[:b]


_forward_padded_jit = jax.jit(_forward_padded)


def transformer_classifier(tokens, params, num_classes):
    return _forward_padded_jit(tokens, params)[:, :num_classes]


def init_params(key, vocab_size, num_classes):
    keys = jax.random.split(key, NUM_LAYERS + 2)

    def rnd(k, shape, scl=0.05):
        return scl * jax.random.normal(k, shape, jnp.float32)

    emb = rnd(keys[0], (vocab_size, D_MODEL), 0.1)

    wqkv, bqkv, wo, bo = [], [], [], []
    g1, be1, w1, bf1, w2, bf2, g2, be2 = [], [], [], [], [], [], [], []
    for l in range(NUM_LAYERS):
        lk = jax.random.split(keys[1 + l], 10)
        wqkv.append(jnp.concatenate([rnd(lk[0], (D_MODEL, D_MODEL)),
                                     rnd(lk[1], (D_MODEL, D_MODEL)),
                                     rnd(lk[2], (D_MODEL, D_MODEL))], axis=1))
        bqkv.append(jnp.concatenate([rnd(lk[3], (1, D_MODEL), 0.01),
                                     rnd(lk[4], (1, D_MODEL), 0.01),
                                     rnd(lk[5], (1, D_MODEL), 0.01)], axis=1))
        wo.append(rnd(lk[6], (D_MODEL, D_MODEL)))
        bo.append(rnd(lk[7], (1, D_MODEL), 0.01))
        g1.append(jnp.ones((1, D_MODEL), jnp.float32))
        be1.append(jnp.zeros((1, D_MODEL), jnp.float32))
        w1.append(rnd(lk[8], (D_MODEL, DIM_FF)))
        bf1.append(jnp.zeros((1, DIM_FF), jnp.float32))
        w2.append(rnd(lk[9], (DIM_FF, D_MODEL)))
        bf2.append(jnp.zeros((1, D_MODEL), jnp.float32))
        g2.append(jnp.ones((1, D_MODEL), jnp.float32))
        be2.append(jnp.zeros((1, D_MODEL), jnp.float32))

    stack = lambda xs: jnp.stack(xs, axis=0)
    wc = rnd(keys[-1], (D_MODEL, num_classes))
    wc_pad = jnp.zeros((D_MODEL, LOGIT_PAD), jnp.float32).at[:, :num_classes].set(wc)
    bc_pad = jnp.zeros((1, LOGIT_PAD), jnp.float32)

    return {
        'embedding': emb,                     # f32; cast to bf16 inside the kernel
        # MXU-operand weights stored bf16 (native MXU dtype, halves weight DMA);
        # biases / LN params stay f32 (elementwise math stays f32 on all gens).
        'wqkv': stack(wqkv).astype(jnp.bfloat16),
        'bqkv': stack(bqkv),
        'wo': stack(wo).astype(jnp.bfloat16),
        'bo': stack(bo),
        'g1': stack(g1), 'be1': stack(be1),
        'w1': stack(w1).astype(jnp.bfloat16),
        'bf1': stack(bf1),
        'w2': stack(w2).astype(jnp.bfloat16),
        'bf2': stack(bf2),
        'g2': stack(g2), 'be2': stack(be2),
        'wc': wc_pad.astype(jnp.bfloat16),
        'bc': bc_pad,
    }


if __name__ == "__main__":
    vocab_size, num_classes = 32, 3
    batch, seq = 2, 8

    key = jax.random.PRNGKey(0)
    pkey, xkey = jax.random.split(key)
    params = init_params(pkey, vocab_size, num_classes)
    tokens = jax.random.randint(xkey, (batch, seq), 0, vocab_size, dtype=jnp.int32)

    logits = transformer_classifier(tokens, params, num_classes)
    jax.block_until_ready(logits)
    assert logits.shape == (batch, num_classes) and logits.dtype == jnp.float32
    assert bool(jnp.isfinite(logits).all())
    print("KERNEL_OK")
</pallas_src>

<mosaic_0001>
module attributes {stable_mosaic.version = 11 : i64} {
  func.func @fused_transformer_kernel(%arg0: i32, %arg1: memref<64x1xi32, #tpu.memory_space<vmem>>, %arg2: memref<32x64xf32, #tpu.memory_space<vmem>>, %arg3: memref<2x64x192xbf16, #tpu.memory_space<vmem>>, %arg4: memref<2x1x192xf32, #tpu.memory_space<vmem>>, %arg5: memref<2x64x64xbf16, #tpu.memory_space<vmem>>, %arg6: memref<2x1x64xf32, #tpu.memory_space<vmem>>, %arg7: memref<2x1x64xf32, #tpu.memory_space<vmem>>, %arg8: memref<2x1x64xf32, #tpu.memory_space<vmem>>, %arg9: memref<2x64x128xbf16, #tpu.memory_space<vmem>>, %arg10: memref<2x1x128xf32, #tpu.memory_space<vmem>>, %arg11: memref<2x128x64xbf16, #tpu.memory_space<vmem>>, %arg12: memref<2x1x64xf32, #tpu.memory_space<vmem>>, %arg13: memref<2x1x64xf32, #tpu.memory_space<vmem>>, %arg14: memref<2x1x64xf32, #tpu.memory_space<vmem>>, %arg15: memref<64x128xbf16, #tpu.memory_space<vmem>>, %arg16: memref<1x128xf32, #tpu.memory_space<vmem>>, %arg17: memref<32x64xbf16, #tpu.memory_space<vmem>>, %arg18: memref<8x128xf32, #tpu.memory_space<vmem>>) attributes {dimension_semantics = [#tpu.dimension_semantics<parallel>], iteration_bounds = array<i64: 1>, scalar_prefetch = 0 : i64, scratch_operands = 0 : i64, tpu.core_type = #tpu.core_type<tc>, window_params = [{transform_indices = @transform_0, window_bounds = array<i64: 64, 1>}, {pipeline_mode = #tpu.pipeline_mode<synchronous>, transform_indices = @transform_1, window_bounds = array<i64: 32, 64>}, {pipeline_mode = #tpu.pipeline_mode<synchronous>, transform_indices = @transform_2, window_bounds = array<i64: 2, 64, 192>}, {pipeline_mode = #tpu.pipeline_mode<synchronous>, transform_indices = @transform_3, window_bounds = array<i64: 2, 1, 192>}, {pipeline_mode = #tpu.pipeline_mode<synchronous>, transform_indices = @transform_4, window_bounds = array<i64: 2, 64, 64>}, {pipeline_mode = #tpu.pipeline_mode<synchronous>, transform_indices = @transform_5, window_bounds = array<i64: 2, 1, 64>}, {pipeline_mode = #tpu.pipeline_mode<synchronous>, transform_indices = @transform_6, window_bounds = array<i64: 2, 1, 64>}, {pipeline_mode = #tpu.pipeline_mode<synchronous>, transform_indices = @transform_7, window_bounds = array<i64: 2, 1, 64>}, {pipeline_mode = #tpu.pipeline_mode<synchronous>, transform_indices = @transform_8, window_bounds = array<i64: 2, 64, 128>}, {pipeline_mode = #tpu.pipeline_mode<synchronous>, transform_indices = @transform_9, window_bounds = array<i64: 2, 1, 128>}, {pipeline_mode = #tpu.pipeline_mode<synchronous>, transform_indices = @transform_10, window_bounds = array<i64: 2, 128, 64>}, {pipeline_mode = #tpu.pipeline_mode<synchronous>, transform_indices = @transform_11, window_bounds = array<i64: 2, 1, 64>}, {pipeline_mode = #tpu.pipeline_mode<synchronous>, transform_indices = @transform_12, window_bounds = array<i64: 2, 1, 64>}, {pipeline_mode = #tpu.pipeline_mode<synchronous>, transform_indices = @transform_13, window_bounds = array<i64: 2, 1, 64>}, {pipeline_mode = #tpu.pipeline_mode<synchronous>, transform_indices = @transform_14, window_bounds = array<i64: 64, 128>}, {pipeline_mode = #tpu.pipeline_mode<synchronous>, transform_indices = @transform_15, window_bounds = array<i64: 1, 128>}, {pipeline_mode = #tpu.pipeline_mode<synchronous>, transform_indices = @transform_16, window_bounds = array<i64: 32, 64>}, {transform_indices = @transform_17, window_bounds = array<i64: 8, 128>}]} {
    %c0 = arith.constant 0 : index
    %c0_0 = arith.constant 0 : index
    %0 = vector.load %arg17[%c0, %c0_0] : memref<32x64xbf16, #tpu.memory_space<vmem>>, vector<32x64xbf16>
    %c0_1 = arith.constant 0 : index
    %c0_2 = arith.constant 0 : index
    %1 = vector.load %arg1[%c0_1, %c0_2] : memref<64x1xi32, #tpu.memory_space<vmem>>, vector<64x1xi32>
    %2 = tpu.iota {dimensions = array<i32: 1>} : vector<64x32xi32>
    %3 = vector.broadcast %1 : vector<64x1xi32> to vector<64x32xi32>
    %4 = arith.cmpi eq, %2, %3 : vector<64x32xi32>
    %5 = arith.extui %4 : vector<64x32xi1> to vector<64x32xi32>
    %6 = arith.sitofp %5 : vector<64x32xi32> to vector<64x32xf32>
    %7 = arith.truncf %6 : vector<64x32xf32> to vector<64x32xbf16>
    %c0_3 = arith.constant 0 : index
    %c0_4 = arith.constant 0 : index
    %8 = vector.load %arg2[%c0_3, %c0_4] : memref<32x64xf32, #tpu.memory_space<vmem>>, vector<32x64xf32>
    %9 = arith.truncf %8 : vector<32x64xf32> to vector<32x64xbf16>
    %cst = arith.constant dense<0.000000e+00> : vector<64x64xf32>
    %10 = tpu.matmul %7, %9, %cst {dimension_numbers = #tpu.dot_dimension_numbers<[1], [0], [0], [1], [0, 0, 1, 1], [], []>} : vector<64x32xbf16>, vector<32x64xbf16>, vector<64x64xf32> -> vector<64x64xf32>
    %11 = arith.truncf %10 : vector<64x64xf32> to vector<64x64xbf16>
    %c0_5 = arith.constant 0 : index
    %c0_6 = arith.constant 0 : index
    %c0_7 = arith.constant 0 : index
    %12 = vector.load %arg3[%c0_5, %c0_6, %c0_7] : memref<2x64x192xbf16, #tpu.memory_space<vmem>>, vector<1x64x192xbf16>
    %13 = vector.shape_cast %12 : vector<1x64x192xbf16> to vector<64x192xbf16>
    %cst_8 = arith.constant dense<0.000000e+00> : vector<64x192xf32>
    %14 = tpu.matmul %11, %13, %cst_8 {dimension_numbers = #tpu.dot_dimension_numbers<[1], [0], [0], [1], [0, 0, 1, 1], [], []>} : vector<64x64xbf16>, vector<64x192xbf16>, vector<64x192xf32> -> vector<64x192xf32>
    %c0_9 = arith.constant 0 : index
    %c0_10 = arith.constant 0 : index
    %c0_11 = arith.constant 0 : index
    %15 = vector.load %arg4[%c0_9, %c0_10, %c0_11] : memref<2x1x192xf32, #tpu.memory_space<vmem>>, vector<1x1x192xf32>
    %16 = vector.shape_cast %15 : vector<1x1x192xf32> to vector<1x192xf32>
    %17 = vector.broadcast %16 : vector<1x192xf32> to vector<64x192xf32>
    %18 = arith.addf %14, %17 : vector<64x192xf32>
    %19 = vector.extract_strided_slice %18 {offsets = [0, 0], sizes = [64, 64], strides = [1, 1]} : vector<64x192xf32> to vector<64x64xf32>
    %cst_12 = arith.constant 2.500000e-01 : f32
    %20 = vector.broadcast %cst_12 : f32 to vector<64x64xf32>
    %21 = arith.mulf %19, %20 : vector<64x64xf32>
    %22 = arith.truncf %21 : vector<64x64xf32> to vector<64x64xbf16>
    %23 = vector.extract_strided_slice %18 {offsets = [0, 64], sizes = [64, 64], strides = [1, 1]} : vector<64x192xf32> to vector<64x64xf32>
    %24 = arith.truncf %23 : vector<64x64xf32> to vector<64x64xbf16>
    %25 = vector.extract_strided_slice %18 {offsets = [0, 128], sizes = [64, 64], strides = [1, 1]} : vector<64x192xf32> to vector<64x64xf32>
    %26 = arith.truncf %25 : vector<64x64xf32> to vector<64x64xbf16>
    %27 = vector.shape_cast %22 : vector<64x64xbf16> to vector<8x8x64xbf16>
    %28 = vector.shape_cast %24 : vector<64x64xbf16> to vector<8x8x64xbf16>
    %29 = vector.shape_cast %26 : vector<64x64xbf16> to vector<8x8x64xbf16>
    %30 = tpu.concatenate %28, %28, %28, %28 in 1 : vector<8x8x64xbf16>, vector<8x8x64xbf16>, vector<8x8x64xbf16>, vector<8x8x64xbf16> -> vector<8x32x64xbf16>
    %31 = vector.shape_cast %0 : vector<32x64xbf16> to vector<1x32x64xbf16>
    %32 = vector.broadcast %31 : vector<1x32x64xbf16> to vector<8x32x64xbf16>
    %33 = arith.mulf %30, %32 : vector<8x32x64xbf16>
    %34 = tpu.concatenate %29, %29, %29, %29 in 1 : vector<8x8x64xbf16>, vector<8x8x64xbf16>, vector<8x8x64xbf16>, vector<8x8x64xbf16> -> vector<8x32x64xbf16>
    %35 = vector.shape_cast %0 : vector<32x64xbf16> to vector<1x32x64xbf16>
    %36 = vector.broadcast %35 : vector<1x32x64xbf16> to vector<8x32x64xbf16>
    %37 = arith.mulf %34, %36 : vector<8x32x64xbf16>
    "tpu.trace_start"() <{level = 10 : i32, message = "bqc,bkc->bqk"}> : () -> ()
    %cst_13 = arith.constant dense<0.000000e+00> : vector<8x8x32xf32>
    %38 = tpu.matmul %27, %33, %cst_13 {dimension_numbers = #tpu.dot_dimension_numbers<[2], [2], [1], [1], [0, 0, 0, 1, 1, 1], [0], [0]>} : vector<8x8x64xbf16>, vector<8x32x64xbf16>, vector<8x8x32xf32> -> vector<8x8x32xf32>
    "tpu.trace_stop"() : () -> ()
    %cst_14 = arith.constant dense<0xFF800000> : vector<8x8xf32>
    %39 = vector.multi_reduction <maximumf>, %38, %cst_14 [2] : vector<8x8x32xf32> to vector<8x8xf32>
    %40 = vector.shape_cast %39 : vector<8x8xf32> to vector<8x8x1xf32>
    %41 = vector.broadcast %40 : vector<8x8x1xf32> to vector<8x8x32xf32>
    %42 = arith.subf %38, %41 : vector<8x8x32xf32>
    %43 = math.exp %42 : vector<8x8x32xf32>
    %44 = arith.truncf %43 : vector<8x8x32xf32> to vector<8x8x32xbf16>
    %45 = vector.shape_cast %44 : vector<8x8x32xbf16> to vector<64x32xbf16>
    %cst_15 = arith.constant dense<0.000000e+00> : vector<64x64xf32>
    %46 = tpu.matmul %45, %0, %cst_15 {dimension_numbers = #tpu.dot_dimension_numbers<[1], [0], [0], [1], [0, 0, 1, 1], [], []>} : vector<64x32xbf16>, vector<32x64xbf16>, vector<64x64xf32> -> vector<64x64xf32>
    "tpu.trace_start"() <{level = 10 : i32, message = "bqk,bkc->bqc"}> : () -> ()
    %cst_16 = arith.constant dense<0.000000e+00> : vector<8x8x64xf32>
    %47 = tpu.matmul %44, %37, %cst_16 {dimension_numbers = #tpu.dot_dimension_numbers<[2], [1], [1], [2], [0, 0, 0, 1, 1, 2], [0], [0]>} : vector<8x8x32xbf16>, vector<8x32x64xbf16>, vector<8x8x64xf32> -> vector<8x8x64xf32>
    "tpu.trace_stop"() : () -> ()
    %48 = vector.shape_cast %47 : vector<8x8x64xf32> to vector<64x64xf32>
    %49 = arith.divf %48, %46 : vector<64x64xf32>
    %50 = arith.truncf %49 : vector<64x64xf32> to vector<64x64xbf16>
    %c0_17 = arith.constant 0 : index
    %c0_18 = arith.constant 0 : index
    %c0_19 = arith.constant 0 : index
    %51 = vector.load %arg5[%c0_17, %c0_18, %c0_19] : memref<2x64x64xbf16, #tpu.memory_space<vmem>>, vector<1x64x64xbf16>
    %52 = vector.shape_cast %51 : vector<1x64x64xbf16> to vector<64x64xbf16>
    %cst_20 = arith.constant dense<0.000000e+00> : vector<64x64xf32>
    %53 = tpu.matmul %50, %52, %cst_20 {dimension_numbers = #tpu.dot_dimension_numbers<[1], [0], [0], [1], [0, 0, 1, 1], [], []>} : vector<64x64xbf16>, vector<64x64xbf16>, vector<64x64xf32> -> vector<64x64xf32>
    %c0_21 = arith.constant 0 : index
    %c0_22 = arith.constant 0 : index
    %c0_23 = arith.constant 0 : index
    %54 = vector.load %arg6[%c0_21, %c0_22, %c0_23] : memref<2x1x64xf32, #tpu.memory_space<vmem>>, vector<1x1x64xf32>
    %55 = vector.shape_cast %54 : vector<1x1x64xf32> to vector<1x64xf32>
    %56 = vector.broadcast %55 : vector<1x64xf32> to vector<64x64xf32>
    %57 = arith.addf %53, %56 : vector<64x64xf32>
    %58 = arith.addf %10, %57 : vector<64x64xf32>
    %c0_24 = arith.constant 0 : index
    %c0_25 = arith.constant 0 : index
    %c0_26 = arith.constant 0 : index
    %59 = vector.load %arg7[%c0_24, %c0_25, %c0_26] : memref<2x1x64xf32, #tpu.memory_space<vmem>>, vector<1x1x64xf32>
    %60 = vector.shape_cast %59 : vector<1x1x64xf32> to vector<1x64xf32>
    %c0_27 = arith.constant 0 : index
    %c0_28 = arith.constant 0 : index
    %c0_29 = arith.constant 0 : index
    %61 = vector.load %arg8[%c0_27, %c0_28, %c0_29] : memref<2x1x64xf32, #tpu.memory_space<vmem>>, vector<1x1x64xf32>
    %62 = vector.shape_cast %61 : vector<1x1x64xf32> to vector<1x64xf32>
    %cst_30 = arith.constant dense<0.000000e+00> : vector<64xf32>
    %63 = vector.multi_reduction <add>, %58, %cst_30 [1] : vector<64x64xf32> to vector<64xf32>
    %64 = vector.shape_cast %63 : vector<64xf32> to vector<64x1xf32>
    %cst_31 = arith.constant 6.400000e+01 : f32
    %65 = vector.broadcast %cst_31 : f32 to vector<64x1xf32>
    %66 = arith.divf %64, %65 : vector<64x1xf32>
    %67 = vector.broadcast %66 : vector<64x1xf32> to vector<64x64xf32>
    %68 = arith.subf %58, %67 : vector<64x64xf32>
    %69 = arith.mulf %68, %68 : vector<64x64xf32>
    %cst_32 = arith.constant dense<0.000000e+00> : vector<64xf32>
    %70 = vector.multi_reduction <add>, %69, %cst_32 [1] : vector<64x64xf32> to vector<64xf32>
    %71 = vector.shape_cast %70 : vector<64xf32> to vector<64x1xf32>
    %cst_33 = arith.constant 6.400000e+01 : f32
    %72 = vector.broadcast %cst_33 : f32 to vector<64x1xf32>
    %73 = arith.divf %71, %72 : vector<64x1xf32>
    %74 = vector.broadcast %66 : vector<64x1xf32> to vector<64x64xf32>
    %75 = arith.subf %58, %74 : vector<64x64xf32>
    %cst_34 = arith.constant 9.99999974E-6 : f32
    %76 = vector.broadcast %cst_34 : f32 to vector<64x1xf32>
    %77 = arith.addf %73, %76 : vector<64x1xf32>
    %78 = math.rsqrt %77 : vector<64x1xf32>
    %79 = vector.broadcast %78 : vector<64x1xf32> to vector<64x64xf32>
    %80 = arith.mulf %75, %79 : vector<64x64xf32>
    %81 = vector.broadcast %60 : vector<1x64xf32> to vector<64x64xf32>
    %82 = arith.mulf %80, %81 : vector<64x64xf32>
    %83 = vector.broadcast %62 : vector<1x64xf32> to vector<64x64xf32>
    %84 = arith.addf %82, %83 : vector<64x64xf32>
    %85 = arith.truncf %84 : vector<64x64xf32> to vector<64x64xbf16>
    %c0_35 = arith.constant 0 : index
    %c0_36 = arith.constant 0 : index
    %c0_37 = arith.constant 0 : index
    %86 = vector.load %arg9[%c0_35, %c0_36, %c0_37] : memref<2x64x128xbf16, #tpu.memory_space<vmem>>, vector<1x64x128xbf16>
    %87 = vector.shape_cast %86 : vector<1x64x128xbf16> to vector<64x128xbf16>
    %cst_38 = arith.constant dense<0.000000e+00> : vector<64x128xf32>
    %88 = tpu.matmul %85, %87, %cst_38 {dimension_numbers = #tpu.dot_dimension_numbers<[1], [0], [0], [1], [0, 0, 1, 1], [], []>} : vector<64x64xbf16>, vector<64x128xbf16>, vector<64x128xf32> -> vector<64x128xf32>
    %c0_39 = arith.constant 0 : index
    %c0_40 = arith.constant 0 : index
    %c0_41 = arith.constant 0 : index
    %89 = vector.load %arg10[%c0_39, %c0_40, %c0_41] : memref<2x1x128xf32, #tpu.memory_space<vmem>>, vector<1x1x128xf32>
    %90 = vector.shape_cast %89 : vector<1x1x128xf32> to vector<1x128xf32>
    %91 = vector.broadcast %90 : vector<1x128xf32> to vector<64x128xf32>
    %92 = arith.addf %88, %91 : vector<64x128xf32>
    %cst_42 = arith.constant 0.000000e+00 : f32
    %93 = vector.broadcast %cst_42 : f32 to vector<64x128xf32>
    %94 = arith.maximumf %92, %93 : vector<64x128xf32>
    %95 = arith.truncf %94 : vector<64x128xf32> to vector<64x128xbf16>
    %c0_43 = arith.constant 0 : index
    %c0_44 = arith.constant 0 : index
    %c0_45 = arith.constant 0 : index
    %96 = vector.load %arg11[%c0_43, %c0_44, %c0_45] : memref<2x128x64xbf16, #tpu.memory_space<vmem>>, vector<1x128x64xbf16>
    %97 = vector.shape_cast %96 : vector<1x128x64xbf16> to vector<128x64xbf16>
    %cst_46 = arith.constant dense<0.000000e+00> : vector<64x64xf32>
    %98 = tpu.matmul %95, %97, %cst_46 {dimension_numbers = #tpu.dot_dimension_numbers<[1], [0], [0], [1], [0, 0, 1, 1], [], []>} : vector<64x128xbf16>, vector<128x64xbf16>, vector<64x64xf32> -> vector<64x64xf32>
    %c0_47 = arith.constant 0 : index
    %c0_48 = arith.constant 0 : index
    %c0_49 = arith.constant 0 : index
    %99 = vector.load %arg12[%c0_47, %c0_48, %c0_49] : memref<2x1x64xf32, #tpu.memory_space<vmem>>, vector<1x1x64xf32>
    %100 = vector.shape_cast %99 : vector<1x1x64xf32> to vector<1x64xf32>
    %101 = vector.broadcast %100 : vector<1x64xf32> to vector<64x64xf32>
    %102 = arith.addf %98, %101 : vector<64x64xf32>
    %103 = arith.addf %84, %102 : vector<64x64xf32>
    %c0_50 = arith.constant 0 : index
    %c0_51 = arith.constant 0 : index
    %c0_52 = arith.constant 0 : index
    %104 = vector.load %arg13[%c0_50, %c0_51, %c0_52] : memref<2x1x64xf32, #tpu.memory_space<vmem>>, vector<1x1x64xf32>
    %105 = vector.shape_cast %104 : vector<1x1x64xf32> to vector<1x64xf32>
    %c0_53 = arith.constant 0 : index
    %c0_54 = arith.constant 0 : index
    %c0_55 = arith.constant 0 : index
    %106 = vector.load %arg14[%c0_53, %c0_54, %c0_55] : memref<2x1x64xf32, #tpu.memory_space<vmem>>, vector<1x1x64xf32>
    %107 = vector.shape_cast %106 : vector<1x1x64xf32> to vector<1x64xf32>
    %cst_56 = arith.constant dense<0.000000e+00> : vector<64xf32>
    %108 = vector.multi_reduction <add>, %103, %cst_56 [1] : vector<64x64xf32> to vector<64xf32>
    %109 = vector.shape_cast %108 : vector<64xf32> to vector<64x1xf32>
    %cst_57 = arith.constant 6.400000e+01 : f32
    %110 = vector.broadcast %cst_57 : f32 to vector<64x1xf32>
    %111 = arith.divf %109, %110 : vector<64x1xf32>
    %112 = vector.broadcast %111 : vector<64x1xf32> to vector<64x64xf32>
    %113 = arith.subf %103, %112 : vector<64x64xf32>
    %114 = arith.mulf %113, %113 : vector<64x64xf32>
    %cst_58 = arith.constant dense<0.000000e+00> : vector<64xf32>
    %115 = vector.multi_reduction <add>, %114, %cst_58 [1] : vector<64x64xf32> to vector<64xf32>
    %116 = vector.shape_cast %115 : vector<64xf32> to vector<64x1xf32>
    %cst_59 = arith.constant 6.400000e+01 : f32
    %117 = vector.broadcast %cst_59 : f32 to vector<64x1xf32>
    %118 = arith.divf %116, %117 : vector<64x1xf32>
    %119 = vector.broadcast %111 : vector<64x1xf32> to vector<64x64xf32>
    %120 = arith.subf %103, %119 : vector<64x64xf32>
    %cst_60 = arith.constant 9.99999974E-6 : f32
    %121 = vector.broadcast %cst_60 : f32 to vector<64x1xf32>
    %122 = arith.addf %118, %121 : vector<64x1xf32>
    %123 = math.rsqrt %122 : vector<64x1xf32>
    %124 = vector.broadcast %123 : vector<64x1xf32> to vector<64x64xf32>
    %125 = arith.mulf %120, %124 : vector<64x64xf32>
    %126 = vector.broadcast %105 : vector<1x64xf32> to vector<64x64xf32>
    %127 = arith.mulf %125, %126 : vector<64x64xf32>
    %128 = vector.broadcast %107 : vector<1x64xf32> to vector<64x64xf32>
    %129 = arith.addf %127, %128 : vector<64x64xf32>
    %130 = arith.truncf %129 : vector<64x64xf32> to vector<64x64xbf16>
    %c1 = arith.constant 1 : index
    %c0_61 = arith.constant 0 : index
    %c0_62 = arith.constant 0 : index
    %131 = vector.load %arg3[%c1, %c0_61, %c0_62] : memref<2x64x192xbf16, #tpu.memory_space<vmem>>, vector<1x64x192xbf16>
    %132 = vector.shape_cast %131 : vector<1x64x192xbf16> to vector<64x192xbf16>
    %cst_63 = arith.constant dense<0.000000e+00> : vector<64x192xf32>
    %133 = tpu.matmul %130, %132, %cst_63 {dimension_numbers = #tpu.dot_dimension_numbers<[1], [0], [0], [1], [0, 0, 1, 1], [], []>} : vector<64x64xbf16>, vector<64x192xbf16>, vector<64x192xf32> -> vector<64x192xf32>
    %c1_64 = arith.constant 1 : index
    %c0_65 = arith.constant 0 : index
    %c0_66 = arith.constant 0 : index
    %134 = vector.load %arg4[%c1_64, %c0_65, %c0_66] : memref<2x1x192xf32, #tpu.memory_space<vmem>>, vector<1x1x192xf32>
    %135 = vector.shape_cast %134 : vector<1x1x192xf32> to vector<1x192xf32>
    %136 = vector.broadcast %135 : vector<1x192xf32> to vector<64x192xf32>
    %137 = arith.addf %133, %136 : vector<64x192xf32>
    %138 = vector.extract_strided_slice %137 {offsets = [0, 0], sizes = [64, 64], strides = [1, 1]} : vector<64x192xf32> to vector<64x64xf32>
    %cst_67 = arith.constant 2.500000e-01 : f32
    %139 = vector.broadcast %cst_67 : f32 to vector<64x64xf32>
    %140 = arith.mulf %138, %139 : vector<64x64xf32>
    %141 = arith.truncf %140 : vector<64x64xf32> to vector<64x64xbf16>
    %142 = vector.extract_strided_slice %137 {offsets = [0, 64], sizes = [64, 64], strides = [1, 1]} : vector<64x192xf32> to vector<64x64xf32>
    %143 = arith.truncf %142 : vector<64x64xf32> to vector<64x64xbf16>
    %144 = vector.extract_strided_slice %137 {offsets = [0, 128], sizes = [64, 64], strides = [1, 1]} : vector<64x192xf32> to vector<64x64xf32>
    %145 = arith.truncf %144 : vector<64x64xf32> to vector<64x64xbf16>
    %146 = vector.shape_cast %141 : vector<64x64xbf16> to vector<8x8x64xbf16>
    %147 = vector.shape_cast %143 : vector<64x64xbf16> to vector<8x8x64xbf16>
    %148 = vector.shape_cast %145 : vector<64x64xbf16> to vector<8x8x64xbf16>
    %149 = tpu.concatenate %147, %147, %147, %147 in 1 : vector<8x8x64xbf16>, vector<8x8x64xbf16>, vector<8x8x64xbf16>, vector<8x8x64xbf16> -> vector<8x32x64xbf16>
    %150 = vector.shape_cast %0 : vector<32x64xbf16> to vector<1x32x64xbf16>
    %151 = vector.broadcast %150 : vector<1x32x64xbf16> to vector<8x32x64xbf16>
    %152 = arith.mulf %149, %151 : vector<8x32x64xbf16>
    %153 = tpu.concatenate %148, %148, %148, %148 in 1 : vector<8x8x64xbf16>, vector<8x8x64xbf16>, vector<8x8x64xbf16>, vector<8x8x64xbf16> -> vector<8x32x64xbf16>
    %154 = vector.shape_cast %0 : vector<32x64xbf16> to vector<1x32x64xbf16>
    %155 = vector.broadcast %154 : vector<1x32x64xbf16> to vector<8x32x64xbf16>
    %156 = arith.mulf %153, %155 : vector<8x32x64xbf16>
    "tpu.trace_start"() <{level = 10 : i32, message = "bqc,bkc->bqk"}> : () -> ()
    %cst_68 = arith.constant dense<0.000000e+00> : vector<8x8x32xf32>
    %157 = tpu.matmul %146, %152, %cst_68 {dimension_numbers = #tpu.dot_dimension_numbers<[2], [2], [1], [1], [0, 0, 0, 1, 1, 1], [0], [0]>} : vector<8x8x64xbf16>, vector<8x32x64xbf16>, vector<8x8x32xf32> -> vector<8x8x32xf32>
    "tpu.trace_stop"() : () -> ()
    %cst_69 = arith.constant dense<0xFF800000> : vector<8x8xf32>
    %158 = vector.multi_reduction <maximumf>, %157, %cst_69 [2] : vector<8x8x32xf32> to vector<8x8xf32>
    %159 = vector.shape_cast %158 : vector<8x8xf32> to vector<8x8x1xf32>
    %160 = vector.broadcast %159 : vector<8x8x1xf32> to vector<8x8x32xf32>
    %161 = arith.subf %157, %160 : vector<8x8x32xf32>
    %162 = math.exp %161 : vector<8x8x32xf32>
    %163 = arith.truncf %162 : vector<8x8x32xf32> to vector<8x8x32xbf16>
    %164 = vector.shape_cast %163 : vector<8x8x32xbf16> to vector<64x32xbf16>
    %cst_70 = arith.constant dense<0.000000e+00> : vector<64x64xf32>
    %165 = tpu.matmul %164, %0, %cst_70 {dimension_numbers = #tpu.dot_dimension_numbers<[1], [0], [0], [1], [0, 0, 1, 1], [], []>} : vector<64x32xbf16>, vector<32x64xbf16>, vector<64x64xf32> -> vector<64x64xf32>
    "tpu.trace_start"() <{level = 10 : i32, message = "bqk,bkc->bqc"}> : () -> ()
    %cst_71 = arith.constant dense<0.000000e+00> : vector<8x8x64xf32>
    %166 = tpu.matmul %163, %156, %cst_71 {dimension_numbers = #tpu.dot_dimension_numbers<[2], [1], [1], [2], [0, 0, 0, 1, 1, 2], [0], [0]>} : vector<8x8x32xbf16>, vector<8x32x64xbf16>, vector<8x8x64xf32> -> vector<8x8x64xf32>
    "tpu.trace_stop"() : () -> ()
    %167 = vector.shape_cast %166 : vector<8x8x64xf32> to vector<64x64xf32>
    %168 = arith.divf %167, %165 : vector<64x64xf32>
    %169 = arith.truncf %168 : vector<64x64xf32> to vector<64x64xbf16>
    %c1_72 = arith.constant 1 : index
    %c0_73 = arith.constant 0 : index
    %c0_74 = arith.constant 0 : index
    %170 = vector.load %arg5[%c1_72, %c0_73, %c0_74] : memref<2x64x64xbf16, #tpu.memory_space<vmem>>, vector<1x64x64xbf16>
    %171 = vector.shape_cast %170 : vector<1x64x64xbf16> to vector<64x64xbf16>
    %cst_75 = arith.constant dense<0.000000e+00> : vector<64x64xf32>
    %172 = tpu.matmul %169, %171, %cst_75 {dimension_numbers = #tpu.dot_dimension_numbers<[1], [0], [0], [1], [0, 0, 1, 1], [], []>} : vector<64x64xbf16>, vector<64x64xbf16>, vector<64x64xf32> -> vector<64x64xf32>
    %c1_76 = arith.constant 1 : index
    %c0_77 = arith.constant 0 : index
    %c0_78 = arith.constant 0 : index
    %173 = vector.load %arg6[%c1_76, %c0_77, %c0_78] : memref<2x1x64xf32, #tpu.memory_space<vmem>>, vector<1x1x64xf32>
    %174 = vector.shape_cast %173 : vector<1x1x64xf32> to vector<1x64xf32>
    %175 = vector.broadcast %174 : vector<1x64xf32> to vector<64x64xf32>
    %176 = arith.addf %172, %175 : vector<64x64xf32>
    %177 = arith.addf %129, %176 : vector<64x64xf32>
    %c1_79 = arith.constant 1 : index
    %c0_80 = arith.constant 0 : index
    %c0_81 = arith.constant 0 : index
    %178 = vector.load %arg7[%c1_79, %c0_80, %c0_81] : memref<2x1x64xf32, #tpu.memory_space<vmem>>, vector<1x1x64xf32>
    %179 = vector.shape_cast %178 : vector<1x1x64xf32> to vector<1x64xf32>
    %c1_82 = arith.constant 1 : index
    %c0_83 = arith.constant 0 : index
    %c0_84 = arith.constant 0 : index
    %180 = vector.load %arg8[%c1_82, %c0_83, %c0_84] : memref<2x1x64xf32, #tpu.memory_space<vmem>>, vector<1x1x64xf32>
    %181 = vector.shape_cast %180 : vector<1x1x64xf32> to vector<1x64xf32>
    %cst_85 = arith.constant dense<0.000000e+00> : vector<64xf32>
    %182 = vector.multi_reduction <add>, %177, %cst_85 [1] : vector<64x64xf32> to vector<64xf32>
    %183 = vector.shape_cast %182 : vector<64xf32> to vector<64x1xf32>
    %cst_86 = arith.constant 6.400000e+01 : f32
    %184 = vector.broadcast %cst_86 : f32 to vector<64x1xf32>
    %185 = arith.divf %183, %184 : vector<64x1xf32>
    %186 = vector.broadcast %185 : vector<64x1xf32> to vector<64x64xf32>
    %187 = arith.subf %177, %186 : vector<64x64xf32>
    %188 = arith.mulf %187, %187 : vector<64x64xf32>
    %cst_87 = arith.constant dense<0.000000e+00> : vector<64xf32>
    %189 = vector.multi_reduction <add>, %188, %cst_87 [1] : vector<64x64xf32> to vector<64xf32>
    %190 = vector.shape_cast %189 : vector<64xf32> to vector<64x1xf32>
    %cst_88 = arith.constant 6.400000e+01 : f32
    %191 = vector.broadcast %cst_88 : f32 to vector<64x1xf32>
    %192 = arith.divf %190, %191 : vector<64x1xf32>
    %193 = vector.broadcast %185 : vector<64x1xf32> to vector<64x64xf32>
    %194 = arith.subf %177, %193 : vector<64x64xf32>
    %cst_89 = arith.constant 9.99999974E-6 : f32
    %195 = vector.broadcast %cst_89 : f32 to vector<64x1xf32>
    %196 = arith.addf %192, %195 : vector<64x1xf32>
    %197 = math.rsqrt %196 : vector<64x1xf32>
    %198 = vector.broadcast %197 : vector<64x1xf32> to vector<64x64xf32>
    %199 = arith.mulf %194, %198 : vector<64x64xf32>
    %200 = vector.broadcast %179 : vector<1x64xf32> to vector<64x64xf32>
    %201 = arith.mulf %199, %200 : vector<64x64xf32>
    %202 = vector.broadcast %181 : vector<1x64xf32> to vector<64x64xf32>
    %203 = arith.addf %201, %202 : vector<64x64xf32>
    %204 = arith.truncf %203 : vector<64x64xf32> to vector<64x64xbf16>
    %c1_90 = arith.constant 1 : index
    %c0_91 = arith.constant 0 : index
    %c0_92 = arith.constant 0 : index
    %205 = vector.load %arg9[%c1_90, %c0_91, %c0_92] : memref<2x64x128xbf16, #tpu.memory_space<vmem>>, vector<1x64x128xbf16>
    %206 = vector.shape_cast %205 : vector<1x64x128xbf16> to vector<64x128xbf16>
    %cst_93 = arith.constant dense<0.000000e+00> : vector<64x128xf32>
    %207 = tpu.matmul %204, %206, %cst_93 {dimension_numbers = #tpu.dot_dimension_numbers<[1], [0], [0], [1], [0, 0, 1, 1], [], []>} : vector<64x64xbf16>, vector<64x128xbf16>, vector<64x128xf32> -> vector<64x128xf32>
    %c1_94 = arith.constant 1 : index
    %c0_95 = arith.constant 0 : index
    %c0_96 = arith.constant 0 : index
    %208 = vector.load %arg10[%c1_94, %c0_95, %c0_96] : memref<2x1x128xf32, #tpu.memory_space<vmem>>, vector<1x1x128xf32>
    %209 = vector.shape_cast %208 : vector<1x1x128xf32> to vector<1x128xf32>
    %210 = vector.broadcast %209 : vector<1x128xf32> to vector<64x128xf32>
    %211 = arith.addf %207, %210 : vector<64x128xf32>
    %cst_97 = arith.constant 0.000000e+00 : f32
    %212 = vector.broadcast %cst_97 : f32 to vector<64x128xf32>
    %213 = arith.maximumf %211, %212 : vector<64x128xf32>
    %214 = arith.truncf %213 : vector<64x128xf32> to vector<64x128xbf16>
    %c1_98 = arith.constant 1 : index
    %c0_99 = arith.constant 0 : index
    %c0_100 = arith.constant 0 : index
    %215 = vector.load %arg11[%c1_98, %c0_99, %c0_100] : memref<2x128x64xbf16, #tpu.memory_space<vmem>>, vector<1x128x64xbf16>
    %216 = vector.shape_cast %215 : vector<1x128x64xbf16> to vector<128x64xbf16>
    %cst_101 = arith.constant dense<0.000000e+00> : vector<64x64xf32>
    %217 = tpu.matmul %214, %216, %cst_101 {dimension_numbers = #tpu.dot_dimension_numbers<[1], [0], [0], [1], [0, 0, 1, 1], [], []>} : vector<64x128xbf16>, vector<128x64xbf16>, vector<64x64xf32> -> vector<64x64xf32>
    %c1_102 = arith.constant 1 : index
    %c0_103 = arith.constant 0 : index
    %c0_104 = arith.constant 0 : index
    %218 = vector.load %arg12[%c1_102, %c0_103, %c0_104] : memref<2x1x64xf32, #tpu.memory_space<vmem>>, vector<1x1x64xf32>
    %219 = vector.shape_cast %218 : vector<1x1x64xf32> to vector<1x64xf32>
    %220 = vector.broadcast %219 : vector<1x64xf32> to vector<64x64xf32>
    %221 = arith.addf %217, %220 : vector<64x64xf32>
    %222 = arith.addf %203, %221 : vector<64x64xf32>
    %c1_105 = arith.constant 1 : index
    %c0_106 = arith.constant 0 : index
    %c0_107 = arith.constant 0 : index
    %223 = vector.load %arg13[%c1_105, %c0_106, %c0_107] : memref<2x1x64xf32, #tpu.memory_space<vmem>>, vector<1x1x64xf32>
    %224 = vector.shape_cast %223 : vector<1x1x64xf32> to vector<1x64xf32>
    %c1_108 = arith.constant 1 : index
    %c0_109 = arith.constant 0 : index
    %c0_110 = arith.constant 0 : index
    %225 = vector.load %arg14[%c1_108, %c0_109, %c0_110] : memref<2x1x64xf32, #tpu.memory_space<vmem>>, vector<1x1x64xf32>
    %226 = vector.shape_cast %225 : vector<1x1x64xf32> to vector<1x64xf32>
    %cst_111 = arith.constant dense<0.000000e+00> : vector<64xf32>
    %227 = vector.multi_reduction <add>, %222, %cst_111 [1] : vector<64x64xf32> to vector<64xf32>
    %228 = vector.shape_cast %227 : vector<64xf32> to vector<64x1xf32>
    %cst_112 = arith.constant 6.400000e+01 : f32
    %229 = vector.broadcast %cst_112 : f32 to vector<64x1xf32>
    %230 = arith.divf %228, %229 : vector<64x1xf32>
    %231 = vector.broadcast %230 : vector<64x1xf32> to vector<64x64xf32>
    %232 = arith.subf %222, %231 : vector<64x64xf32>
    %233 = arith.mulf %232, %232 : vector<64x64xf32>
    %cst_113 = arith.constant dense<0.000000e+00> : vector<64xf32>
    %234 = vector.multi_reduction <add>, %233, %cst_113 [1] : vector<64x64xf32> to vector<64xf32>
    %235 = vector.shape_cast %234 : vector<64xf32> to vector<64x1xf32>
    %cst_114 = arith.constant 6.400000e+01 : f32
    %236 = vector.broadcast %cst_114 : f32 to vector<64x1xf32>
    %237 = arith.divf %235, %236 : vector<64x1xf32>
    %238 = vector.broadcast %230 : vector<64x1xf32> to vector<64x64xf32>
    %239 = arith.subf %222, %238 : vector<64x64xf32>
    %cst_115 = arith.constant 9.99999974E-6 : f32
    %240 = vector.broadcast %cst_115 : f32 to vector<64x1xf32>
    %241 = arith.addf %237, %240 : vector<64x1xf32>
    %242 = math.rsqrt %241 : vector<64x1xf32>
    %243 = vector.broadcast %242 : vector<64x1xf32> to vector<64x64xf32>
    %244 = arith.mulf %239, %243 : vector<64x64xf32>
    %245 = vector.broadcast %224 : vector<1x64xf32> to vector<64x64xf32>
    %246 = arith.mulf %244, %245 : vector<64x64xf32>
    %247 = vector.broadcast %226 : vector<1x64xf32> to vector<64x64xf32>
    %248 = arith.addf %246, %247 : vector<64x64xf32>
    %249 = vector.shape_cast %248 : vector<64x64xf32> to vector<8x8x64xf32>
    %250 = vector.extract_strided_slice %249 {offsets = [0, 0, 0], sizes = [8, 1, 64], strides = [1, 1, 1]} : vector<8x8x64xf32> to vector<8x1x64xf32>
    %251 = vector.shape_cast %250 : vector<8x1x64xf32> to vector<8x64xf32>
    %252 = arith.truncf %251 : vector<8x64xf32> to vector<8x64xbf16>
    %c0_116 = arith.constant 0 : index
    %c0_117 = arith.constant 0 : index
    %253 = vector.load %arg15[%c0_116, %c0_117] : memref<64x128xbf16, #tpu.memory_space<vmem>>, vector<64x128xbf16>
    %cst_118 = arith.constant dense<0.000000e+00> : vector<8x128xf32>
    %254 = tpu.matmul %252, %253, %cst_118 {dimension_numbers = #tpu.dot_dimension_numbers<[1], [0], [0], [1], [0, 0, 1, 1], [], []>} : vector<8x64xbf16>, vector<64x128xbf16>, vector<8x128xf32> -> vector<8x128xf32>
    %c0_119 = arith.constant 0 : index
    %c0_120 = arith.constant 0 : index
    %255 = vector.load %arg16[%c0_119, %c0_120] : memref<1x128xf32, #tpu.memory_space<vmem>>, vector<1x128xf32>
    %256 = vector.broadcast %255 : vector<1x128xf32> to vector<8x128xf32>
    %257 = arith.addf %254, %256 : vector<8x128xf32>
    %c0_121 = arith.constant 0 : index
    %c0_122 = arith.constant 0 : index
    %258 = vector.load %arg18[%c0_121, %c0_122] : memref<8x128xf32, #tpu.memory_space<vmem>>, vector<8x128xf32>
    tpu.vector_store %arg18[%c0_121, %c0_122], %257 {strides = array<i32>} : memref<8x128xf32, #tpu.memory_space<vmem>>, vector<8x128xf32>,
    return
  }
  func.func @transform_0(%arg0: i32) -> (i32, i32) {
    %c0_i32 = arith.constant 0 : i32
    %c0_i32_0 = arith.constant 0 : i32
    return %arg0, %c0_i32 : i32, i32
  }
  func.func @transform_1(%arg0: i32) -> (i32, i32) {
    %c0_i32 = arith.constant 0 : i32
    %c0_i32_0 = arith.constant 0 : i32
    %c0_i32_1 = arith.constant 0 : i32
    return %c0_i32, %c0_i32_0 : i32, i32
  }
  func.func @transform_2(%arg0: i32) -> (i32, i32, i32) {
    %c0_i32 = arith.constant 0 : i32
    %c0_i32_0 = arith.constant 0 : i32
    %c0_i32_1 = arith.constant 0 : i32
    %c0_i32_2 = arith.constant 0 : i32
    return %c0_i32, %c0_i32_0, %c0_i32_1 : i32, i32, i32
  }
  func.func @transform_3(%arg0: i32) -> (i32, i32, i32) {
    %c0_i32 = arith.constant 0 : i32
    %c0_i32_0 = arith.constant 0 : i32
    %c0_i32_1 = arith.constant 0 : i32
    %c0_i32_2 = arith.constant 0 : i32
    return %c0_i32, %c0_i32_0, %c0_i32_1 : i32, i32, i32
  }
  func.func @transform_4(%arg0: i32) -> (i32, i32, i32) {
    %c0_i32 = arith.constant 0 : i32
    %c0_i32_0 = arith.constant 0 : i32
    %c0_i32_1 = arith.constant 0 : i32
    %c0_i32_2 = arith.constant 0 : i32
    return %c0_i32, %c0_i32_0, %c0_i32_1 : i32, i32, i32
  }
  func.func @transform_5(%arg0: i32) -> (i32, i32, i32) {
    %c0_i32 = arith.constant 0 : i32
    %c0_i32_0 = arith.constant 0 : i32
    %c0_i32_1 = arith.constant 0 : i32
    %c0_i32_2 = arith.constant 0 : i32
    return %c0_i32, %c0_i32_0, %c0_i32_1 : i32, i32, i32
  }
  func.func @transform_6(%arg0: i32) -> (i32, i32, i32) {
    %c0_i32 = arith.constant 0 : i32
    %c0_i32_0 = arith.constant 0 : i32
    %c0_i32_1 = arith.constant 0 : i32
    %c0_i32_2 = arith.constant 0 : i32
    return %c0_i32, %c0_i32_0, %c0_i32_1 : i32, i32, i32
  }
  func.func @transform_7(%arg0: i32) -> (i32, i32, i32) {
    %c0_i32 = arith.constant 0 : i32
    %c0_i32_0 = arith.constant 0 : i32
    %c0_i32_1 = arith.constant 0 : i32
    %c0_i32_2 = arith.constant 0 : i32
    return %c0_i32, %c0_i32_0, %c0_i32_1 : i32, i32, i32
  }
  func.func @transform_8(%arg0: i32) -> (i32, i32, i32) {
    %c0_i32 = arith.constant 0 : i32
    %c0_i32_0 = arith.constant 0 : i32
    %c0_i32_1 = arith.constant 0 : i32
    %c0_i32_2 = arith.constant 0 : i32
    return %c0_i32, %c0_i32_0, %c0_i32_1 : i32, i32, i32
  }
  func.func @transform_9(%arg0: i32) -> (i32, i32, i32) {
    %c0_i32 = arith.constant 0 : i32
    %c0_i32_0 = arith.constant 0 : i32
    %c0_i32_1 = arith.constant 0 : i32
    %c0_i32_2 = arith.constant 0 : i32
    return %c0_i32, %c0_i32_0, %c0_i32_1 : i32, i32, i32
  }
  func.func @transform_10(%arg0: i32) -> (i32, i32, i32) {
    %c0_i32 = arith.constant 0 : i32
    %c0_i32_0 = arith.constant 0 : i32
    %c0_i32_1 = arith.constant 0 : i32
    %c0_i32_2 = arith.constant 0 : i32
    return %c0_i32, %c0_i32_0, %c0_i32_1 : i32, i32, i32
  }
  func.func @transform_11(%arg0: i32) -> (i32, i32, i32) {
    %c0_i32 = arith.constant 0 : i32
    %c0_i32_0 = arith.constant 0 : i32
    %c0_i32_1 = arith.constant 0 : i32
    %c0_i32_2 = arith.constant 0 : i32
    return %c0_i32, %c0_i32_0, %c0_i32_1 : i32, i32, i32
  }
  func.func @transform_12(%arg0: i32) -> (i32, i32, i32) {
    %c0_i32 = arith.constant 0 : i32
    %c0_i32_0 = arith.constant 0 : i32
    %c0_i32_1 = arith.constant 0 : i32
    %c0_i32_2 = arith.constant 0 : i32
    return %c0_i32, %c0_i32_0, %c0_i32_1 : i32, i32, i32
  }
  func.func @transform_13(%arg0: i32) -> (i32, i32, i32) {
    %c0_i32 = arith.constant 0 : i32
    %c0_i32_0 = arith.constant 0 : i32
    %c0_i32_1 = arith.constant 0 : i32
    %c0_i32_2 = arith.constant 0 : i32
    return %c0_i32, %c0_i32_0, %c0_i32_1 : i32, i32, i32
  }
  func.func @transform_14(%arg0: i32) -> (i32, i32) {
    %c0_i32 = arith.constant 0 : i32
    %c0_i32_0 = arith.constant 0 : i32
    %c0_i32_1 = arith.constant 0 : i32
    return %c0_i32, %c0_i32_0 : i32, i32
  }
  func.func @transform_15(%arg0: i32) -> (i32, i32) {
    %c0_i32 = arith.constant 0 : i32
    %c0_i32_0 = arith.constant 0 : i32
    %c0_i32_1 = arith.constant 0 : i32
    return %c0_i32, %c0_i32_0 : i32, i32
  }
  func.func @transform_16(%arg0: i32) -> (i32, i32) {
    %c0_i32 = arith.constant 0 : i32
    %c0_i32_0 = arith.constant 0 : i32
    %c0_i32_1 = arith.constant 0 : i32
    return %c0_i32, %c0_i32_0 : i32, i32
  }
  func.func @transform_17(%arg0: i32) -> (i32, i32) {
    %c0_i32 = arith.constant 0 : i32
    %c0_i32_0 = arith.constant 0 : i32
    return %arg0, %c0_i32 : i32, i32
  }
}

</mosaic_0001>

<llo_original>
// kernel: _forward_padded.1
$region0: #{_forward_padded.1}
  #allocation0 [shape = 'u32[]', space=smem, size = 0x4, offset = 0x4, fixed_abs, tag = 'smem constant byte address 0x4 - core index']
  #allocation1 [shape = 'u32[144,128]{1,0:T(1,128)}', space=vmem, size = 0x12000, scoped, tag = 'internal scratch']
  %s0 = inlined_call_operand.vmem [shape: s32[64,1], index: 0, kind: input, shape index: {}]
  %s1 = inlined_call_operand.hbm [shape: f32[32,64], index: 1, kind: input, shape index: {}]
  %s2 = inlined_call_operand.vmem [shape: bf16[2,64,192], index: 2, kind: input, shape index: {}]
  %s3 = inlined_call_operand.hbm [shape: f32[2,1,192], index: 3, kind: input, shape index: {}]
  %s4 = inlined_call_operand.vmem [shape: bf16[2,64,64], index: 4, kind: input, shape index: {}]
  %s5 = inlined_call_operand.hbm [shape: f32[2,1,64], index: 5, kind: input, shape index: {}]
  %s6 = inlined_call_operand.hbm [shape: f32[2,1,64], index: 6, kind: input, shape index: {}]
  %s7 = inlined_call_operand.hbm [shape: f32[2,1,64], index: 7, kind: input, shape index: {}]
  %s8 = inlined_call_operand.vmem [shape: bf16[2,64,128], index: 8, kind: input, shape index: {}]
  %s9 = inlined_call_operand.hbm [shape: f32[2,1,128], index: 9, kind: input, shape index: {}]
  %s10 = inlined_call_operand.vmem [shape: bf16[2,128,64], index: 10, kind: input, shape index: {}]
  %s11 = inlined_call_operand.hbm [shape: f32[2,1,64], index: 11, kind: input, shape index: {}]
  %s12 = inlined_call_operand.hbm [shape: f32[2,1,64], index: 12, kind: input, shape index: {}]
  %s13 = inlined_call_operand.hbm [shape: f32[2,1,64], index: 13, kind: input, shape index: {}]
  %s14 = inlined_call_operand.hbm [shape: bf16[64,128], index: 14, kind: input, shape index: {}]
  %s15 = inlined_call_operand.hbm [shape: f32[1,128], index: 15, kind: input, shape index: {}]
  %s16 = inlined_call_operand.vmem [shape: bf16[32,64], index: 16, kind: input, shape index: {}]
  %s17 = inlined_call_operand.vmem [shape: f32[8,128], index: 17, kind: output, shape index: {}]
  %s18 = sld [smem:[#allocation0]]
  $region122: #{_forward_padded.1} parent=0
    _
  %s20 = ssub.s32 1, %s18
  %s21 = scalar_select 0, %s20, %s18
  $region1: #{_forward_padded.1} parent=0
    #allocation2 [shape = 'u8[16384]{0}', space=vmem, size = 0x4000, scoped, tag = 'input window, operand 1, single buffered']
    #allocation3 [shape = 's32[1]{0}', space=sflag, size = 0x4, scoped, tag = 'scoped memory for _forward_padded.1']
    #allocation4 [shape = 'u8[2048]{0}', space=vmem, size = 0x800, scoped, tag = 'input window, operand 3, single buffered']
    #allocation5 [shape = 's32[1]{0}', space=sflag, size = 0x4, scoped, tag = 'scoped memory for _forward_padded.1']
    #allocation6 [shape = 'u8[1024]{0}', space=vmem, size = 0x400, scoped, tag = 'input window, operand 5, single buffered']
    #allocation7 [shape = 'u8[1024]{0}', space=vmem, size = 0x400, scoped, tag = 'input window, operand 6, single buffered']
    #allocation8 [shape = 's32[1]{0}', space=sflag, size = 0x4, scoped, tag = 'scoped memory for _forward_padded.1']
    #allocation9 [shape = 'u8[1024]{0}', space=vmem, size = 0x400, scoped, tag = 'input window, operand 7, single buffered']
    #allocation10 [shape = 'u8[1024]{0}', space=vmem, size = 0x400, scoped, tag = 'input window, operand 9, single buffered']
    #allocation11 [shape = 's32[1]{0}', space=sflag, size = 0x4, scoped, tag = 'scoped memory for _forward_padded.1']
    #allocation12 [shape = 'u8[1024]{0}', space=vmem, size = 0x400, scoped, tag = 'input window, operand 11, single buffered']
    #allocation13 [shape = 'u8[1024]{0}', space=vmem, size = 0x400, scoped, tag = 'input window, operand 12, single buffered']
    #allocation14 [shape = 's32[1]{0}', space=sflag, size = 0x4, scoped, tag = 'scoped memory for _forward_padded.1']
    #allocation15 [shape = 'u8[1024]{0}', space=vmem, size = 0x400, scoped, tag = 'input window, operand 13, single buffered']
    #allocation16 [shape = 'u8[16384]{0}', space=vmem, size = 0x4000, scoped, tag = 'input window, operand 14, single buffered']
    #allocation17 [shape = 's32[1]{0}', space=sflag, size = 0x4, scoped, tag = 'scoped memory for _forward_padded.1']
    #allocation18 [shape = 'u8[512]{0}', space=vmem, size = 0x400, scoped, tag = 'input window, operand 15, single buffered']
    %22 = vsyncpa [#allocation3], 0
    %23 = vsyncpa [#allocation5], 0
    %24 = vsyncpa [#allocation8], 0
    %25 = vsyncpa [#allocation11], 0
    %26 = vsyncpa [#allocation14], 0
    %27 = vsyncpa [#allocation17], 0
    // Predicated region
    $region2: #{_forward_padded.1} parent=1 // pred_check
      _
    $region3: #{_forward_padded.1} parent=1 // pred_check_branch
      %29 = sbr.rel (0) target = $region5
    $region4: #{_forward_padded.1} parent=1 // pred_region
      _
    $region5: #{_forward_padded.1} parent=1 // pred_fallthru
      _
    // Predicated region
    $region6: #{_forward_padded.1} parent=1 // pred_check
      _
    $region7: #{_forward_padded.1} parent=1 // pred_check_branch
      %31 = sbr.rel (0) target = $region9
    $region8: #{_forward_padded.1} parent=1 // pred_region
      %s33 = ssub.s32 512, 512
      %34 = vsyncadd [#allocation3], %s33
      %s35 = sshll.u32 [#allocation2], 4
      %s36 = int_to_ptr.vmem [resolvable:$true] %s35
      %41 = dma.hbm_to_vmem [thread:$0]  %s1, 512, %s36, [#allocation3], 128, 128, 8
    $region9: #{_forward_padded.1} parent=1 // pred_fallthru
      _
    // Predicated region
    $region10: #{_forward_padded.1} parent=1 // pred_check
      _
    $region11: #{_forward_padded.1} parent=1 // pred_check_branch
      %43 = sbr.rel (0) target = $region13
    $region12: #{_forward_padded.1} parent=1 // pred_region
      _
    $region13: #{_forward_padded.1} parent=1 // pred_fallthru
      _
    // Predicated region
    $region14: #{_forward_padded.1} parent=1 // pred_check
      _
    $region15: #{_forward_padded.1} parent=1 // pred_check_branch
      %45 = sbr.rel (0) target = $region17
    $region16: #{_forward_padded.1} parent=1 // pred_region
      %s47 = ssub.s32 64, 64
      %48 = vsyncadd [#allocation5], %s47
      %s49 = sshll.u32 [#allocation4], 4
      %s50 = int_to_ptr.vmem [resolvable:$true] %s49
      %55 = dma.hbm_to_vmem [thread:$0]  %s3, 64, %s50, [#allocation5], 32, 32, 2
    $region17: #{_forward_padded.1} parent=1 // pred_fallthru
      _
    // Predicated region
    $region18: #{_forward_padded.1} parent=1 // pred_check
      _
    $region19: #{_forward_padded.1} parent=1 // pred_check_branch
      %57 = sbr.rel (0) target = $region21
    $region20: #{_forward_padded.1} parent=1 // pred_region
      _
    $region21: #{_forward_padded.1} parent=1 // pred_fallthru
      _
    // Predicated region
    $region22: #{_forward_padded.1} parent=1 // pred_check
      _
    $region23: #{_forward_padded.1} parent=1 // pred_check_branch
      %59 = sbr.rel (0) target = $region25
    $region24: #{_forward_padded.1} parent=1 // pred_region
      %s61 = ssub.s32 32, 32
      %62 = vsyncadd [#allocation5], %s61
      %s63 = sshll.u32 [#allocation6], 4
      %s64 = int_to_ptr.vmem [resolvable:$true] %s63
      %69 = dma.hbm_to_vmem [thread:$0]  %s5, 32, %s64, [#allocation5], 16, 16, 1
    $region25: #{_forward_padded.1} parent=1 // pred_fallthru
      _
    // Predicated region
    $region26: #{_forward_padded.1} parent=1 // pred_check
      _
    $region27: #{_forward_padded.1} parent=1 // pred_check_branch
      %71 = sbr.rel (0) target = $region29
    $region28: #{_forward_padded.1} parent=1 // pred_region
      %s73 = ssub.s32 32, 32
      %74 = vsyncadd [#allocation8], %s73
      %s75 = sshll.u32 [#allocation7], 4
      %s76 = int_to_ptr.vmem [resolvable:$true] %s75
      %81 = dma.hbm_to_vmem [thread:$0]  %s6, 32, %s76, [#allocation8], 16, 16, 1
    $region29: #{_forward_padded.1} parent=1 // pred_fallthru
      _
    // Predicated region
    $region30: #{_forward_padded.1} parent=1 // pred_check
      _
    $region31: #{_forward_padded.1} parent=1 // pred_check_branch
      %83 = sbr.rel (0) target = $region33
    $region32: #{_forward_padded.1} parent=1 // pred_region
      %s85 = ssub.s32 32, 32
      %86 = vsyncadd [#allocation8], %s85
      %s87 = sshll.u32 [#allocation9], 4
      %s88 = int_to_ptr.vmem [resolvable:$true] %s87
      %93 = dma.hbm_to_vmem [thread:$0]  %s7, 32, %s88, [#allocation8], 16, 16, 1
    $region33: #{_forward_padded.1} parent=1 // pred_fallthru
      _
    // Predicated region
    $region34: #{_forward_padded.1} parent=1 // pred_check
      _
    $region35: #{_forward_padded.1} parent=1 // pred_check_branch
      %95 = sbr.rel (0) target = $region37
    $region36: #{_forward_padded.1} parent=1 // pred_region
      _
    $region37: #{_forward_padded.1} parent=1 // pred_fallthru
      _
    // Predicated region
    $region38: #{_forward_padded.1} parent=1 // pred_check
      _
    $region39: #{_forward_padded.1} parent=1 // pred_check_branch
      %97 = sbr.rel (0) target = $region41
    $region40: #{_forward_padded.1} parent=1 // pred_region
      %s99 = ssub.s32 32, 32
      %100 = vsyncadd [#allocation11], %s99
      %s101 = sshll.u32 [#allocation10], 4
      %s102 = int_to_ptr.vmem [resolvable:$true] %s101
      %107 = dma.hbm_to_vmem [thread:$0]  %s9, 32, %s102, [#allocation11], 16, 16, 1
    $region41: #{_forward_padded.1} parent=1 // pred_fallthru
      _
    // Predicated region
    $region42: #{_forward_padded.1} parent=1 // pred_check
      _
    $region43: #{_forward_padded.1} parent=1 // pred_check_branch
      %109 = sbr.rel (0) target = $region45
    $region44: #{_forward_padded.1} parent=1 // pred_region
      _
    $region45: #{_forward_padded.1} parent=1 // pred_fallthru
      _
    // Predicated region
    $region46: #{_forward_padded.1} parent=1 // pred_check
      _
    $region47: #{_forward_padded.1} parent=1 // pred_check_branch
      %111 = sbr.rel (0) target = $region49
    $region48: #{_forward_padded.1} parent=1 // pred_region
      %s113 = ssub.s32 32, 32
      %114 = vsyncadd [#allocation11], %s113
      %s115 = sshll.u32 [#allocation12], 4
      %s116 = int_to_ptr.vmem [resolvable:$true] %s115
      %121 = dma.hbm_to_vmem [thread:$0]  %s11, 32, %s116, [#allocation11], 16, 16, 1
    $region49: #{_forward_padded.1} parent=1 // pred_fallthru
      _
    // Predicated region
    $region50: #{_forward_padded.1} parent=1 // pred_check
      _
    $region51: #{_forward_padded.1} parent=1 // pred_check_branch
      %123 = sbr.rel (0) target = $region53
    $region52: #{_forward_padded.1} parent=1 // pred_region
      %s125 = ssub.s32 32, 32
      %126 = vsyncadd [#allocation14], %s125
      %s127 = sshll.u32 [#allocation13], 4
      %s128 = int_to_ptr.vmem [resolvable:$true] %s127
      %133 = dma.hbm_to_vmem [thread:$0]  %s12, 32, %s128, [#allocation14], 16, 16, 1
    $region53: #{_forward_padded.1} parent=1 // pred_fallthru
      _
    // Predicated region
    $region54: #{_forward_padded.1} parent=1 // pred_check
      _
    $region55: #{_forward_padded.1} parent=1 // pred_check_branch
      %135 = sbr.rel (0) target = $region57
    $region56: #{_forward_padded.1} parent=1 // pred_region
      %s137 = ssub.s32 32, 32
      %138 = vsyncadd [#allocation14], %s137
      %s139 = sshll.u32 [#allocation15], 4
      %s140 = int_to_ptr.vmem [resolvable:$true] %s139
      %145 = dma.hbm_to_vmem [thread:$0]  %s13, 32, %s140, [#allocation14], 16, 16, 1
    $region57: #{_forward_padded.1} parent=1 // pred_fallthru
      _
    // Predicated region
    $region58: #{_forward_padded.1} parent=1 // pred_check
      _
    $region59: #{_forward_padded.1} parent=1 // pred_check_branch
      %147 = sbr.rel (0) target = $region61
    $region60: #{_forward_padded.1} parent=1 // pred_region
      %s149 = ssub.s32 512, 512
      %150 = vsyncadd [#allocation17], %s149
      %s151 = sshll.u32 [#allocation16], 4
      %s152 = int_to_ptr.vmem [resolvable:$true] %s151
      %157 = dma.hbm_to_vmem [thread:$0]  %s14, 512, %s152, [#allocation17], 64, 64, 4
    $region61: #{_forward_padded.1} parent=1 // pred_fallthru
      _
    // Predicated region
    $region62: #{_forward_padded.1} parent=1 // pred_check
      _
    $region63: #{_forward_padded.1} parent=1 // pred_check_branch
      %159 = sbr.rel (0) target = $region65
    $region64: #{_forward_padded.1} parent=1 // pred_region
      %s161 = ssub.s32 16, 16
      %162 = vsyncadd [#allocation17], %s161
      %s164 = sshll.u32 [#allocation18], 4
      %s165 = int_to_ptr.vmem [resolvable:$true] %s164
      %167 = dma.hbm_to_vmem [thread:$0]  %s15, 16, %s165, [#allocation17]
    $region65: #{_forward_padded.1} parent=1 // pred_fallthru
      _
    // Predicated region
    $region66: #{_forward_padded.1} parent=1 // pred_check
      _
    $region67: #{_forward_padded.1} parent=1 // pred_check_branch
      %169 = sbr.rel (0) target = $region69
    $region68: #{_forward_padded.1} parent=1 // pred_region
      _
    $region69: #{_forward_padded.1} parent=1 // pred_fallthru
      _
    // Predicated region
    $region70: #{_forward_padded.1} parent=1 // pred_check
      _
    $region71: #{_forward_padded.1} parent=1 // pred_check_branch
      %171 = sbr.rel (0) target = $region73
    $region72: #{_forward_padded.1} parent=1 // pred_region
      %172 = dma.done [#allocation3], 512
    $region73: #{_forward_padded.1} parent=1 // pred_fallthru
      _
    // Predicated region
    $region74: #{_forward_padded.1} parent=1 // pred_check
      _
    $region75: #{_forward_padded.1} parent=1 // pred_check_branch
      %174 = sbr.rel (0) target = $region77
    $region76: #{_forward_padded.1} parent=1 // pred_region
      %175 = dma.done [#allocation5], 64
    $region77: #{_forward_padded.1} parent=1 // pred_fallthru
      _
    // Predicated region
    $region78: #{_forward_padded.1} parent=1 // pred_check
      _
    $region79: #{_forward_padded.1} parent=1 // pred_check_branch
      %177 = sbr.rel (0) target = $region81
    $region80: #{_forward_padded.1} parent=1 // pred_region
      %178 = dma.done [#allocation5], 32
    $region81: #{_forward_padded.1} parent=1 // pred_fallthru
      _
    // Predicated region
    $region82: #{_forward_padded.1} parent=1 // pred_check
      _
    $region83: #{_forward_padded.1} parent=1 // pred_check_branch
      %180 = sbr.rel (0) target = $region85
    $region84: #{_forward_padded.1} parent=1 // pred_region
      %181 = dma.done [#allocation8], 32
    $region85: #{_forward_padded.1} parent=1 // pred_fallthru
      _
    // Predicated region
    $region86: #{_forward_padded.1} parent=1 // pred_check
      _
    $region87: #{_forward_padded.1} parent=1 // pred_check_branch
      %183 = sbr.rel (0) target = $region89
    $region88: #{_forward_padded.1} parent=1 // pred_region
      %184 = dma.done [#allocation8], 32
    $region89: #{_forward_padded.1} parent=1 // pred_fallthru
      _
    // Predicated region
    $region90: #{_forward_padded.1} parent=1 // pred_check
      _
    $region91: #{_forward_padded.1} parent=1 // pred_check_branch
      %186 = sbr.rel (0) target = $region93
    $region92: #{_forward_padded.1} parent=1 // pred_region
      %187 = dma.done [#allocation11], 32
    $region93: #{_forward_padded.1} parent=1 // pred_fallthru
      _
    // Predicated region
    $region94: #{_forward_padded.1} parent=1 // pred_check
      _
    $region95: #{_forward_padded.1} parent=1 // pred_check_branch
      %189 = sbr.rel (0) target = $region97
    $region96: #{_forward_padded.1} parent=1 // pred_region
      %190 = dma.done [#allocation11], 32
    $region97: #{_forward_padded.1} parent=1 // pred_fallthru
      _
    // Predicated region
    $region98: #{_forward_padded.1} parent=1 // pred_check
      _
    $region99: #{_forward_padded.1} parent=1 // pred_check_branch
      %192 = sbr.rel (0) target = $region101
    $region100: #{_forward_padded.1} parent=1 // pred_region
      %193 = dma.done [#allocation14], 32
    $region101: #{_forward_padded.1} parent=1 // pred_fallthru
      _
    // Predicated region
    $region102: #{_forward_padded.1} parent=1 // pred_check
      _
    $region103: #{_forward_padded.1} parent=1 // pred_check_branch
      %195 = sbr.rel (0) target = $region105
    $region104: #{_forward_padded.1} parent=1 // pred_region
      %196 = dma.done [#allocation14], 32
    $region105: #{_forward_padded.1} parent=1 // pred_fallthru
      _
    // Predicated region
    $region106: #{_forward_padded.1} parent=1 // pred_check
      _
    $region107: #{_forward_padded.1} parent=1 // pred_check_branch
      %198 = sbr.rel (0) target = $region109
    $region108: #{_forward_padded.1} parent=1 // pred_region
      %199 = dma.done [#allocation17], 512
    $region109: #{_forward_padded.1} parent=1 // pred_fallthru
      _
    // Predicated region
    $region110: #{_forward_padded.1} parent=1 // pred_check
      _
    $region111: #{_forward_padded.1} parent=1 // pred_check_branch
      %201 = sbr.rel (0) target = $region113
    $region112: #{_forward_padded.1} parent=1 // pred_region
      %202 = dma.done [#allocation17], 16
    $region113: #{_forward_padded.1} parent=1 // pred_fallthru
      _
    %v204 = vld [vmem:[%s16] sm:$0xf]
    %v205 = vld [vmem:[%s16 + $0x4] sm:$0xf]
    %v206 = vld [vmem:[%s16 + $0x8] sm:$0xf]
    %v207 = vld [vmem:[%s16 + $0xc] sm:$0xf]
    %v208 = vld [vmem:[%s0] sm:$0xff]
    %v209 = vld [vmem:[%s0 + $0x8] sm:$0xff]
    %v210 = vld [vmem:[%s0 + $0x10] sm:$0xff]
    %v211 = vld [vmem:[%s0 + $0x18] sm:$0xff]
    %v212 = vld [vmem:[%s0 + $0x20] sm:$0xff]
    %v213 = vld [vmem:[%s0 + $0x28] sm:$0xff]
    %v214 = vld [vmem:[%s0 + $0x30] sm:$0xff]
    %v215 = vld [vmem:[%s0 + $0x38] sm:$0xff]
    %v216 = vlaneseq
    %v217 = vand.u32 %v216, 127
    %218 = vset.pattern.permute.xlu0 0
    %219 = vperm.xlu0 %218, %v208
    %v220 = vpop.permute.xlu0 %219
    %221 = vset.pattern.permute.xlu0 0
    %222 = vperm.xlu0 %221, %v209
    %v223 = vpop.permute.xlu0 %222
    %224 = vset.pattern.permute.xlu0 0
    %225 = vperm.xlu0 %224, %v210
    %v226 = vpop.permute.xlu0 %225
    %227 = vset.pattern.permute.xlu0 0
    %228 = vperm.xlu0 %227, %v211
    %v229 = vpop.permute.xlu0 %228
    %230 = vset.pattern.permute.xlu0 0
    %231 = vperm.xlu0 %230, %v212
    %v232 = vpop.permute.xlu0 %231
    %233 = vset.pattern.permute.xlu0 0
    %234 = vperm.xlu0 %233, %v213
    %v235 = vpop.permute.xlu0 %234
    %236 = vset.pattern.permute.xlu0 0
    %237 = vperm.xlu0 %236, %v214
    %v238 = vpop.permute.xlu0 %237
    %239 = vset.pattern.permute.xlu0 0
    %240 = vperm.xlu0 %239, %v215
    %v241 = vpop.permute.xlu0 %240
    %vm242 = vcmp.eq.s32.totalorder %v217, %v220
    %vm243 = vcmp.eq.s32.totalorder %v217, %v223
    %vm244 = vcmp.eq.s32.totalorder %v217, %v226
    %vm245 = vcmp.eq.s32.totalorder %v217, %v229
    %vm246 = vcmp.eq.s32.totalorder %v217, %v232
    %vm247 = vcmp.eq.s32.totalorder %v217, %v235
    %vm248 = vcmp.eq.s32.totalorder %v217, %v238
    %vm249 = vcmp.eq.s32.totalorder %v217, %v241
    %v250 = vsel %vm242, 1, 0
    %v251 = vsel %vm243, 1, 0
    %v252 = vsel %vm244, 1, 0
    %v253 = vsel %vm245, 1, 0
    %v254 = vsel %vm246, 1, 0
    %v255 = vsel %vm247, 1, 0
    %v256 = vsel %vm248, 1, 0
    %v257 = vsel %vm249, 1, 0
    %v258 = vcvt.s32.f32 %v250
    %v259 = vcvt.s32.f32 %v251
    %v260 = vcvt.s32.f32 %v252
    %v261 = vcvt.s32.f32 %v253
    %v262 = vcvt.s32.f32 %v254
    %v263 = vcvt.s32.f32 %v255
    %v264 = vcvt.s32.f32 %v256
    %v265 = vcvt.s32.f32 %v257
    %v266 = vpack.c.bf16 %v259, %v258
    %v267 = vpack.c.bf16 %v261, %v260
    %v268 = vpack.c.bf16 %v263, %v262
    %v269 = vpack.c.bf16 %v265, %v264
    %v270 = vld [vmem:[#allocation2] sm:$0xff]
    %v271 = vld [vmem:[#allocation2 + $0x8] sm:$0xff]
    %v272 = vld [vmem:[#allocation2 + $0x10] sm:$0xff]
    %v273 = vld [vmem:[#allocation2 + $0x18] sm:$0xff]
    %v274 = vpack.c.bf16 %v271, %v270
    %v275 = vpack.c.bf16 %v273, %v272
    %vm276 = vcmask 261120
    %v278 = vsel %vm276, %v266, 0
    %v281 = vsel %vm276, %v267, 0
    %v284 = vsel %vm276, %v268, 0
    %v287 = vsel %vm276, %v269, 0
    %289 = vmatprep.subr.bf16.mxu0 0
    %290 = vmatpush1.bf16.msra.mxu0 %v274
    %291 = vmatprep.subr.bf16.mxu0 0
    %292 = vmatpush1.bf16.msra.mxu0 %v275
    %293 = vmatprep.subr.bf16.mxu0 0
    %294 = vmatpush1.bf16.msra.mxu0 0
    %295 = vmatprep.subr.bf16.mxu0 0
    %296 = vmatpush1.bf16.msra.mxu0 0
    %297 = vmatprep.subr.bf16.mxu0 0
    %298 = vmatpush1.bf16.msra.mxu0 0
    %299 = vmatprep.subr.bf16.mxu0 0
    %300 = vmatpush1.bf16.msra.mxu0 0
    %301 = vmatprep.subr.bf16.mxu0 0
    %302 = vmatpush1.bf16.msra.mxu0 0
    %303 = vmatprep.subr.bf16.mxu0 0
    %304 = vmatpush1.bf16.msra.mxu0 0
    %305 = vmatprep.subr.bf16.mxu0 0
    %306 = vmatpush1.bf16.msra.mxu0 0
    %307 = vmatprep.subr.bf16.mxu0 0
    %308 = vmatpush1.bf16.msra.mxu0 0
    %309 = vmatprep.subr.bf16.mxu0 0
    %310 = vmatpush1.bf16.msra.mxu0 0
    %311 = vmatprep.subr.bf16.mxu0 0
    %312 = vmatpush1.bf16.msra.mxu0 0
    %313 = vmatprep.subr.bf16.mxu0 0
    %314 = vmatpush1.bf16.msra.mxu0 0
    %315 = vmatprep.subr.bf16.mxu0 0
    %316 = vmatpush1.bf16.msra.mxu0 0
    %317 = vmatprep.subr.bf16.mxu0 0
    %318 = vmatpush1.bf16.msra.mxu0 0
    %319 = vmatprep.subr.bf16.mxu0 0
    %320 = vmatpush1.bf16.msra.mxu0 0
    %321 = vmatprep.mubr.bf16.mxu0 0
    %322 = vmatmul.mubr.bf16.gmra.mrb[0].mxu0 %v278
    %v323 = vpop.f32.mrb[0].mxu0
    %v324 = vadd.f32 0.0, %v323
    %v325 = vpop.f32.mrb[0].mxu0
    %v326 = vpop.f32.mrb[0].mxu0
    %v327 = vadd.f32 0.0, %v326
    %v328 = vpop.f32.mrb[0].mxu0
    %329 = vmatprep.mubr.bf16.mxu0 0
    %330 = vmatmul.mubr.bf16.gmra.mrb[0].mxu0 %v281
    %v331 = vpop.f32.mrb[0].mxu0
    %v332 = vadd.f32 0.0, %v331
    %v333 = vpop.f32.mrb[0].mxu0
    %v334 = vpop.f32.mrb[0].mxu0
    %v335 = vadd.f32 0.0, %v334
    %v336 = vpop.f32.mrb[0].mxu0
    %337 = vmatprep.mubr.bf16.mxu0 0
    %338 = vmatmul.mubr.bf16.gmra.mrb[0].mxu0 %v284
    %v339 = vpop.f32.mrb[0].mxu0
    %v340 = vadd.f32 0.0, %v339
    %v341 = vpop.f32.mrb[0].mxu0
    %v342 = vpop.f32.mrb[0].mxu0
    %v343 = vadd.f32 0.0, %v342
    %v344 = vpop.f32.mrb[0].mxu0
    %345 = vmatprep.mubr.bf16.mxu0 0
    %346 = vmatmul.mubr.bf16.gmra.mrb[0].mxu0 %v287
    %v347 = vpop.f32.mrb[0].mxu0
    %v348 = vadd.f32 0.0, %v347
    %v349 = vpop.f32.mrb[0].mxu0
    %v350 = vpop.f32.mrb[0].mxu0
    %v351 = vadd.f32 0.0, %v350
    %v352 = vpop.f32.mrb[0].mxu0
    %353 = vdwg.mxu0
    %v354 = vpack.c.bf16 %v327, %v324
    %v355 = vpack.c.bf16 %v335, %v332
    %v356 = vpack.c.bf16 %v343, %v340
    %v357 = vpack.c.bf16 %v351, %v348
    %v358 = vld [vmem:[%s2] sm:$0xff]
    %v359 = vld [vmem:[%s2 + $0x8] sm:$0xff]
    %v360 = vld [vmem:[%s2 + $0x10] sm:$0xff]
    %v361 = vld [vmem:[%s2 + $0x18] sm:$0xff]
    %v362 = vld [vmem:[%s2 + $0x20] sm:$0xff]
    %v363 = vld [vmem:[%s2 + $0x28] sm:$0xff]
    %v364 = vld [vmem:[%s2 + $0x30] sm:$0xff]
    %v365 = vld [vmem:[%s2 + $0x38] sm:$0xff]
    %v366 = vld [vmem:[#allocation4] sm:$0x3]
    %v368 = vlaneseq
    %v369 = vshrl.u32 %v368, 7
    %v370 = vsub.s32 0, %v369
    %v371 = vrot.slane %v366, %v370
    %v372 = vlaneseq
    %v373 = vshrl.u32 %v372, 7
    %v374 = vsub.s32 1, %v373
    %v375 = vrot.slane %v366, %v374
    %v386 = vunpack.c.l.b16 %v358
    %v387 = vunpack.c.h.b16 %v358
    %v388 = vunpack.c.l.b16 %v359
    %v389 = vunpack.c.h.b16 %v359
    %v390 = vunpack.c.l.b16 %v360
    %v391 = vunpack.c.h.b16 %v360
    %v392 = vunpack.c.l.b16 %v361
    %v393 = vunpack.c.h.b16 %v361
    %v394 = vunpack.c.l.b16 %v362
    %v395 = vunpack.c.h.b16 %v362
    %v396 = vunpack.c.l.b16 %v363
    %v397 = vunpack.c.h.b16 %v363
    %v398 = vunpack.c.l.b16 %v364
    %v399 = vunpack.c.h.b16 %v364
    %v400 = vunpack.c.l.b16 %v365
    %v401 = vunpack.c.h.b16 %v365
    %v402 = vpack.c.b16 %v388, %v386
    %v403 = vpack.c.b16 %v389, %v387
    %v404 = vpack.c.b16 %v392, %v390
    %v405 = vpack.c.b16 %v393, %v391
    %v406 = vpack.c.b16 %v396, %v394
    %v407 = vpack.c.b16 %v397, %v395
    %v408 = vpack.c.b16 %v400, %v398
    %v409 = vpack.c.b16 %v401, %v399
    %vm418 = vcmask 523264
    %v420 = vsel %vm418, %v354, 0
    %v423 = vsel %vm418, %v355, 0
    %v426 = vsel %vm418, %v356, 0
    %v429 = vsel %vm418, %v357, 0
    %431 = vmatprep.subr.bf16.mxu0 %v403
    %432 = vmatpush1.bf16.msra.mxu0 %v402
    %433 = vmatprep.subr.bf16.mxu0 %v405
    %434 = vmatpush1.bf16.msra.mxu0 %v404
    %435 = vmatprep.subr.bf16.mxu0 %v407
    %436 = vmatpush1.bf16.msra.mxu0 %v406
    %437 = vmatprep.subr.bf16.mxu0 %v409
    %438 = vmatpush1.bf16.msra.mxu0 %v408
    %439 = vmatprep.subr.bf16.mxu0 0
    %440 = vmatpush1.bf16.msra.mxu0 0
    %441 = vmatprep.subr.bf16.mxu0 0
    %442 = vmatpush1.bf16.msra.mxu0 0
    %443 = vmatprep.subr.bf16.mxu0 0
    %444 = vmatpush1.bf16.msra.mxu0 0
    %445 = vmatprep.subr.bf16.mxu0 0
    %446 = vmatpush1.bf16.msra.mxu0 0
    %447 = vmatprep.subr.bf16.mxu0 0
    %448 = vmatpush1.bf16.msra.mxu0 0
    %449 = vmatprep.subr.bf16.mxu0 0
    %450 = vmatpush1.bf16.msra.mxu0 0
    %451 = vmatprep.subr.bf16.mxu0 0
    %452 = vmatpush1.bf16.msra.mxu0 0
    %453 = vmatprep.subr.bf16.mxu0 0
    %454 = vmatpush1.bf16.msra.mxu0 0
    %455 = vmatprep.subr.bf16.mxu0 0
    %456 = vmatpush1.bf16.msra.mxu0 0
    %457 = vmatprep.subr.bf16.mxu0 0
    %458 = vmatpush1.bf16.msra.mxu0 0
    %459 = vmatprep.subr.bf16.mxu0 0
    %460 = vmatpush1.bf16.msra.mxu0 0
    %461 = vmatprep.subr.bf16.mxu0 0
    %462 = vmatpush1.bf16.msra.mxu0 0
    %463 = vmatprep.mubr.bf16.mxu0 0
    %464 = vmatmul.mubr.bf16.gmra.mrb[0].mxu0 %v420
    %v465 = vpop.f32.mrb[0].mxu0
    %v466 = vadd.f32 %v371, %v465
    %v467 = vpop.f32.mrb[0].mxu0
    %v468 = vadd.f32 %v375, %v467
    %v469 = vpop.f32.mrb[0].mxu0
    %v470 = vadd.f32 %v371, %v469
    %v471 = vpop.f32.mrb[0].mxu0
    %v472 = vadd.f32 %v375, %v471
    %473 = vmatprep.mubr.bf16.mxu0 0
    %474 = vmatmul.mubr.bf16.gmra.mrb[0].mxu0 %v423
    %v475 = vpop.f32.mrb[0].mxu0
    %v476 = vadd.f32 %v371, %v475
    %v477 = vpop.f32.mrb[0].mxu0
    %v478 = vadd.f32 %v375, %v477
    %v479 = vpop.f32.mrb[0].mxu0
    %v480 = vadd.f32 %v371, %v479
    %v481 = vpop.f32.mrb[0].mxu0
    %v482 = vadd.f32 %v375, %v481
    %483 = vmatprep.mubr.bf16.mxu0 0
    %484 = vmatmul.mubr.bf16.gmra.mrb[0].mxu0 %v426
    %v485 = vpop.f32.mrb[0].mxu0
    %v486 = vadd.f32 %v371, %v485
    %v487 = vpop.f32.mrb[0].mxu0
    %v488 = vadd.f32 %v375, %v487
    %v489 = vpop.f32.mrb[0].mxu0
    %v490 = vadd.f32 %v371, %v489
    %v491 = vpop.f32.mrb[0].mxu0
    %v492 = vadd.f32 %v375, %v491
    %493 = vmatprep.mubr.bf16.mxu0 0
    %494 = vmatmul.mubr.bf16.gmra.mrb[0].mxu0 %v429
    %v495 = vpop.f32.mrb[0].mxu0
    %v496 = vadd.f32 %v371, %v495
    %v497 = vpop.f32.mrb[0].mxu0
    %v498 = vadd.f32 %v375, %v497
    %v499 = vpop.f32.mrb[0].mxu0
    %v500 = vadd.f32 %v371, %v499
    %v501 = vpop.f32.mrb[0].mxu0
    %v502 = vadd.f32 %v375, %v501
    %503 = vdwg.mxu0
    %v504 = vmul.f32 %v466, 0.25
    %v505 = vmul.f32 %v470, 0.25
    %v506 = vmul.f32 %v476, 0.25
    %v507 = vmul.f32 %v480, 0.25
    %v508 = vmul.f32 %v486, 0.25
    %v509 = vmul.f32 %v490, 0.25
    %v510 = vmul.f32 %v496, 0.25
    %v511 = vmul.f32 %v500, 0.25
    %v512 = vpack.c.bf16 %v505, %v504
    %v513 = vpack.c.bf16 %v507, %v506
    %v514 = vpack.c.bf16 %v509, %v508
    %v515 = vpack.c.bf16 %v511, %v510
    %v516 = vpack.c.bf16 %v470, %v466
    %v517 = vpack.c.bf16 %v480, %v476
    %v518 = vpack.c.bf16 %v490, %v486
    %v519 = vpack.c.bf16 %v500, %v496
    %v520 = vpack.c.bf16 %v472, %v468
    %v521 = vpack.c.bf16 %v482, %v478
    %v522 = vpack.c.bf16 %v492, %v488
    %v523 = vpack.c.bf16 %v502, %v498
    %v528 = vunpack.c.l.b16 %v512
    %v529 = vunpack.c.h.b16 %v512
    %v530 = vunpack.c.l.b16 %v513
    %v531 = vunpack.c.h.b16 %v513
    %v532 = vunpack.c.l.b16 %v514
    %v533 = vunpack.c.h.b16 %v514
    %v534 = vunpack.c.l.b16 %v515
    %v535 = vunpack.c.h.b16 %v515
    %v536 = vpack.c.b16 %v528, %v528
    %v537 = vpack.c.b16 %v529, %v529
    %v538 = vpack.c.b16 %v530, %v530
    %v539 = vpack.c.b16 %v531, %v531
    %v540 = vpack.c.b16 %v532, %v532
    %v541 = vpack.c.b16 %v533, %v533
    %v542 = vpack.c.b16 %v534, %v534
    %v543 = vpack.c.b16 %v535, %v535
    %v548 = vunpack.c.l.b16 %v516
    %v549 = vunpack.c.h.b16 %v516
    %v550 = vunpack.c.l.b16 %v517
    %v551 = vunpack.c.h.b16 %v517
    %v552 = vunpack.c.l.b16 %v518
    %v553 = vunpack.c.h.b16 %v518
    %v554 = vunpack.c.l.b16 %v519
    %v555 = vunpack.c.h.b16 %v519
    %v556 = vpack.c.b16 %v548, %v548
    %v557 = vpack.c.b16 %v549, %v549
    %v558 = vpack.c.b16 %v550, %v550
    %v559 = vpack.c.b16 %v551, %v551
    %v560 = vpack.c.b16 %v552, %v552
    %v561 = vpack.c.b16 %v553, %v553
    %v562 = vpack.c.b16 %v554, %v554
    %v563 = vpack.c.b16 %v555, %v555
    %v568 = vunpack.c.l.b16 %v520
    %v569 = vunpack.c.h.b16 %v520
    %v570 = vunpack.c.l.b16 %v521
    %v571 = vunpack.c.h.b16 %v521
    %v572 = vunpack.c.l.b16 %v522
    %v573 = vunpack.c.h.b16 %v522
    %v574 = vunpack.c.l.b16 %v523
    %v575 = vunpack.c.h.b16 %v523
    %v576 = vpack.c.b16 %v568, %v568
    %v577 = vpack.c.b16 %v569, %v569
    %v578 = vpack.c.b16 %v570, %v570
    %v579 = vpack.c.b16 %v571, %v571
    %v580 = vpack.c.b16 %v572, %v572
    %v581 = vpack.c.b16 %v573, %v573
    %v582 = vpack.c.b16 %v574, %v574
    %v583 = vpack.c.b16 %v575, %v575
    %vm584 = vcmask 1043456
    %v586 = vsel %vm584, %v556, %v556
    %v589 = vsel %vm584, %v557, %v557
    %v592 = vsel %vm584, %v558, %v558
    %v595 = vsel %vm584, %v559, %v559
    %v598 = vsel %vm584, %v560, %v560
    %v601 = vsel %vm584, %v561, %v561
    %v604 = vsel %vm584, %v562, %v562
    %v607 = vsel %vm584, %v563, %v563
    %v613 = vunpack.c.l.b16 %v204
    %v614 = vunpack.c.l.b16 %v205
    %v615 = vunpack.c.l.b16 %v206
    %v616 = vunpack.c.l.b16 %v207
    %v617 = vpack.c.b16 %v614, %v613
    %v618 = vpack.c.b16 %v616, %v615
    %619 = vrot.lane.b32.xlu0 %v617, 64
    %v620 = vpop.permute.xlu0 %619
    %621 = vrot.lane.b32.xlu0 %v618, 64
    %v622 = vpop.permute.xlu0 %621
    %v625 = vmul.bf16 %v586, %v620
    %v626 = vmul.bf16 %v586, %v622
    %v627 = vmul.bf16 %v589, %v620
    %v628 = vmul.bf16 %v589, %v622
    %v629 = vmul.bf16 %v592, %v620
    %v630 = vmul.bf16 %v592, %v622
    %v631 = vmul.bf16 %v595, %v620
    %v632 = vmul.bf16 %v595, %v622
    %v633 = vmul.bf16 %v598, %v620
    %v634 = vmul.bf16 %v598, %v622
    %v635 = vmul.bf16 %v601, %v620
    %v636 = vmul.bf16 %v601, %v622
    %v637 = vmul.bf16 %v604, %v620
    %v638 = vmul.bf16 %v604, %v622
    %v639 = vmul.bf16 %v607, %v620
    %v640 = vmul.bf16 %v607, %v622
    %v642 = vsel %vm584, %v576, %v576
    %v645 = vsel %vm584, %v577, %v577
    %v648 = vsel %vm584, %v578, %v578
    %v651 = vsel %vm584, %v579, %v579
    %v654 = vsel %vm584, %v580, %v580
    %v657 = vsel %vm584, %v581, %v581
    %v660 = vsel %vm584, %v582, %v582
    %v663 = vsel %vm584, %v583, %v583
    %v667 = vmul.bf16 %v642, %v617
    %v668 = vmul.bf16 %v642, %v618
    %v669 = vmul.bf16 %v645, %v617
    %v670 = vmul.bf16 %v645, %v618
    %v671 = vmul.bf16 %v648, %v617
    %v672 = vmul.bf16 %v648, %v618
    %v673 = vmul.bf16 %v651, %v617
    %v674 = vmul.bf16 %v651, %v618
    %v675 = vmul.bf16 %v654, %v617
    %v676 = vmul.bf16 %v654, %v618
    %v677 = vmul.bf16 %v657, %v617
    %v678 = vmul.bf16 %v657, %v618
    %v679 = vmul.bf16 %v660, %v617
    %v680 = vmul.bf16 %v660, %v618
    %v681 = vmul.bf16 %v663, %v617
    %v682 = vmul.bf16 %v663, %v618
    %685 = vrot.lane.b32.xlu0 %v625, 64
    %v686 = vpop.permute.xlu0 %685
    %687 = vrot.lane.b32.xlu0 %v626, 64
    %v688 = vpop.permute.xlu0 %687
    %v690 = vsel %vm418, %v536, 0
    %v693 = vsel %vm418, %v686, 0
    %v696 = vsel %vm418, %v688, 0
    %698 = vmatprep.subr.bf16.mxu0 0
    %699 = vmatpush1.bf16.xpose.msra.mxu0 %v693
    %700 = vmatprep.subr.bf16.mxu0 0
    %701 = vmatpush1.bf16.xpose.msra.mxu0 %v696
    %702 = vmatprep.subr.bf16.mxu0 0
    %703 = vmatpush1.bf16.xpose.msra.mxu0 0
    %704 = vmatprep.subr.bf16.mxu0 0
    %705 = vmatpush1.bf16.xpose.msra.mxu0 0
    %706 = vmatprep.subr.bf16.mxu0 0
    %707 = vmatpush1.bf16.xpose.msra.mxu0 0
    %708 = vmatprep.subr.bf16.mxu0 0
    %709 = vmatpush1.bf16.xpose.msra.mxu0 0
    %710 = vmatprep.subr.bf16.mxu0 0
    %711 = vmatpush1.bf16.xpose.msra.mxu0 0
    %712 = vmatprep.subr.bf16.mxu0 0
    %713 = vmatpush1.bf16.xpose.msra.mxu0 0
    %714 = vmatprep.subr.bf16.mxu0 0
    %715 = vmatpush1.bf16.xpose.msra.mxu0 0
    %716 = vmatprep.subr.bf16.mxu0 0
    %717 = vmatpush1.bf16.xpose.msra.mxu0 0
    %718 = vmatprep.subr.bf16.mxu0 0
    %719 = vmatpush1.bf16.xpose.msra.mxu0 0
    %720 = vmatprep.subr.bf16.mxu0 0
    %721 = vmatpush1.bf16.xpose.msra.mxu0 0
    %722 = vmatprep.subr.bf16.mxu0 0
    %723 = vmatpush1.bf16.xpose.msra.mxu0 0
    %724 = vmatprep.subr.bf16.mxu0 0
    %725 = vmatpush1.bf16.xpose.msra.mxu0 0
    %726 = vmatprep.subr.bf16.mxu0 0
    %727 = vmatpush1.bf16.xpose.msra.mxu0 0
    %728 = vmatprep.subr.bf16.mxu0 0
    %729 = vmatpush1.bf16.xpose.msra.mxu0 0
    %730 = vmatprep.mubr.bf16.mxu0 0
    %731 = vmatmul.mubr.bf16.gmra.mrb[0].mxu0 %v690
    %v732 = vpop.f32.mrb[0].mxu0
    %v733 = vadd.f32 0.0, %v732
    %v734 = vpop.f32.mrb[0].mxu0
    %v735 = vpop.f32.mrb[0].mxu0
    %v736 = vpop.f32.mrb[0].mxu0
    %737 = vdwg.mxu0
    %740 = vrot.lane.b32.xlu0 %v627, 64
    %v741 = vpop.permute.xlu0 %740
    %742 = vrot.lane.b32.xlu0 %v628, 64
    %v743 = vpop.permute.xlu0 %742
    %v745 = vsel %vm418, %v537, 0
    %v748 = vsel %vm418, %v741, 0
    %v751 = vsel %vm418, %v743, 0
    %753 = vmatprep.subr.bf16.mxu0 0
    %754 = vmatpush1.bf16.xpose.msra.mxu0 %v748
    %755 = vmatprep.subr.bf16.mxu0 0
    %756 = vmatpush1.bf16.xpose.msra.mxu0 %v751
    %757 = vmatprep.subr.bf16.mxu0 0
    %758 = vmatpush1.bf16.xpose.msra.mxu0 0
    %759 = vmatprep.subr.bf16.mxu0 0
    %760 = vmatpush1.bf16.xpose.msra.mxu0 0
    %761 = vmatprep.subr.bf16.mxu0 0
    %762 = vmatpush1.bf16.xpose.msra.mxu0 0
    %763 = vmatprep.subr.bf16.mxu0 0
    %764 = vmatpush1.bf16.xpose.msra.mxu0 0
    %765 = vmatprep.subr.bf16.mxu0 0
    %766 = vmatpush1.bf16.xpose.msra.mxu0 0
    %767 = vmatprep.subr.bf16.mxu0 0
    %768 = vmatpush1.bf16.xpose.msra.mxu0 0
    %769 = vmatprep.subr.bf16.mxu0 0
    %770 = vmatpush1.bf16.xpose.msra.mxu0 0
    %771 = vmatprep.subr.bf16.mxu0 0
    %772 = vmatpush1.bf16.xpose.msra.mxu0 0
    %773 = vmatprep.subr.bf16.mxu0 0
    %774 = vmatpush1.bf16.xpose.msra.mxu0 0
    %775 = vmatprep.subr.bf16.mxu0 0
    %776 = vmatpush1.bf16.xpose.msra.mxu0 0
    %777 = vmatprep.subr.bf16.mxu0 0
    %778 = vmatpush1.bf16.xpose.msra.mxu0 0
    %779 = vmatprep.subr.bf16.mxu0 0
    %780 = vmatpush1.bf16.xpose.msra.mxu0 0
    %781 = vmatprep.subr.bf16.mxu0 0
    %782 = vmatpush1.bf16.xpose.msra.mxu0 0
    %783 = vmatprep.subr.bf16.mxu0 0
    %784 = vmatpush1.bf16.xpose.msra.mxu0 0
    %785 = vmatprep.mubr.bf16.mxu0 0
    %786 = vmatmul.mubr.bf16.gmra.mrb[0].mxu0 %v745
    %v787 = vpop.f32.mrb[0].mxu0
    %v788 = vadd.f32 0.0, %v787
    %v789 = vpop.f32.mrb[0].mxu0
    %v790 = vpop.f32.mrb[0].mxu0
    %v791 = vpop.f32.mrb[0].mxu0
    %792 = vdwg.mxu0
    %795 = vrot.lane.b32.xlu0 %v629, 64
    %v796 = vpop.permute.xlu0 %795
    %797 = vrot.lane.b32.xlu0 %v630, 64
    %v798 = vpop.permute.xlu0 %797
    %v800 = vsel %vm418, %v538, 0
    %v803 = vsel %vm418, %v796, 0
    %v806 = vsel %vm418, %v798, 0
    %808 = vmatprep.subr.bf16.mxu0 0
    %809 = vmatpush1.bf16.xpose.msra.mxu0 %v803
    %810 = vmatprep.subr.bf16.mxu0 0
    %811 = vmatpush1.bf16.xpose.msra.mxu0 %v806
    %812 = vmatprep.subr.bf16.mxu0 0
    %813 = vmatpush1.bf16.xpose.msra.mxu0 0
    %814 = vmatprep.subr.bf16.mxu0 0
    %815 = vmatpush1.bf16.xpose.msra.mxu0 0
    %816 = vmatprep.subr.bf16.mxu0 0
    %817 = vmatpush1.bf16.xpose.msra.mxu0 0
    %818 = vmatprep.subr.bf16.mxu0 0
    %819 = vmatpush1.bf16.xpose.msra.mxu0 0
    %820 = vmatprep.subr.bf16.mxu0 0
    %821 = vmatpush1.bf16.xpose.msra.mxu0 0
    %822 = vmatprep.subr.bf16.mxu0 0
    %823 = vmatpush1.bf16.xpose.msra.mxu0 0
    %824 = vmatprep.subr.bf16.mxu0 0
    %825 = vmatpush1.bf16.xpose.msra.mxu0 0
    %826 = vmatprep.subr.bf16.mxu0 0
    %827 = vmatpush1.bf16.xpose.msra.mxu0 0
    %828 = vmatprep.subr.bf16.mxu0 0
    %829 = vmatpush1.bf16.xpose.msra.mxu0 0
    %830 = vmatprep.subr.bf16.mxu0 0
    %831 = vmatpush1.bf16.xpose.msra.mxu0 0
    %832 = vmatprep.subr.bf16.mxu0 0
    %833 = vmatpush1.bf16.xpose.msra.mxu0 0
    %834 = vmatprep.subr.bf16.mxu0 0
    %835 = vmatpush1.bf16.xpose.msra.mxu0 0
    %836 = vmatprep.subr.bf16.mxu0 0
    %837 = vmatpush1.bf16.xpose.msra.mxu0 0
    %838 = vmatprep.subr.bf16.mxu0 0
    %839 = vmatpush1.bf16.xpose.msra.mxu0 0
    %840 = vmatprep.mubr.bf16.mxu0 0
    %841 = vmatmul.mubr.bf16.gmra.mrb[0].mxu0 %v800
    %v842 = vpop.f32.mrb[0].mxu0
    %v843 = vadd.f32 0.0, %v842
    %v844 = vpop.f32.mrb[0].mxu0
    %v845 = vpop.f32.mrb[0].mxu0
    %v846 = vpop.f32.mrb[0].mxu0
    %847 = vdwg.mxu0
    %850 = vrot.lane.b32.xlu0 %v631, 64
    %v851 = vpop.permute.xlu0 %850
    %852 = vrot.lane.b32.xlu0 %v632, 64
    %v853 = vpop.permute.xlu0 %852
    %v855 = vsel %vm418, %v539, 0
    %v858 = vsel %vm418, %v851, 0
    %v861 = vsel %vm418, %v853, 0
    %863 = vmatprep.subr.bf16.mxu0 0
    %864 = vmatpush1.bf16.xpose.msra.mxu0 %v858
    %865 = vmatprep.subr.bf16.mxu0 0
    %866 = vmatpush1.bf16.xpose.msra.mxu0 %v861
    %867 = vmatprep.subr.bf16.mxu0 0
    %868 = vmatpush1.bf16.xpose.msra.mxu0 0
    %869 = vmatprep.subr.bf16.mxu0 0
    %870 = vmatpush1.bf16.xpose.msra.mxu0 0
    %871 = vmatprep.subr.bf16.mxu0 0
    %872 = vmatpush1.bf16.xpose.msra.mxu0 0
    %873 = vmatprep.subr.bf16.mxu0 0
    %874 = vmatpush1.bf16.xpose.msra.mxu0 0
    %875 = vmatprep.subr.bf16.mxu0 0
    %876 = vmatpush1.bf16.xpose.msra.mxu0 0
    %877 = vmatprep.subr.bf16.mxu0 0
    %878 = vmatpush1.bf16.xpose.msra.mxu0 0
    %879 = vmatprep.subr.bf16.mxu0 0
    %880 = vmatpush1.bf16.xpose.msra.mxu0 0
    %881 = vmatprep.subr.bf16.mxu0 0
    %882 = vmatpush1.bf16.xpose.msra.mxu0 0
    %883 = vmatprep.subr.bf16.mxu0 0
    %884 = vmatpush1.bf16.xpose.msra.mxu0 0
    %885 = vmatprep.subr.bf16.mxu0 0
    %886 = vmatpush1.bf16.xpose.msra.mxu0 0
    %887 = vmatprep.subr.bf16.mxu0 0
    %888 = vmatpush1.bf16.xpose.msra.mxu0 0
    %889 = vmatprep.subr.bf16.mxu0 0
    %890 = vmatpush1.bf16.xpose.msra.mxu0 0
    %891 = vmatprep.subr.bf16.mxu0 0
    %892 = vmatpush1.bf16.xpose.msra.mxu0 0
    %893 = vmatprep.subr.bf16.mxu0 0
    %894 = vmatpush1.bf16.xpose.msra.mxu0 0
    %895 = vmatprep.mubr.bf16.mxu0 0
    %896 = vmatmul.mubr.bf16.gmra.mrb[0].mxu0 %v855
    %v897 = vpop.f32.mrb[0].mxu0
    %v898 = vadd.f32 0.0, %v897
    %v899 = vpop.f32.mrb[0].mxu0
    %v900 = vpop.f32.mrb[0].mxu0
    %v901 = vpop.f32.mrb[0].mxu0
    %902 = vdwg.mxu0
    %905 = vrot.lane.b32.xlu0 %v633, 64
    %v906 = vpop.permute.xlu0 %905
    %907 = vrot.lane.b32.xlu0 %v634, 64
    %v908 = vpop.permute.xlu0 %907
    %v910 = vsel %vm418, %v540, 0
    %v913 = vsel %vm418, %v906, 0
    %v916 = vsel %vm418, %v908, 0
    %918 = vmatprep.subr.bf16.mxu0 0
    %919 = vmatpush1.bf16.xpose.msra.mxu0 %v913
    %920 = vmatprep.subr.bf16.mxu0 0
    %921 = vmatpush1.bf16.xpose.msra.mxu0 %v916
    %922 = vmatprep.subr.bf16.mxu0 0
    %923 = vmatpush1.bf16.xpose.msra.mxu0 0
    %924 = vmatprep.subr.bf16.mxu0 0
    %925 = vmatpush1.bf16.xpose.msra.mxu0 0
    %926 = vmatprep.subr.bf16.mxu0 0
    %927 = vmatpush1.bf16.xpose.msra.mxu0 0
    %928 = vmatprep.subr.bf16.mxu0 0
    %929 = vmatpush1.bf16.xpose.msra.mxu0 0
    %930 = vmatprep.subr.bf16.mxu0 0
    %931 = vmatpush1.bf16.xpose.msra.mxu0 0
    %932 = vmatprep.subr.bf16.mxu0 0
    %933 = vmatpush1.bf16.xpose.msra.mxu0 0
    %934 = vmatprep.subr.bf16.mxu0 0
    %935 = vmatpush1.bf16.xpose.msra.mxu0 0
    %936 = vmatprep.subr.bf16.mxu0 0
    %937 = vmatpush1.bf16.xpose.msra.mxu0 0
    %938 = vmatprep.subr.bf16.mxu0 0
    %939 = vmatpush1.bf16.xpose.msra.mxu0 0
    %940 = vmatprep.subr.bf16.mxu0 0
    %941 = vmatpush1.bf16.xpose.msra.mxu0 0
    %942 = vmatprep.subr.bf16.mxu0 0
    %943 = vmatpush1.bf16.xpose.msra.mxu0 0
    %944 = vmatprep.subr.bf16.mxu0 0
    %945 = vmatpush1.bf16.xpose.msra.mxu0 0
    %946 = vmatprep.subr.bf16.mxu0 0
    %947 = vmatpush1.bf16.xpose.msra.mxu0 0
    %948 = vmatprep.subr.bf16.mxu0 0
    %949 = vmatpush1.bf16.xpose.msra.mxu0 0
    %950 = vmatprep.mubr.bf16.mxu0 0
    %951 = vmatmul.mubr.bf16.gmra.mrb[0].mxu0 %v910
    %v952 = vpop.f32.mrb[0].mxu0
    %v953 = vadd.f32 0.0, %v952
    %v954 = vpop.f32.mrb[0].mxu0
    %v955 = vpop.f32.mrb[0].mxu0
    %v956 = vpop.f32.mrb[0].mxu0
    %957 = vdwg.mxu0
    %960 = vrot.lane.b32.xlu0 %v635, 64
    %v961 = vpop.permute.xlu0 %960
    %962 = vrot.lane.b32.xlu0 %v636, 64
    %v963 = vpop.permute.xlu0 %962
    %v965 = vsel %vm418, %v541, 0
    %v968 = vsel %vm418, %v961, 0
    %v971 = vsel %vm418, %v963, 0
    %973 = vmatprep.subr.bf16.mxu0 0
    %974 = vmatpush1.bf16.xpose.msra.mxu0 %v968
    %975 = vmatprep.subr.bf16.mxu0 0
    %976 = vmatpush1.bf16.xpose.msra.mxu0 %v971
    %977 = vmatprep.subr.bf16.mxu0 0
    %978 = vmatpush1.bf16.xpose.msra.mxu0 0
    %979 = vmatprep.subr.bf16.mxu0 0
    %980 = vmatpush1.bf16.xpose.msra.mxu0 0
    %981 = vmatprep.subr.bf16.mxu0 0
    %982 = vmatpush1.bf16.xpose.msra.mxu0 0
    %983 = vmatprep.subr.bf16.mxu0 0
    %984 = vmatpush1.bf16.xpose.msra.mxu0 0
    %985 = vmatprep.subr.bf16.mxu0 0
    %986 = vmatpush1.bf16.xpose.msra.mxu0 0
    %987 = vmatprep.subr.bf16.mxu0 0
    %988 = vmatpush1.bf16.xpose.msra.mxu0 0
    %989 = vmatprep.subr.bf16.mxu0 0
    %990 = vmatpush1.bf16.xpose.msra.mxu0 0
    %991 = vmatprep.subr.bf16.mxu0 0
    %992 = vmatpush1.bf16.xpose.msra.mxu0 0
    %993 = vmatprep.subr.bf16.mxu0 0
    %994 = vmatpush1.bf16.xpose.msra.mxu0 0
    %995 = vmatprep.subr.bf16.mxu0 0
    %996 = vmatpush1.bf16.xpose.msra.mxu0 0
    %997 = vmatprep.subr.bf16.mxu0 0
    %998 = vmatpush1.bf16.xpose.msra.mxu0 0
    %999 = vmatprep.subr.bf16.mxu0 0
    %1000 = vmatpush1.bf16.xpose.msra.mxu0 0
    %1001 = vmatprep.subr.bf16.mxu0 0
    %1002 = vmatpush1.bf16.xpose.msra.mxu0 0
    %1003 = vmatprep.subr.bf16.mxu0 0
    %1004 = vmatpush1.bf16.xpose.msra.mxu0 0
    %1005 = vmatprep.mubr.bf16.mxu0 0
    %1006 = vmatmul.mubr.bf16.gmra.mrb[0].mxu0 %v965
    %v1007 = vpop.f32.mrb[0].mxu0
    %v1008 = vadd.f32 0.0, %v1007
    %v1009 = vpop.f32.mrb[0].mxu0
    %v1010 = vpop.f32.mrb[0].mxu0
    %v1011 = vpop.f32.mrb[0].mxu0
    %1012 = vdwg.mxu0
    %1015 = vrot.lane.b32.xlu0 %v637, 64
    %v1016 = vpop.permute.xlu0 %1015
    %1017 = vrot.lane.b32.xlu0 %v638, 64
    %v1018 = vpop.permute.xlu0 %1017
    %v1020 = vsel %vm418, %v542, 0
    %v1023 = vsel %vm418, %v1016, 0
    %v1026 = vsel %vm418, %v1018, 0
    %1028 = vmatprep.subr.bf16.mxu0 0
    %1029 = vmatpush1.bf16.xpose.msra.mxu0 %v1023
    %1030 = vmatprep.subr.bf16.mxu0 0
    %1031 = vmatpush1.bf16.xpose.msra.mxu0 %v1026
    %1032 = vmatprep.subr.bf16.mxu0 0
    %1033 = vmatpush1.bf16.xpose.msra.mxu0 0
    %1034 = vmatprep.subr.bf16.mxu0 0
    %1035 = vmatpush1.bf16.xpose.msra.mxu0 0
    %1036 = vmatprep.subr.bf16.mxu0 0
    %1037 = vmatpush1.bf16.xpose.msra.mxu0 0
    %1038 = vmatprep.subr.bf16.mxu0 0
    %1039 = vmatpush1.bf16.xpose.msra.mxu0 0
    %1040 = vmatprep.subr.bf16.mxu0 0
    %1041 = vmatpush1.bf16.xpose.msra.mxu0 0
    %1042 = vmatprep.subr.bf16.mxu0 0
    %1043 = vmatpush1.bf16.xpose.msra.mxu0 0
    %1044 = vmatprep.subr.bf16.mxu0 0
    %1045 = vmatpush1.bf16.xpose.msra.mxu0 0
    %1046 = vmatprep.subr.bf16.mxu0 0
    %1047 = vmatpush1.bf16.xpose.msra.mxu0 0
    %1048 = vmatprep.subr.bf16.mxu0 0
    %1049 = vmatpush1.bf16.xpose.msra.mxu0 0
    %1050 = vmatprep.subr.bf16.mxu0 0
    %1051 = vmatpush1.bf16.xpose.msra.mxu0 0
    %1052 = vmatprep.subr.bf16.mxu0 0
    %1053 = vmatpush1.bf16.xpose.msra.mxu0 0
    %1054 = vmatprep.subr.bf16.mxu0 0
    %1055 = vmatpush1.bf16.xpose.msra.mxu0 0
    %1056 = vmatprep.subr.bf16.mxu0 0
    %1057 = vmatpush1.bf16.xpose.msra.mxu0 0
    %1058 = vmatprep.subr.bf16.mxu0 0
    %1059 = vmatpush1.bf16.xpose.msra.mxu0 0
    %1060 = vmatprep.mubr.bf16.mxu0 0
    %1061 = vmatmul.mubr.bf16.gmra.mrb[0].mxu0 %v1020
    %v1062 = vpop.f32.mrb[0].mxu0
    %v1063 = vadd.f32 0.0, %v1062
    %v1064 = vpop.f32.mrb[0].mxu0
    %v1065 = vpop.f32.mrb[0].mxu0
    %v1066 = vpop.f32.mrb[0].mxu0
    %1067 = vdwg.mxu0
    %1070 = vrot.lane.b32.xlu0 %v639, 64
    %v1071 = vpop.permute.xlu0 %1070
    %1072 = vrot.lane.b32.xlu0 %v640, 64
    %v1073 = vpop.permute.xlu0 %1072
    %v1075 = vsel %vm418, %v543, 0
    %v1078 = vsel %vm418, %v1071, 0
    %v1081 = vsel %vm418, %v1073, 0
    %1083 = vmatprep.subr.bf16.mxu0 0
    %1084 = vmatpush1.bf16.xpose.msra.mxu0 %v1078
    %1085 = vmatprep.subr.bf16.mxu0 0
    %1086 = vmatpush1.bf16.xpose.msra.mxu0 %v1081
    %1087 = vmatprep.subr.bf16.mxu0 0
    %1088 = vmatpush1.bf16.xpose.msra.mxu0 0
    %1089 = vmatprep.subr.bf16.mxu0 0
    %1090 = vmatpush1.bf16.xpose.msra.mxu0 0
    %1091 = vmatprep.subr.bf16.mxu0 0
    %1092 = vmatpush1.bf16.xpose.msra.mxu0 0
    %1093 = vmatprep.subr.bf16.mxu0 0
    %1094 = vmatpush1.bf16.xpose.msra.mxu0 0
    %1095 = vmatprep.subr.bf16.mxu0 0
    %1096 = vmatpush1.bf16.xpose.msra.mxu0 0
    %1097 = vmatprep.subr.bf16.mxu0 0
    %1098 = vmatpush1.bf16.xpose.msra.mxu0 0
    %1099 = vmatprep.subr.bf16.mxu0 0
    %1100 = vmatpush1.bf16.xpose.msra.mxu0 0
    %1101 = vmatprep.subr.bf16.mxu0 0
    %1102 = vmatpush1.bf16.xpose.msra.mxu0 0
    %1103 = vmatprep.subr.bf16.mxu0 0
    %1104 = vmatpush1.bf16.xpose.msra.mxu0 0
    %1105 = vmatprep.subr.bf16.mxu0 0
    %1106 = vmatpush1.bf16.xpose.msra.mxu0 0
    %1107 = vmatprep.subr.bf16.mxu0 0
    %1108 = vmatpush1.bf16.xpose.msra.mxu0 0
    %1109 = vmatprep.subr.bf16.mxu0 0
    %1110 = vmatpush1.bf16.xpose.msra.mxu0 0
    %1111 = vmatprep.subr.bf16.mxu0 0
    %1112 = vmatpush1.bf16.xpose.msra.mxu0 0
    %1113 = vmatprep.subr.bf16.mxu0 0
    %1114 = vmatpush1.bf16.xpose.msra.mxu0 0
    %1115 = vmatprep.mubr.bf16.mxu0 0
    %1116 = vmatmul.mubr.bf16.gmra.mrb[0].mxu0 %v1075
    %v1117 = vpop.f32.mrb[0].mxu0
    %v1118 = vadd.f32 0.0, %v1117
    %v1119 = vpop.f32.mrb[0].mxu0
    %v1120 = vpop.f32.mrb[0].mxu0
    %v1121 = vpop.f32.mrb[0].mxu0
    %1122 = vdwg.mxu0
    %v1123 = vsel %vm276, %v733, -inf
    %1124 = vmax.xlane.f32.xlu0 %v1123
    %v1125 = vpop.xlane.xlu0 %1124
    %v1126 = vsel %vm276, %v788, -inf
    %1127 = vmax.xlane.f32.xlu0 %v1126
    %v1128 = vpop.xlane.xlu0 %1127
    %v1129 = vsel %vm276, %v843, -inf
    %1130 = vmax.xlane.f32.xlu0 %v1129
    %v1131 = vpop.xlane.xlu0 %1130
    %v1132 = vsel %vm276, %v898, -inf
    %1133 = vmax.xlane.f32.xlu0 %v1132
    %v1134 = vpop.xlane.xlu0 %1133
    %v1135 = vsel %vm276, %v953, -inf
    %1136 = vmax.xlane.f32.xlu0 %v1135
    %v1137 = vpop.xlane.xlu0 %1136
    %v1138 = vsel %vm276, %v1008, -inf
    %1139 = vmax.xlane.f32.xlu0 %v1138
    %v1140 = vpop.xlane.xlu0 %1139
    %v1141 = vsel %vm276, %v1063, -inf
    %1142 = vmax.xlane.f32.xlu0 %v1141
    %v1143 = vpop.xlane.xlu0 %1142
    %v1144 = vsel %vm276, %v1118, -inf
    %1145 = vmax.xlane.f32.xlu0 %v1144
    %v1146 = vpop.xlane.xlu0 %1145
    %v1147 = vsub.f32 %v733, %v1125
    %v1148 = vsub.f32 %v788, %v1128
    %v1149 = vsub.f32 %v843, %v1131
    %v1150 = vsub.f32 %v898, %v1134
    %v1151 = vsub.f32 %v953, %v1137
    %v1152 = vsub.f32 %v1008, %v1140
    %v1153 = vsub.f32 %v1063, %v1143
    %v1154 = vsub.f32 %v1118, %v1146
    %v1155 = vmul.f32 %v1147, 1.442695
    %v1156 = vpow.pop %v1155
    %v1157 = vmul.f32 %v1148, 1.442695
    %v1158 = vpow.pop %v1157
    %v1159 = vmul.f32 %v1149, 1.442695
    %v1160 = vpow.pop %v1159
    %v1161 = vmul.f32 %v1150, 1.442695
    %v1162 = vpow.pop %v1161
    %v1163 = vmul.f32 %v1151, 1.442695
    %v1164 = vpow.pop %v1163
    %v1165 = vmul.f32 %v1152, 1.442695
    %v1166 = vpow.pop %v1165
    %v1167 = vmul.f32 %v1153, 1.442695
    %v1168 = vpow.pop %v1167
    %v1169 = vmul.f32 %v1154, 1.442695
    %v1170 = vpow.pop %v1169
    %v1171 = vpack.c.bf16 %v1156, %v1156
    %v1172 = vpack.c.bf16 %v1158, %v1158
    %v1173 = vpack.c.bf16 %v1160, %v1160
    %v1174 = vpack.c.bf16 %v1162, %v1162
    %v1175 = vpack.c.bf16 %v1164, %v1164
    %v1176 = vpack.c.bf16 %v1166, %v1166
    %v1177 = vpack.c.bf16 %v1168, %v1168
    %v1178 = vpack.c.bf16 %v1170, %v1170
    %v1187 = vunpack.c.l.b16 %v1171
    %v1188 = vunpack.c.l.b16 %v1172
    %v1189 = vunpack.c.l.b16 %v1173
    %v1190 = vunpack.c.l.b16 %v1174
    %v1191 = vunpack.c.l.b16 %v1175
    %v1192 = vunpack.c.l.b16 %v1176
    %v1193 = vunpack.c.l.b16 %v1177
    %v1194 = vunpack.c.l.b16 %v1178
    %v1195 = vpack.c.b16 %v1188, %v1187
    %v1196 = vpack.c.b16 %v1190, %v1189
    %v1197 = vpack.c.b16 %v1192, %v1191
    %v1198 = vpack.c.b16 %v1194, %v1193
    %v1200 = vsel %vm276, %v1195, 0
    %v1203 = vsel %vm276, %v1196, 0
    %v1206 = vsel %vm276, %v1197, 0
    %v1209 = vsel %vm276, %v1198, 0
    %1211 = vmatprep.subr.bf16.mxu0 0
    %1212 = vmatpush1.bf16.msra.mxu0 %v617
    %1213 = vmatprep.subr.bf16.mxu0 0
    %1214 = vmatpush1.bf16.msra.mxu0 %v618
    %1215 = vmatprep.subr.bf16.mxu0 0
    %1216 = vmatpush1.bf16.msra.mxu0 0
    %1217 = vmatprep.subr.bf16.mxu0 0
    %1218 = vmatpush1.bf16.msra.mxu0 0
    %1219 = vmatprep.subr.bf16.mxu0 0
    %1220 = vmatpush1.bf16.msra.mxu0 0
    %1221 = vmatprep.subr.bf16.mxu0 0
    %1222 = vmatpush1.bf16.msra.mxu0 0
    %1223 = vmatprep.subr.bf16.mxu0 0
    %1224 = vmatpush1.bf16.msra.mxu0 0
    %1225 = vmatprep.subr.bf16.mxu0 0
    %1226 = vmatpush1.bf16.msra.mxu0 0
    %1227 = vmatprep.subr.bf16.mxu0 0
    %1228 = vmatpush1.bf16.msra.mxu0 0
    %1229 = vmatprep.subr.bf16.mxu0 0
    %1230 = vmatpush1.bf16.msra.mxu0 0
    %1231 = vmatprep.subr.bf16.mxu0 0
    %1232 = vmatpush1.bf16.msra.mxu0 0
    %1233 = vmatprep.subr.bf16.mxu0 0
    %1234 = vmatpush1.bf16.msra.mxu0 0
    %1235 = vmatprep.subr.bf16.mxu0 0
    %1236 = vmatpush1.bf16.msra.mxu0 0
    %1237 = vmatprep.subr.bf16.mxu0 0
    %1238 = vmatpush1.bf16.msra.mxu0 0
    %1239 = vmatprep.subr.bf16.mxu0 0
    %1240 = vmatpush1.bf16.msra.mxu0 0
    %1241 = vmatprep.subr.bf16.mxu0 0
    %1242 = vmatpush1.bf16.msra.mxu0 0
    %1243 = vmatprep.mubr.bf16.mxu0 0
    %1244 = vmatmul.mubr.bf16.gmra.mrb[0].mxu0 %v1200
    %v1245 = vpop.f32.mrb[0].mxu0
    %v1246 = vadd.f32 0.0, %v1245
    %v1247 = vpop.f32.mrb[0].mxu0
    %v1248 = vpop.f32.mrb[0].mxu0
    %v1249 = vadd.f32 0.0, %v1248
    %v1250 = vpop.f32.mrb[0].mxu0
    %1251 = vmatprep.mubr.bf16.mxu0 0
    %1252 = vmatmul.mubr.bf16.gmra.mrb[0].mxu0 %v1203
    %v1253 = vpop.f32.mrb[0].mxu0
    %v1254 = vadd.f32 0.0, %v1253
    %v1255 = vpop.f32.mrb[0].mxu0
    %v1256 = vpop.f32.mrb[0].mxu0
    %v1257 = vadd.f32 0.0, %v1256
    %v1258 = vpop.f32.mrb[0].mxu0
    %1259 = vmatprep.mubr.bf16.mxu0 0
    %1260 = vmatmul.mubr.bf16.gmra.mrb[0].mxu0 %v1206
    %v1261 = vpop.f32.mrb[0].mxu0
    %v1262 = vadd.f32 0.0, %v1261
    %v1263 = vpop.f32.mrb[0].mxu0
    %v1264 = vpop.f32.mrb[0].mxu0
    %v1265 = vadd.f32 0.0, %v1264
    %v1266 = vpop.f32.mrb[0].mxu0
    %1267 = vmatprep.mubr.bf16.mxu0 0
    %1268 = vmatmul.mubr.bf16.gmra.mrb[0].mxu0 %v1209
    %v1269 = vpop.f32.mrb[0].mxu0
    %v1270 = vadd.f32 0.0, %v1269
    %v1271 = vpop.f32.mrb[0].mxu0
    %v1272 = vpop.f32.mrb[0].mxu0
    %v1273 = vadd.f32 0.0, %v1272
    %v1274 = vpop.f32.mrb[0].mxu0
    %1275 = vdwg.mxu0
    %v1277 = vsel %vm276, %v1171, 0
    %1279 = vmatprep.subr.bf16.mxu0 0
    %1280 = vmatpush1.bf16.msra.mxu0 %v667
    %1281 = vmatprep.subr.bf16.mxu0 0
    %1282 = vmatpush1.bf16.msra.mxu0 %v668
    %1283 = vmatprep.subr.bf16.mxu0 0
    %1284 = vmatpush1.bf16.msra.mxu0 0
    %1285 = vmatprep.subr.bf16.mxu0 0
    %1286 = vmatpush1.bf16.msra.mxu0 0
    %1287 = vmatprep.subr.bf16.mxu0 0
    %1288 = vmatpush1.bf16.msra.mxu0 0
    %1289 = vmatprep.subr.bf16.mxu0 0
    %1290 = vmatpush1.bf16.msra.mxu0 0
    %1291 = vmatprep.subr.bf16.mxu0 0
    %1292 = vmatpush1.bf16.msra.mxu0 0
    %1293 = vmatprep.subr.bf16.mxu0 0
    %1294 = vmatpush1.bf16.msra.mxu0 0
    %1295 = vmatprep.subr.bf16.mxu0 0
    %1296 = vmatpush1.bf16.msra.mxu0 0
    %1297 = vmatprep.subr.bf16.mxu0 0
    %1298 = vmatpush1.bf16.msra.mxu0 0
    %1299 = vmatprep.subr.bf16.mxu0 0
    %1300 = vmatpush1.bf16.msra.mxu0 0
    %1301 = vmatprep.subr.bf16.mxu0 0
    %1302 = vmatpush1.bf16.msra.mxu0 0
    %1303 = vmatprep.subr.bf16.mxu0 0
    %1304 = vmatpush1.bf16.msra.mxu0 0
    %1305 = vmatprep.subr.bf16.mxu0 0
    %1306 = vmatpush1.bf16.msra.mxu0 0
    %1307 = vmatprep.subr.bf16.mxu0 0
    %1308 = vmatpush1.bf16.msra.mxu0 0
    %1309 = vmatprep.subr.bf16.mxu0 0
    %1310 = vmatpush1.bf16.msra.mxu0 0
    %1311 = vmatprep.mubr.bf16.mxu0 0
    %1312 = vmatmul.mubr.bf16.gmra.mrb[0].mxu0 %v1277
    %v1313 = vpop.f32.mrb[0].mxu0
    %v1314 = vadd.f32 0.0, %v1313
    %v1315 = vpop.f32.mrb[0].mxu0
    %v1316 = vpop.f32.mrb[0].mxu0
    %v1317 = vpop.f32.mrb[0].mxu0
    %1318 = vdwg.mxu0
    %v1320 = vsel %vm276, %v1172, 0
    %1322 = vmatprep.subr.bf16.mxu0 0
    %1323 = vmatpush1.bf16.msra.mxu0 %v669
    %1324 = vmatprep.subr.bf16.mxu0 0
    %1325 = vmatpush1.bf16.msra.mxu0 %v670
    %1326 = vmatprep.subr.bf16.mxu0 0
    %1327 = vmatpush1.bf16.msra.mxu0 0
    %1328 = vmatprep.subr.bf16.mxu0 0
    %1329 = vmatpush1.bf16.msra.mxu0 0
    %1330 = vmatprep.subr.bf16.mxu0 0
    %1331 = vmatpush1.bf16.msra.mxu0 0
    %1332 = vmatprep.subr.bf16.mxu0 0
    %1333 = vmatpush1.bf16.msra.mxu0 0
    %1334 = vmatprep.subr.bf16.mxu0 0
    %1335 = vmatpush1.bf16.msra.mxu0 0
    %1336 = vmatprep.subr.bf16.mxu0 0
    %1337 = vmatpush1.bf16.msra.mxu0 0
    %1338 = vmatprep.subr.bf16.mxu0 0
    %1339 = vmatpush1.bf16.msra.mxu0 0
    %1340 = vmatprep.subr.bf16.mxu0 0
    %1341 = vmatpush1.bf16.msra.mxu0 0
    %1342 = vmatprep.subr.bf16.mxu0 0
    %1343 = vmatpush1.bf16.msra.mxu0 0
    %1344 = vmatprep.subr.bf16.mxu0 0
    %1345 = vmatpush1.bf16.msra.mxu0 0
    %1346 = vmatprep.subr.bf16.mxu0 0
    %1347 = vmatpush1.bf16.msra.mxu0 0
    %1348 = vmatprep.subr.bf16.mxu0 0
    %1349 = vmatpush1.bf16.msra.mxu0 0
    %1350 = vmatprep.subr.bf16.mxu0 0
    %1351 = vmatpush1.bf16.msra.mxu0 0
    %1352 = vmatprep.subr.bf16.mxu0 0
    %1353 = vmatpush1.bf16.msra.mxu0 0
    %1354 = vmatprep.mubr.bf16.mxu0 0
    %1355 = vmatmul.mubr.bf16.gmra.mrb[0].mxu0 %v1320
    %v1356 = vpop.f32.mrb[0].mxu0
    %v1357 = vadd.f32 0.0, %v1356
    %v1358 = vpop.f32.mrb[0].mxu0
    %v1359 = vpop.f32.mrb[0].mxu0
    %v1360 = vpop.f32.mrb[0].mxu0
    %1361 = vdwg.mxu0
    %v1363 = vsel %vm276, %v1173, 0
    %1365 = vmatprep.subr.bf16.mxu0 0
    %1366 = vmatpush1.bf16.msra.mxu0 %v671
    %1367 = vmatprep.subr.bf16.mxu0 0
    %1368 = vmatpush1.bf16.msra.mxu0 %v672
    %1369 = vmatprep.subr.bf16.mxu0 0
    %1370 = vmatpush1.bf16.msra.mxu0 0
    %1371 = vmatprep.subr.bf16.mxu0 0
    %1372 = vmatpush1.bf16.msra.mxu0 0
    %1373 = vmatprep.subr.bf16.mxu0 0
    %1374 = vmatpush1.bf16.msra.mxu0 0
    %1375 = vmatprep.subr.bf16.mxu0 0
    %1376 = vmatpush1.bf16.msra.mxu0 0
    %1377 = vmatprep.subr.bf16.mxu0 0
    %1378 = vmatpush1.bf16.msra.mxu0 0
    %1379 = vmatprep.subr.bf16.mxu0 0
    %1380 = vmatpush1.bf16.msra.mxu0 0
    %1381 = vmatprep.subr.bf16.mxu0 0
    %1382 = vmatpush1.bf16.msra.mxu0 0
    %1383 = vmatprep.subr.bf16.mxu0 0
    %1384 = vmatpush1.bf16.msra.mxu0 0
    %1385 = vmatprep.subr.bf16.mxu0 0
    %1386 = vmatpush1.bf16.msra.mxu0 0
    %1387 = vmatprep.subr.bf16.mxu0 0
    %1388 = vmatpush1.bf16.msra.mxu0 0
    %1389 = vmatprep.subr.bf16.mxu0 0
    %1390 = vmatpush1.bf16.msra.mxu0 0
    %1391 = vmatprep.subr.bf16.mxu0 0
    %1392 = vmatpush1.bf16.msra.mxu0 0
    %1393 = vmatprep.subr.bf16.mxu0 0
    %1394 = vmatpush1.bf16.msra.mxu0 0
    %1395 = vmatprep.subr.bf16.mxu0 0
    %1396 = vmatpush1.bf16.msra.mxu0 0
    %1397 = vmatprep.mubr.bf16.mxu0 0
    %1398 = vmatmul.mubr.bf16.gmra.mrb[0].mxu0 %v1363
    %v1399 = vpop.f32.mrb[0].mxu0
    %v1400 = vadd.f32 0.0, %v1399
    %v1401 = vpop.f32.mrb[0].mxu0
    %v1402 = vpop.f32.mrb[0].mxu0
    %v1403 = vpop.f32.mrb[0].mxu0
    %1404 = vdwg.mxu0
    %v1406 = vsel %vm276, %v1174, 0
    %1408 = vmatprep.subr.bf16.mxu0 0
    %1409 = vmatpush1.bf16.msra.mxu0 %v673
    %1410 = vmatprep.subr.bf16.mxu0 0
    %1411 = vmatpush1.bf16.msra.mxu0 %v674
    %1412 = vmatprep.subr.bf16.mxu0 0
    %1413 = vmatpush1.bf16.msra.mxu0 0
    %1414 = vmatprep.subr.bf16.mxu0 0
    %1415 = vmatpush1.bf16.msra.mxu0 0
    %1416 = vmatprep.subr.bf16.mxu0 0
    %1417 = vmatpush1.bf16.msra.mxu0 0
    %1418 = vmatprep.subr.bf16.mxu0 0
    %1419 = vmatpush1.bf16.msra.mxu0 0
    %1420 = vmatprep.subr.bf16.mxu0 0
    %1421 = vmatpush1.bf16.msra.mxu0 0
    %1422 = vmatprep.subr.bf16.mxu0 0
    %1423 = vmatpush1.bf16.msra.mxu0 0
    %1424 = vmatprep.subr.bf16.mxu0 0
    %1425 = vmatpush1.bf16.msra.mxu0 0
    %1426 = vmatprep.subr.bf16.mxu0 0
    %1427 = vmatpush1.bf16.msra.mxu0 0
    %1428 = vmatprep.subr.bf16.mxu0 0
    %1429 = vmatpush1.bf16.msra.mxu0 0
    %1430 = vmatprep.subr.bf16.mxu0 0
    %1431 = vmatpush1.bf16.msra.mxu0 0
    %1432 = vmatprep.subr.bf16.mxu0 0
    %1433 = vmatpush1.bf16.msra.mxu0 0
    %1434 = vmatprep.subr.bf16.mxu0 0
    %1435 = vmatpush1.bf16.msra.mxu0 0
    %1436 = vmatprep.subr.bf16.mxu0 0
    %1437 = vmatpush1.bf16.msra.mxu0 0
    %1438 = vmatprep.subr.bf16.mxu0 0
    %1439 = vmatpush1.bf16.msra.mxu0 0
    %1440 = vmatprep.mubr.bf16.mxu0 0
    %1441 = vmatmul.mubr.bf16.gmra.mrb[0].mxu0 %v1406
    %v1442 = vpop.f32.mrb[0].mxu0
    %v1443 = vadd.f32 0.0, %v1442
    %v1444 = vpop.f32.mrb[0].mxu0
    %v1445 = vpop.f32.mrb[0].mxu0
    %v1446 = vpop.f32.mrb[0].mxu0
    %1447 = vdwg.mxu0
    %v1449 = vsel %vm276, %v1175, 0
    %1451 = vmatprep.subr.bf16.mxu0 0
    %1452 = vmatpush1.bf16.msra.mxu0 %v675
    %1453 = vmatprep.subr.bf16.mxu0 0
    %1454 = vmatpush1.bf16.msra.mxu0 %v676
    %1455 = vmatprep.subr.bf16.mxu0 0
    %1456 = vmatpush1.bf16.msra.mxu0 0
    %1457 = vmatprep.subr.bf16.mxu0 0
    %1458 = vmatpush1.bf16.msra.mxu0 0
    %1459 = vmatprep.subr.bf16.mxu0 0
    %1460 = vmatpush1.bf16.msra.mxu0 0
    %1461 = vmatprep.subr.bf16.mxu0 0
    %1462 = vmatpush1.bf16.msra.mxu0 0
    %1463 = vmatprep.subr.bf16.mxu0 0
    %1464 = vmatpush1.bf16.msra.mxu0 0
    %1465 = vmatprep.subr.bf16.mxu0 0
    %1466 = vmatpush1.bf16.msra.mxu0 0
    %1467 = vmatprep.subr.bf16.mxu0 0
    %1468 = vmatpush1.bf16.msra.mxu0 0
    %1469 = vmatprep.subr.bf16.mxu0 0
    %1470 = vmatpush1.bf16.msra.mxu0 0
    %1471 = vmatprep.subr.bf16.mxu0 0
    %1472 = vmatpush1.bf16.msra.mxu0 0
    %1473 = vmatprep.subr.bf16.mxu0 0
    %1474 = vmatpush1.bf16.msra.mxu0 0
    %1475 = vmatprep.subr.bf16.mxu0 0
    %1476 = vmatpush1.bf16.msra.mxu0 0
    %1477 = vmatprep.subr.bf16.mxu0 0
    %1478 = vmatpush1.bf16.msra.mxu0 0
    %1479 = vmatprep.subr.bf16.mxu0 0
    %1480 = vmatpush1.bf16.msra.mxu0 0
    %1481 = vmatprep.subr.bf16.mxu0 0
    %1482 = vmatpush1.bf16.msra.mxu0 0
    %1483 = vmatprep.mubr.bf16.mxu0 0
    %1484 = vmatmul.mubr.bf16.gmra.mrb[0].mxu0 %v1449
    %v1485 = vpop.f32.mrb[0].mxu0
    %v1486 = vadd.f32 0.0, %v1485
    %v1487 = vpop.f32.mrb[0].mxu0
    %v1488 = vpop.f32.mrb[0].mxu0
    %v1489 = vpop.f32.mrb[0].mxu0
    %1490 = vdwg.mxu0
    %v1492 = vsel %vm276, %v1176, 0
    %1494 = vmatprep.subr.bf16.mxu0 0
    %1495 = vmatpush1.bf16.msra.mxu0 %v677
    %1496 = vmatprep.subr.bf16.mxu0 0
    %1497 = vmatpush1.bf16.msra.mxu0 %v678
    %1498 = vmatprep.subr.bf16.mxu0 0
    %1499 = vmatpush1.bf16.msra.mxu0 0
    %1500 = vmatprep.subr.bf16.mxu0 0
    %1501 = vmatpush1.bf16.msra.mxu0 0
    %1502 = vmatprep.subr.bf16.mxu0 0
    %1503 = vmatpush1.bf16.msra.mxu0 0
    %1504 = vmatprep.subr.bf16.mxu0 0
    %1505 = vmatpush1.bf16.msra.mxu0 0
    %1506 = vmatprep.subr.bf16.mxu0 0
    %1507 = vmatpush1.bf16.msra.mxu0 0
    %1508 = vmatprep.subr.bf16.mxu0 0
    %1509 = vmatpush1.bf16.msra.mxu0 0
    %1510 = vmatprep.subr.bf16.mxu0 0
    %1511 = vmatpush1.bf16.msra.mxu0 0
    %1512 = vmatprep.subr.bf16.mxu0 0
    %1513 = vmatpush1.bf16.msra.mxu0 0
    %1514 = vmatprep.subr.bf16.mxu0 0
    %1515 = vmatpush1.bf16.msra.mxu0 0
    %1516 = vmatprep.subr.bf16.mxu0 0
    %1517 = vmatpush1.bf16.msra.mxu0 0
    %1518 = vmatprep.subr.bf16.mxu0 0
    %1519 = vmatpush1.bf16.msra.mxu0 0
    %1520 = vmatprep.subr.bf16.mxu0 0
    %1521 = vmatpush1.bf16.msra.mxu0 0
    %1522 = vmatprep.subr.bf16.mxu0 0
    %1523 = vmatpush1.bf16.msra.mxu0 0
    %1524 = vmatprep.subr.bf16.mxu0 0
    %1525 = vmatpush1.bf16.msra.mxu0 0
    %1526 = vmatprep.mubr.bf16.mxu0 0
    %1527 = vmatmul.mubr.bf16.gmra.mrb[0].mxu0 %v1492
    %v1528 = vpop.f32.mrb[0].mxu0
    %v1529 = vadd.f32 0.0, %v1528
    %v1530 = vpop.f32.mrb[0].mxu0
    %v1531 = vpop.f32.mrb[0].mxu0
    %v1532 = vpop.f32.mrb[0].mxu0
    %1533 = vdwg.mxu0
    %v1535 = vsel %vm276, %v1177, 0
    %1537 = vmatprep.subr.bf16.mxu0 0
    %1538 = vmatpush1.bf16.msra.mxu0 %v679
    %1539 = vmatprep.subr.bf16.mxu0 0
    %1540 = vmatpush1.bf16.msra.mxu0 %v680
    %1541 = vmatprep.subr.bf16.mxu0 0
    %1542 = vmatpush1.bf16.msra.mxu0 0
    %1543 = vmatprep.subr.bf16.mxu0 0
    %1544 = vmatpush1.bf16.msra.mxu0 0
    %1545 = vmatprep.subr.bf16.mxu0 0
    %1546 = vmatpush1.bf16.msra.mxu0 0
    %1547 = vmatprep.subr.bf16.mxu0 0
    %1548 = vmatpush1.bf16.msra.mxu0 0
    %1549 = vmatprep.subr.bf16.mxu0 0
    %1550 = vmatpush1.bf16.msra.mxu0 0
    %1551 = vmatprep.subr.bf16.mxu0 0
    %1552 = vmatpush1.bf16.msra.mxu0 0
    %1553 = vmatprep.subr.bf16.mxu0 0
    %1554 = vmatpush1.bf16.msra.mxu0 0
    %1555 = vmatprep.subr.bf16.mxu0 0
    %1556 = vmatpush1.bf16.msra.mxu0 0
    %1557 = vmatprep.subr.bf16.mxu0 0
    %1558 = vmatpush1.bf16.msra.mxu0 0
    %1559 = vmatprep.subr.bf16.mxu0 0
    %1560 = vmatpush1.bf16.msra.mxu0 0
    %1561 = vmatprep.subr.bf16.mxu0 0
    %1562 = vmatpush1.bf16.msra.mxu0 0
    %1563 = vmatprep.subr.bf16.mxu0 0
    %1564 = vmatpush1.bf16.msra.mxu0 0
    %1565 = vmatprep.subr.bf16.mxu0 0
    %1566 = vmatpush1.bf16.msra.mxu0 0
    %1567 = vmatprep.subr.bf16.mxu0 0
    %1568 = vmatpush1.bf16.msra.mxu0 0
    %1569 = vmatprep.mubr.bf16.mxu0 0
    %1570 = vmatmul.mubr.bf16.gmra.mrb[0].mxu0 %v1535
    %v1571 = vpop.f32.mrb[0].mxu0
    %v1572 = vadd.f32 0.0, %v1571
    %v1573 = vpop.f32.mrb[0].mxu0
    %v1574 = vpop.f32.mrb[0].mxu0
    %v1575 = vpop.f32.mrb[0].mxu0
    %1576 = vdwg.mxu0
    %v1578 = vsel %vm276, %v1178, 0
    %1580 = vmatprep.subr.bf16.mxu0 0
    %1581 = vmatpush1.bf16.msra.mxu0 %v681
    %1582 = vmatprep.subr.bf16.mxu0 0
    %1583 = vmatpush1.bf16.msra.mxu0 %v682
    %1584 = vmatprep.subr.bf16.mxu0 0
    %1585 = vmatpush1.bf16.msra.mxu0 0
    %1586 = vmatprep.subr.bf16.mxu0 0
    %1587 = vmatpush1.bf16.msra.mxu0 0
    %1588 = vmatprep.subr.bf16.mxu0 0
    %1589 = vmatpush1.bf16.msra.mxu0 0
    %1590 = vmatprep.subr.bf16.mxu0 0
    %1591 = vmatpush1.bf16.msra.mxu0 0
    %1592 = vmatprep.subr.bf16.mxu0 0
    %1593 = vmatpush1.bf16.msra.mxu0 0
    %1594 = vmatprep.subr.bf16.mxu0 0
    %1595 = vmatpush1.bf16.msra.mxu0 0
    %1596 = vmatprep.subr.bf16.mxu0 0
    %1597 = vmatpush1.bf16.msra.mxu0 0
    %1598 = vmatprep.subr.bf16.mxu0 0
    %1599 = vmatpush1.bf16.msra.mxu0 0
    %1600 = vmatprep.subr.bf16.mxu0 0
    %1601 = vmatpush1.bf16.msra.mxu0 0
    %1602 = vmatprep.subr.bf16.mxu0 0
    %1603 = vmatpush1.bf16.msra.mxu0 0
    %1604 = vmatprep.subr.bf16.mxu0 0
    %1605 = vmatpush1.bf16.msra.mxu0 0
    %1606 = vmatprep.subr.bf16.mxu0 0
    %1607 = vmatpush1.bf16.msra.mxu0 0
    %1608 = vmatprep.subr.bf16.mxu0 0
    %1609 = vmatpush1.bf16.msra.mxu0 0
    %1610 = vmatprep.subr.bf16.mxu0 0
    %1611 = vmatpush1.bf16.msra.mxu0 0
    %1612 = vmatprep.mubr.bf16.mxu0 0
    %1613 = vmatmul.mubr.bf16.gmra.mrb[0].mxu0 %v1578
    %v1614 = vpop.f32.mrb[0].mxu0
    %v1615 = vadd.f32 0.0, %v1614
    %v1616 = vpop.f32.mrb[0].mxu0
    %v1617 = vpop.f32.mrb[0].mxu0
    %v1618 = vpop.f32.mrb[0].mxu0
    %1619 = vdwg.mxu0
    %v1620 = vrcp.pop %v1246
    %v1621 = vmul.f32 %v1314, %v1620
    %v1622 = vrcp.pop %v1249
    %v1623 = vmul.f32 %v1357, %v1622
    %v1624 = vrcp.pop %v1254
    %v1625 = vmul.f32 %v1400, %v1624
    %v1626 = vrcp.pop %v1257
    %v1627 = vmul.f32 %v1443, %v1626
    %v1628 = vrcp.pop %v1262
    %v1629 = vmul.f32 %v1486, %v1628
    %v1630 = vrcp.pop %v1265
    %v1631 = vmul.f32 %v1529, %v1630
    %v1632 = vrcp.pop %v1270
    %v1633 = vmul.f32 %v1572, %v1632
    %v1634 = vrcp.pop %v1273
    %v1635 = vmul.f32 %v1615, %v1634
    %v1636 = vpack.c.bf16 %v1623, %v1621
    %v1637 = vpack.c.bf16 %v1627, %v1625
    %v1638 = vpack.c.bf16 %v1631, %v1629
    %v1639 = vpack.c.bf16 %v1635, %v1633
    %v1640 = vld [vmem:[%s4] sm:$0xf]
    %v1641 = vld [vmem:[%s4 + $0x4] sm:$0xf]
    %v1642 = vld [vmem:[%s4 + $0x8] sm:$0xf]
    %v1643 = vld [vmem:[%s4 + $0xc] sm:$0xf]
    %v1644 = vld [vmem:[%s4 + $0x10] sm:$0xf]
    %v1645 = vld [vmem:[%s4 + $0x14] sm:$0xf]
    %v1646 = vld [vmem:[%s4 + $0x18] sm:$0xf]
    %v1647 = vld [vmem:[%s4 + $0x1c] sm:$0xf]
    %v1648 = vld [vmem:[#allocation6] sm:$0x1]
    %v1650 = vlaneseq
    %v1651 = vshrl.u32 %v1650, 7
    %v1652 = vsub.s32 0, %v1651
    %v1653 = vrot.slane %v1648, %v1652
    %v1663 = vunpack.c.l.b16 %v1640
    %v1664 = vunpack.c.l.b16 %v1641
    %v1665 = vunpack.c.l.b16 %v1642
    %v1666 = vunpack.c.l.b16 %v1643
    %v1667 = vunpack.c.l.b16 %v1644
    %v1668 = vunpack.c.l.b16 %v1645
    %v1669 = vunpack.c.l.b16 %v1646
    %v1670 = vunpack.c.l.b16 %v1647
    %v1671 = vpack.c.b16 %v1664, %v1663
    %v1672 = vpack.c.b16 %v1666, %v1665
    %v1673 = vpack.c.b16 %v1668, %v1667
    %v1674 = vpack.c.b16 %v1670, %v1669
    %v1680 = vsel %vm418, %v1636, 0
    %v1683 = vsel %vm418, %v1637, 0
    %v1686 = vsel %vm418, %v1638, 0
    %v1689 = vsel %vm418, %v1639, 0
    %1691 = vmatprep.subr.bf16.mxu0 0
    %1692 = vmatpush1.bf16.msra.mxu0 %v1671
    %1693 = vmatprep.subr.bf16.mxu0 0
    %1694 = vmatpush1.bf16.msra.mxu0 %v1672
    %1695 = vmatprep.subr.bf16.mxu0 0
    %1696 = vmatpush1.bf16.msra.mxu0 %v1673
    %1697 = vmatprep.subr.bf16.mxu0 0
    %1698 = vmatpush1.bf16.msra.mxu0 %v1674
    %1699 = vmatprep.subr.bf16.mxu0 0
    %1700 = vmatpush1.bf16.msra.mxu0 0
    %1701 = vmatprep.subr.bf16.mxu0 0
    %1702 = vmatpush1.bf16.msra.mxu0 0
    %1703 = vmatprep.subr.bf16.mxu0 0
    %1704 = vmatpush1.bf16.msra.mxu0 0
    %1705 = vmatprep.subr.bf16.mxu0 0
    %1706 = vmatpush1.bf16.msra.mxu0 0
    %1707 = vmatprep.subr.bf16.mxu0 0
    %1708 = vmatpush1.bf16.msra.mxu0 0
    %1709 = vmatprep.subr.bf16.mxu0 0
    %1710 = vmatpush1.bf16.msra.mxu0 0
    %1711 = vmatprep.subr.bf16.mxu0 0
    %1712 = vmatpush1.bf16.msra.mxu0 0
    %1713 = vmatprep.subr.bf16.mxu0 0
    %1714 = vmatpush1.bf16.msra.mxu0 0
    %1715 = vmatprep.subr.bf16.mxu0 0
    %1716 = vmatpush1.bf16.msra.mxu0 0
    %1717 = vmatprep.subr.bf16.mxu0 0
    %1718 = vmatpush1.bf16.msra.mxu0 0
    %1719 = vmatprep.subr.bf16.mxu0 0
    %1720 = vmatpush1.bf16.msra.mxu0 0
    %1721 = vmatprep.subr.bf16.mxu0 0
    %1722 = vmatpush1.bf16.msra.mxu0 0
    %1723 = vmatprep.mubr.bf16.mxu0 0
    %1724 = vmatmul.mubr.bf16.gmra.mrb[0].mxu0 %v1680
    %v1725 = vpop.f32.mrb[0].mxu0
    %v1726 = vadd.f32 %v1653, %v1725
    %v1727 = vpop.f32.mrb[0].mxu0
    %v1728 = vpop.f32.mrb[0].mxu0
    %v1729 = vadd.f32 %v1653, %v1728
    %v1730 = vpop.f32.mrb[0].mxu0
    %1731 = vmatprep.mubr.bf16.mxu0 0
    %1732 = vmatmul.mubr.bf16.gmra.mrb[0].mxu0 %v1683
    %v1733 = vpop.f32.mrb[0].mxu0
    %v1734 = vadd.f32 %v1653, %v1733
    %v1735 = vpop.f32.mrb[0].mxu0
    %v1736 = vpop.f32.mrb[0].mxu0
    %v1737 = vadd.f32 %v1653, %v1736
    %v1738 = vpop.f32.mrb[0].mxu0
    %1739 = vmatprep.mubr.bf16.mxu0 0
    %1740 = vmatmul.mubr.bf16.gmra.mrb[0].mxu0 %v1686
    %v1741 = vpop.f32.mrb[0].mxu0
    %v1742 = vadd.f32 %v1653, %v1741
    %v1743 = vpop.f32.mrb[0].mxu0
    %v1744 = vpop.f32.mrb[0].mxu0
    %v1745 = vadd.f32 %v1653, %v1744
    %v1746 = vpop.f32.mrb[0].mxu0
    %1747 = vmatprep.mubr.bf16.mxu0 0
    %1748 = vmatmul.mubr.bf16.gmra.mrb[0].mxu0 %v1689
    %v1749 = vpop.f32.mrb[0].mxu0
    %v1750 = vadd.f32 %v1653, %v1749
    %v1751 = vpop.f32.mrb[0].mxu0
    %v1752 = vpop.f32.mrb[0].mxu0
    %v1753 = vadd.f32 %v1653, %v1752
    %v1754 = vpop.f32.mrb[0].mxu0
    %1755 = vdwg.mxu0
    %v1756 = vadd.f32 %v324, %v1726
    %v1757 = vadd.f32 %v327, %v1729
    %v1758 = vadd.f32 %v332, %v1734
    %v1759 = vadd.f32 %v335, %v1737
    %v1760 = vadd.f32 %v340, %v1742
    %v1761 = vadd.f32 %v343, %v1745
    %v1762 = vadd.f32 %v348, %v1750
    %v1763 = vadd.f32 %v351, %v1753
    %v1764 = vld [vmem:[#allocation7] sm:$0x1]
    %v1765 = vld [vmem:[#allocation9] sm:$0x1]
    %v1766 = vsel %vm418, %v1756, 0.0
    %1767 = vadd.xlane.f32.xlu0 %v1766
    %v1768 = vpop.xlane.xlu0 %1767
    %v1769 = vsel %vm418, %v1757, 0.0
    %1770 = vadd.xlane.f32.xlu0 %v1769
    %v1771 = vpop.xlane.xlu0 %1770
    %v1772 = vsel %vm418, %v1758, 0.0
    %1773 = vadd.xlane.f32.xlu0 %v1772
    %v1774 = vpop.xlane.xlu0 %1773
    %v1775 = vsel %vm418, %v1759, 0.0
    %1776 = vadd.xlane.f32.xlu0 %v1775
    %v1777 = vpop.xlane.xlu0 %1776
    %v1778 = vsel %vm418, %v1760, 0.0
    %1779 = vadd.xlane.f32.xlu0 %v1778
    %v1780 = vpop.xlane.xlu0 %1779
    %v1781 = vsel %vm418, %v1761, 0.0
    %1782 = vadd.xlane.f32.xlu0 %v1781
    %v1783 = vpop.xlane.xlu0 %1782
    %v1784 = vsel %vm418, %v1762, 0.0
    %1785 = vadd.xlane.f32.xlu0 %v1784
    %v1786 = vpop.xlane.xlu0 %1785
    %v1787 = vsel %vm418, %v1763, 0.0
    %1788 = vadd.xlane.f32.xlu0 %v1787
    %v1789 = vpop.xlane.xlu0 %1788
    %v1790 = vrcp.pop 64.0
    %v1791 = vmul.f32 %v1768, %v1790
    %v1792 = vmul.f32 %v1771, %v1790
    %v1793 = vmul.f32 %v1774, %v1790
    %v1794 = vmul.f32 %v1777, %v1790
    %v1795 = vmul.f32 %v1780, %v1790
    %v1796 = vmul.f32 %v1783, %v1790
    %v1797 = vmul.f32 %v1786, %v1790
    %v1798 = vmul.f32 %v1789, %v1790
    %v1799 = vsub.f32 %v1756, %v1791
    %v1800 = vsub.f32 %v1757, %v1792
    %v1801 = vsub.f32 %v1758, %v1793
    %v1802 = vsub.f32 %v1759, %v1794
    %v1803 = vsub.f32 %v1760, %v1795
    %v1804 = vsub.f32 %v1761, %v1796
    %v1805 = vsub.f32 %v1762, %v1797
    %v1806 = vsub.f32 %v1763, %v1798
    %v1807 = vmul.f32 %v1799, %v1799
    %v1808 = vmul.f32 %v1800, %v1800
    %v1809 = vmul.f32 %v1801, %v1801
    %v1810 = vmul.f32 %v1802, %v1802
    %v1811 = vmul.f32 %v1803, %v1803
    %v1812 = vmul.f32 %v1804, %v1804
    %v1813 = vmul.f32 %v1805, %v1805
    %v1814 = vmul.f32 %v1806, %v1806
    %v1815 = vsel %vm418, %v1807, 0.0
    %1816 = vadd.xlane.f32.xlu0 %v1815
    %v1817 = vpop.xlane.xlu0 %1816
    %v1818 = vsel %vm418, %v1808, 0.0
    %1819 = vadd.xlane.f32.xlu0 %v1818
    %v1820 = vpop.xlane.xlu0 %1819
    %v1821 = vsel %vm418, %v1809, 0.0
    %1822 = vadd.xlane.f32.xlu0 %v1821
    %v1823 = vpop.xlane.xlu0 %1822
    %v1824 = vsel %vm418, %v1810, 0.0
    %1825 = vadd.xlane.f32.xlu0 %v1824
    %v1826 = vpop.xlane.xlu0 %1825
    %v1827 = vsel %vm418, %v1811, 0.0
    %1828 = vadd.xlane.f32.xlu0 %v1827
    %v1829 = vpop.xlane.xlu0 %1828
    %v1830 = vsel %vm418, %v1812, 0.0
    %1831 = vadd.xlane.f32.xlu0 %v1830
    %v1832 = vpop.xlane.xlu0 %1831
    %v1833 = vsel %vm418, %v1813, 0.0
    %1834 = vadd.xlane.f32.xlu0 %v1833
    %v1835 = vpop.xlane.xlu0 %1834
    %v1836 = vsel %vm418, %v1814, 0.0
    %1837 = vadd.xlane.f32.xlu0 %v1836
    %v1838 = vpop.xlane.xlu0 %1837
    %v1839 = vmul.f32 %v1817, %v1790
    %v1840 = vmul.f32 %v1820, %v1790
    %v1841 = vmul.f32 %v1823, %v1790
    %v1842 = vmul.f32 %v1826, %v1790
    %v1843 = vmul.f32 %v1829, %v1790
    %v1844 = vmul.f32 %v1832, %v1790
    %v1845 = vmul.f32 %v1835, %v1790
    %v1846 = vmul.f32 %v1838, %v1790
    %v1847 = vadd.f32 %v1839, 1e-05
    %v1848 = vadd.f32 %v1840, 1e-05
    %v1849 = vadd.f32 %v1841, 1e-05
    %v1850 = vadd.f32 %v1842, 1e-05
    %v1851 = vadd.f32 %v1843, 1e-05
    %v1852 = vadd.f32 %v1844, 1e-05
    %v1853 = vadd.f32 %v1845, 1e-05
    %v1854 = vadd.f32 %v1846, 1e-05
    %v1855 = vrsqrt.pop %v1847
    %v1856 = vrsqrt.pop %v1848
    %v1857 = vrsqrt.pop %v1849
    %v1858 = vrsqrt.pop %v1850
    %v1859 = vrsqrt.pop %v1851
    %v1860 = vrsqrt.pop %v1852
    %v1861 = vrsqrt.pop %v1853
    %v1862 = vrsqrt.pop %v1854
    %v1863 = vmul.f32 %v1799, %v1855
    %v1864 = vmul.f32 %v1800, %v1856
    %v1865 = vmul.f32 %v1801, %v1857
    %v1866 = vmul.f32 %v1802, %v1858
    %v1867 = vmul.f32 %v1803, %v1859
    %v1868 = vmul.f32 %v1804, %v1860
    %v1869 = vmul.f32 %v1805, %v1861
    %v1870 = vmul.f32 %v1806, %v1862
    %v1872 = vlaneseq
    %v1873 = vshrl.u32 %v1872, 7
    %v1874 = vsub.s32 0, %v1873
    %v1875 = vrot.slane %v1764, %v1874
    %v1877 = vmul.f32 %v1863, %v1875
    %v1878 = vmul.f32 %v1864, %v1875
    %v1879 = vmul.f32 %v1865, %v1875
    %v1880 = vmul.f32 %v1866, %v1875
    %v1881 = vmul.f32 %v1867, %v1875
    %v1882 = vmul.f32 %v1868, %v1875
    %v1883 = vmul.f32 %v1869, %v1875
    %v1884 = vmul.f32 %v1870, %v1875
    %v1886 = vlaneseq
    %v1887 = vshrl.u32 %v1886, 7
    %v1888 = vsub.s32 0, %v1887
    %v1889 = vrot.slane %v1765, %v1888
    %v1891 = vadd.f32 %v1877, %v1889
    %v1892 = vadd.f32 %v1878, %v1889
    %v1893 = vadd.f32 %v1879, %v1889
    %v1894 = vadd.f32 %v1880, %v1889
    %v1895 = vadd.f32 %v1881, %v1889
    %v1896 = vadd.f32 %v1882, %v1889
    %v1897 = vadd.f32 %v1883, %v1889
    %v1898 = vadd.f32 %v1884, %v1889
    %v1899 = vpack.c.bf16 %v1892, %v1891
    %v1900 = vpack.c.bf16 %v1894, %v1893
    %v1901 = vpack.c.bf16 %v1896, %v1895
    %v1902 = vpack.c.bf16 %v1898, %v1897
    %v1903 = vld [vmem:[%s8] sm:$0xf]
    %v1904 = vld [vmem:[%s8 + $0x4] sm:$0xf]
    %v1905 = vld [vmem:[%s8 + $0x8] sm:$0xf]
    %v1906 = vld [vmem:[%s8 + $0xc] sm:$0xf]
    %v1907 = vld [vmem:[%s8 + $0x10] sm:$0xf]
    %v1908 = vld [vmem:[%s8 + $0x14] sm:$0xf]
    %v1909 = vld [vmem:[%s8 + $0x18] sm:$0xf]
    %v1910 = vld [vmem:[%s8 + $0x1c] sm:$0xf]
    %v1911 = vld [vmem:[#allocation10] sm:$0x1]
    %v1913 = vlaneseq
    %v1914 = vshrl.u32 %v1913, 7
    %v1915 = vsub.s32 0, %v1914
    %v1916 = vrot.slane %v1911, %v1915
    %v1926 = vunpack.c.l.b16 %v1903
    %v1927 = vunpack.c.l.b16 %v1904
    %v1928 = vunpack.c.l.b16 %v1905
    %v1929 = vunpack.c.l.b16 %v1906
    %v1930 = vunpack.c.l.b16 %v1907
    %v1931 = vunpack.c.l.b16 %v1908
    %v1932 = vunpack.c.l.b16 %v1909
    %v1933 = vunpack.c.l.b16 %v1910
    %v1934 = vpack.c.b16 %v1927, %v1926
    %v1935 = vpack.c.b16 %v1929, %v1928
    %v1936 = vpack.c.b16 %v1931, %v1930
    %v1937 = vpack.c.b16 %v1933, %v1932
    %v1943 = vsel %vm418, %v1899, 0
    %v1946 = vsel %vm418, %v1900, 0
    %v1949 = vsel %vm418, %v1901, 0
    %v1952 = vsel %vm418, %v1902, 0
    %1954 = vmatprep.subr.bf16.mxu0 0
    %1955 = vmatpush1.bf16.msra.mxu0 %v1934
    %1956 = vmatprep.subr.bf16.mxu0 0
    %1957 = vmatpush1.bf16.msra.mxu0 %v1935
    %1958 = vmatprep.subr.bf16.mxu0 0
    %1959 = vmatpush1.bf16.msra.mxu0 %v1936
    %1960 = vmatprep.subr.bf16.mxu0 0
    %1961 = vmatpush1.bf16.msra.mxu0 %v1937
    %1962 = vmatprep.subr.bf16.mxu0 0
    %1963 = vmatpush1.bf16.msra.mxu0 0
    %1964 = vmatprep.subr.bf16.mxu0 0
    %1965 = vmatpush1.bf16.msra.mxu0 0
    %1966 = vmatprep.subr.bf16.mxu0 0
    %1967 = vmatpush1.bf16.msra.mxu0 0
    %1968 = vmatprep.subr.bf16.mxu0 0
    %1969 = vmatpush1.bf16.msra.mxu0 0
    %1970 = vmatprep.subr.bf16.mxu0 0
    %1971 = vmatpush1.bf16.msra.mxu0 0
    %1972 = vmatprep.subr.bf16.mxu0 0
    %1973 = vmatpush1.bf16.msra.mxu0 0
    %1974 = vmatprep.subr.bf16.mxu0 0
    %1975 = vmatpush1.bf16.msra.mxu0 0
    %1976 = vmatprep.subr.bf16.mxu0 0
    %1977 = vmatpush1.bf16.msra.mxu0 0
    %1978 = vmatprep.subr.bf16.mxu0 0
    %1979 = vmatpush1.bf16.msra.mxu0 0
    %1980 = vmatprep.subr.bf16.mxu0 0
    %1981 = vmatpush1.bf16.msra.mxu0 0
    %1982 = vmatprep.subr.bf16.mxu0 0
    %1983 = vmatpush1.bf16.msra.mxu0 0
    %1984 = vmatprep.subr.bf16.mxu0 0
    %1985 = vmatpush1.bf16.msra.mxu0 0
    %1986 = vmatprep.mubr.bf16.mxu0 0
    %1987 = vmatmul.mubr.bf16.gmra.mrb[0].mxu0 %v1943
    %v1988 = vpop.f32.mrb[0].mxu0
    %v1989 = vadd.f32 %v1916, %v1988
    %v1990 = vpop.f32.mrb[0].mxu0
    %v1991 = vpop.f32.mrb[0].mxu0
    %v1992 = vadd.f32 %v1916, %v1991
    %v1993 = vpop.f32.mrb[0].mxu0
    %1994 = vmatprep.mubr.bf16.mxu0 0
    %1995 = vmatmul.mubr.bf16.gmra.mrb[0].mxu0 %v1946
    %v1996 = vpop.f32.mrb[0].mxu0
    %v1997 = vadd.f32 %v1916, %v1996
    %v1998 = vpop.f32.mrb[0].mxu0
    %v1999 = vpop.f32.mrb[0].mxu0
    %v2000 = vadd.f32 %v1916, %v1999
    %v2001 = vpop.f32.mrb[0].mxu0
    %2002 = vmatprep.mubr.bf16.mxu0 0
    %2003 = vmatmul.mubr.bf16.gmra.mrb[0].mxu0 %v1949
    %v2004 = vpop.f32.mrb[0].mxu0
    %v2005 = vadd.f32 %v1916, %v2004
    %v2006 = vpop.f32.mrb[0].mxu0
    %v2007 = vpop.f32.mrb[0].mxu0
    %v2008 = vadd.f32 %v1916, %v2007
    %v2009 = vpop.f32.mrb[0].mxu0
    %2010 = vmatprep.mubr.bf16.mxu0 0
    %2011 = vmatmul.mubr.bf16.gmra.mrb[0].mxu0 %v1952
    %v2012 = vpop.f32.mrb[0].mxu0
    %v2013 = vadd.f32 %v1916, %v2012
    %v2014 = vpop.f32.mrb[0].mxu0
    %v2015 = vpop.f32.mrb[0].mxu0
    %v2016 = vadd.f32 %v1916, %v2015
    %v2017 = vpop.f32.mrb[0].mxu0
    %2018 = vdwg.mxu0
    %v2019 = vmax.f32 %v1989, 0.0
    %v2020 = vmax.f32 %v1992, 0.0
    %v2021 = vmax.f32 %v1997, 0.0
    %v2022 = vmax.f32 %v2000, 0.0
    %v2023 = vmax.f32 %v2005, 0.0
    %v2024 = vmax.f32 %v2008, 0.0
    %v2025 = vmax.f32 %v2013, 0.0
    %v2026 = vmax.f32 %v2016, 0.0
    %v2027 = vpack.c.bf16 %v2020, %v2019
    %v2028 = vpack.c.bf16 %v2022, %v2021
    %v2029 = vpack.c.bf16 %v2024, %v2023
    %v2030 = vpack.c.bf16 %v2026, %v2025
    %v2031 = vld [vmem:[%s10] sm:$0xf]
    %v2032 = vld [vmem:[%s10 + $0x4] sm:$0xf]
    %v2033 = vld [vmem:[%s10 + $0x8] sm:$0xf]
    %v2034 = vld [vmem:[%s10 + $0xc] sm:$0xf]
    %v2035 = vld [vmem:[%s10 + $0x10] sm:$0xf]
    %v2036 = vld [vmem:[%s10 + $0x14] sm:$0xf]
    %v2037 = vld [vmem:[%s10 + $0x18] sm:$0xf]
    %v2038 = vld [vmem:[%s10 + $0x1c] sm:$0xf]
    %v2039 = vld [vmem:[%s10 + $0x20] sm:$0xf]
    %v2040 = vld [vmem:[%s10 + $0x24] sm:$0xf]
    %v2041 = vld [vmem:[%s10 + $0x28] sm:$0xf]
    %v2042 = vld [vmem:[%s10 + $0x2c] sm:$0xf]
    %v2043 = vld [vmem:[%s10 + $0x30] sm:$0xf]
    %v2044 = vld [vmem:[%s10 + $0x34] sm:$0xf]
    %v2045 = vld [vmem:[%s10 + $0x38] sm:$0xf]
    %v2046 = vld [vmem:[%s10 + $0x3c] sm:$0xf]
    %v2047 = vld [vmem:[#allocation12] sm:$0x1]
    %v2049 = vlaneseq
    %v2050 = vshrl.u32 %v2049, 7
    %v2051 = vsub.s32 0, %v2050
    %v2052 = vrot.slane %v2047, %v2051
    %v2070 = vunpack.c.l.b16 %v2031
    %v2071 = vunpack.c.l.b16 %v2032
    %v2072 = vunpack.c.l.b16 %v2033
    %v2073 = vunpack.c.l.b16 %v2034
    %v2074 = vunpack.c.l.b16 %v2035
    %v2075 = vunpack.c.l.b16 %v2036
    %v2076 = vunpack.c.l.b16 %v2037
    %v2077 = vunpack.c.l.b16 %v2038
    %v2078 = vunpack.c.l.b16 %v2039
    %v2079 = vunpack.c.l.b16 %v2040
    %v2080 = vunpack.c.l.b16 %v2041
    %v2081 = vunpack.c.l.b16 %v2042
    %v2082 = vunpack.c.l.b16 %v2043
    %v2083 = vunpack.c.l.b16 %v2044
    %v2084 = vunpack.c.l.b16 %v2045
    %v2085 = vunpack.c.l.b16 %v2046
    %v2086 = vpack.c.b16 %v2071, %v2070
    %v2087 = vpack.c.b16 %v2073, %v2072
    %v2088 = vpack.c.b16 %v2075, %v2074
    %v2089 = vpack.c.b16 %v2077, %v2076
    %v2090 = vpack.c.b16 %v2079, %v2078
    %v2091 = vpack.c.b16 %v2081, %v2080
    %v2092 = vpack.c.b16 %v2083, %v2082
    %v2093 = vpack.c.b16 %v2085, %v2084
    %2102 = vmatprep.subr.bf16.mxu0 0
    %2103 = vmatpush1.bf16.msra.mxu0 %v2086
    %2104 = vmatprep.subr.bf16.mxu0 0
    %2105 = vmatpush1.bf16.msra.mxu0 %v2087
    %2106 = vmatprep.subr.bf16.mxu0 0
    %2107 = vmatpush1.bf16.msra.mxu0 %v2088
    %2108 = vmatprep.subr.bf16.mxu0 0
    %2109 = vmatpush1.bf16.msra.mxu0 %v2089
    %2110 = vmatprep.subr.bf16.mxu0 0
    %2111 = vmatpush1.bf16.msra.mxu0 %v2090
    %2112 = vmatprep.subr.bf16.mxu0 0
    %2113 = vmatpush1.bf16.msra.mxu0 %v2091
    %2114 = vmatprep.subr.bf16.mxu0 0
    %2115 = vmatpush1.bf16.msra.mxu0 %v2092
    %2116 = vmatprep.subr.bf16.mxu0 0
    %2117 = vmatpush1.bf16.msra.mxu0 %v2093
    %2118 = vmatprep.subr.bf16.mxu0 0
    %2119 = vmatpush1.bf16.msra.mxu0 0
    %2120 = vmatprep.subr.bf16.mxu0 0
    %2121 = vmatpush1.bf16.msra.mxu0 0
    %2122 = vmatprep.subr.bf16.mxu0 0
    %2123 = vmatpush1.bf16.msra.mxu0 0
    %2124 = vmatprep.subr.bf16.mxu0 0
    %2125 = vmatpush1.bf16.msra.mxu0 0
    %2126 = vmatprep.subr.bf16.mxu0 0
    %2127 = vmatpush1.bf16.msra.mxu0 0
    %2128 = vmatprep.subr.bf16.mxu0 0
    %2129 = vmatpush1.bf16.msra.mxu0 0
    %2130 = vmatprep.subr.bf16.mxu0 0
    %2131 = vmatpush1.bf16.msra.mxu0 0
    %2132 = vmatprep.subr.bf16.mxu0 0
    %2133 = vmatpush1.bf16.msra.mxu0 0
    %2134 = vmatprep.mubr.bf16.mxu0 0
    %2135 = vmatmul.mubr.bf16.gmra.mrb[0].mxu0 %v2027
    %v2136 = vpop.f32.mrb[0].mxu0
    %v2137 = vadd.f32 %v2052, %v2136
    %v2138 = vpop.f32.mrb[0].mxu0
    %v2139 = vpop.f32.mrb[0].mxu0
    %v2140 = vadd.f32 %v2052, %v2139
    %v2141 = vpop.f32.mrb[0].mxu0
    %2142 = vmatprep.mubr.bf16.mxu0 0
    %2143 = vmatmul.mubr.bf16.gmra.mrb[0].mxu0 %v2028
    %v2144 = vpop.f32.mrb[0].mxu0
    %v2145 = vadd.f32 %v2052, %v2144
    %v2146 = vpop.f32.mrb[0].mxu0
    %v2147 = vpop.f32.mrb[0].mxu0
    %v2148 = vadd.f32 %v2052, %v2147
    %v2149 = vpop.f32.mrb[0].mxu0
    %2150 = vmatprep.mubr.bf16.mxu0 0
    %2151 = vmatmul.mubr.bf16.gmra.mrb[0].mxu0 %v2029
    %v2152 = vpop.f32.mrb[0].mxu0
    %v2153 = vadd.f32 %v2052, %v2152
    %v2154 = vpop.f32.mrb[0].mxu0
    %v2155 = vpop.f32.mrb[0].mxu0
    %v2156 = vadd.f32 %v2052, %v2155
    %v2157 = vpop.f32.mrb[0].mxu0
    %2158 = vmatprep.mubr.bf16.mxu0 0
    %2159 = vmatmul.mubr.bf16.gmra.mrb[0].mxu0 %v2030
    %v2160 = vpop.f32.mrb[0].mxu0
    %v2161 = vadd.f32 %v2052, %v2160
    %v2162 = vpop.f32.mrb[0].mxu0
    %v2163 = vpop.f32.mrb[0].mxu0
    %v2164 = vadd.f32 %v2052, %v2163
    %v2165 = vpop.f32.mrb[0].mxu0
    %2166 = vdwg.mxu0
    %v2167 = vadd.f32 %v1891, %v2137
    %v2168 = vadd.f32 %v1892, %v2140
    %v2169 = vadd.f32 %v1893, %v2145
    %v2170 = vadd.f32 %v1894, %v2148
    %v2171 = vadd.f32 %v1895, %v2153
    %v2172 = vadd.f32 %v1896, %v2156
    %v2173 = vadd.f32 %v1897, %v2161
    %v2174 = vadd.f32 %v1898, %v2164
    %v2175 = vld [vmem:[#allocation13] sm:$0x1]
    %v2176 = vld [vmem:[#allocation15] sm:$0x1]
    %v2177 = vsel %vm418, %v2167, 0.0
    %2178 = vadd.xlane.f32.xlu0 %v2177
    %v2179 = vpop.xlane.xlu0 %2178
    %v2180 = vsel %vm418, %v2168, 0.0
    %2181 = vadd.xlane.f32.xlu0 %v2180
    %v2182 = vpop.xlane.xlu0 %2181
    %v2183 = vsel %vm418, %v2169, 0.0
    %2184 = vadd.xlane.f32.xlu0 %v2183
    %v2185 = vpop.xlane.xlu0 %2184
    %v2186 = vsel %vm418, %v2170, 0.0
    %2187 = vadd.xlane.f32.xlu0 %v2186
    %v2188 = vpop.xlane.xlu0 %2187
    %v2189 = vsel %vm418, %v2171, 0.0
    %2190 = vadd.xlane.f32.xlu0 %v2189
    %v2191 = vpop.xlane.xlu0 %2190
    %v2192 = vsel %vm418, %v2172, 0.0
    %2193 = vadd.xlane.f32.xlu0 %v2192
    %v2194 = vpop.xlane.xlu0 %2193
    %v2195 = vsel %vm418, %v2173, 0.0
    %2196 = vadd.xlane.f32.xlu0 %v2195
    %v2197 = vpop.xlane.xlu0 %2196
    %v2198 = vsel %vm418, %v2174, 0.0
    %2199 = vadd.xlane.f32.xlu0 %v2198
    %v2200 = vpop.xlane.xlu0 %2199
    %v2201 = vmul.f32 %v2179, %v1790
    %v2202 = vmul.f32 %v2182, %v1790
    %v2203 = vmul.f32 %v2185, %v1790
    %v2204 = vmul.f32 %v2188, %v1790
    %v2205 = vmul.f32 %v2191, %v1790
    %v2206 = vmul.f32 %v2194, %v1790
    %v2207 = vmul.f32 %v2197, %v1790
    %v2208 = vmul.f32 %v2200, %v1790
    %v2209 = vsub.f32 %v2167, %v2201
    %v2210 = vsub.f32 %v2168, %v2202
    %v2211 = vsub.f32 %v2169, %v2203
    %v2212 = vsub.f32 %v2170, %v2204
    %v2213 = vsub.f32 %v2171, %v2205
    %v2214 = vsub.f32 %v2172, %v2206
    %v2215 = vsub.f32 %v2173, %v2207
    %v2216 = vsub.f32 %v2174, %v2208
    %v2217 = vmul.f32 %v2209, %v2209
    %v2218 = vmul.f32 %v2210, %v2210
    %v2219 = vmul.f32 %v2211, %v2211
    %v2220 = vmul.f32 %v2212, %v2212
    %v2221 = vmul.f32 %v2213, %v2213
    %v2222 = vmul.f32 %v2214, %v2214
    %v2223 = vmul.f32 %v2215, %v2215
    %v2224 = vmul.f32 %v2216, %v2216
    %v2225 = vsel %vm418, %v2217, 0.0
    %2226 = vadd.xlane.f32.xlu0 %v2225
    %v2227 = vpop.xlane.xlu0 %2226
    %v2228 = vsel %vm418, %v2218, 0.0
    %2229 = vadd.xlane.f32.xlu0 %v2228
    %v2230 = vpop.xlane.xlu0 %2229
    %v2231 = vsel %vm418, %v2219, 0.0
    %2232 = vadd.xlane.f32.xlu0 %v2231
    %v2233 = vpop.xlane.xlu0 %2232
    %v2234 = vsel %vm418, %v2220, 0.0
    %2235 = vadd.xlane.f32.xlu0 %v2234
    %v2236 = vpop.xlane.xlu0 %2235
    %v2237 = vsel %vm418, %v2221, 0.0
    %2238 = vadd.xlane.f32.xlu0 %v2237
    %v2239 = vpop.xlane.xlu0 %2238
    %v2240 = vsel %vm418, %v2222, 0.0
    %2241 = vadd.xlane.f32.xlu0 %v2240
    %v2242 = vpop.xlane.xlu0 %2241
    %v2243 = vsel %vm418, %v2223, 0.0
    %2244 = vadd.xlane.f32.xlu0 %v2243
    %v2245 = vpop.xlane.xlu0 %2244
    %v2246 = vsel %vm418, %v2224, 0.0
    %2247 = vadd.xlane.f32.xlu0 %v2246
    %v2248 = vpop.xlane.xlu0 %2247
    %v2249 = vmul.f32 %v2227, %v1790
    %v2250 = vmul.f32 %v2230, %v1790
    %v2251 = vmul.f32 %v2233, %v1790
    %v2252 = vmul.f32 %v2236, %v1790
    %v2253 = vmul.f32 %v2239, %v1790
    %v2254 = vmul.f32 %v2242, %v1790
    %v2255 = vmul.f32 %v2245, %v1790
    %v2256 = vmul.f32 %v2248, %v1790
    %v2257 = vadd.f32 %v2249, 1e-05
    %v2258 = vadd.f32 %v2250, 1e-05
    %v2259 = vadd.f32 %v2251, 1e-05
    %v2260 = vadd.f32 %v2252, 1e-05
    %v2261 = vadd.f32 %v2253, 1e-05
    %v2262 = vadd.f32 %v2254, 1e-05
    %v2263 = vadd.f32 %v2255, 1e-05
    %v2264 = vadd.f32 %v2256, 1e-05
    %v2265 = vrsqrt.pop %v2257
    %v2266 = vrsqrt.pop %v2258
    %v2267 = vrsqrt.pop %v2259
    %v2268 = vrsqrt.pop %v2260
    %v2269 = vrsqrt.pop %v2261
    %v2270 = vrsqrt.pop %v2262
    %v2271 = vrsqrt.pop %v2263
    %v2272 = vrsqrt.pop %v2264
    %v2273 = vmul.f32 %v2209, %v2265
    %v2274 = vmul.f32 %v2210, %v2266
    %v2275 = vmul.f32 %v2211, %v2267
    %v2276 = vmul.f32 %v2212, %v2268
    %v2277 = vmul.f32 %v2213, %v2269
    %v2278 = vmul.f32 %v2214, %v2270
    %v2279 = vmul.f32 %v2215, %v2271
    %v2280 = vmul.f32 %v2216, %v2272
    %v2282 = vlaneseq
    %v2283 = vshrl.u32 %v2282, 7
    %v2284 = vsub.s32 0, %v2283
    %v2285 = vrot.slane %v2175, %v2284
    %v2287 = vmul.f32 %v2273, %v2285
    %v2288 = vmul.f32 %v2274, %v2285
    %v2289 = vmul.f32 %v2275, %v2285
    %v2290 = vmul.f32 %v2276, %v2285
    %v2291 = vmul.f32 %v2277, %v2285
    %v2292 = vmul.f32 %v2278, %v2285
    %v2293 = vmul.f32 %v2279, %v2285
    %v2294 = vmul.f32 %v2280, %v2285
    %v2296 = vlaneseq
    %v2297 = vshrl.u32 %v2296, 7
    %v2298 = vsub.s32 0, %v2297
    %v2299 = vrot.slane %v2176, %v2298
    %v2301 = vadd.f32 %v2287, %v2299
    %v2302 = vadd.f32 %v2288, %v2299
    %v2303 = vadd.f32 %v2289, %v2299
    %v2304 = vadd.f32 %v2290, %v2299
    %v2305 = vadd.f32 %v2291, %v2299
    %v2306 = vadd.f32 %v2292, %v2299
    %v2307 = vadd.f32 %v2293, %v2299
    %v2308 = vadd.f32 %v2294, %v2299
    %v2309 = vpack.c.bf16 %v2302, %v2301
    %v2310 = vpack.c.bf16 %v2304, %v2303
    %v2311 = vpack.c.bf16 %v2306, %v2305
    %v2312 = vpack.c.bf16 %v2308, %v2307
    %s2313 = scalar_lea.vmem %s2, 64
    %v2314 = vld [vmem:[%s2313] sm:$0xff]
    %v2315 = vld [vmem:[%s2313 + $0x8] sm:$0xff]
    %v2316 = vld [vmem:[%s2313 + $0x10] sm:$0xff]
    %v2317 = vld [vmem:[%s2313 + $0x18] sm:$0xff]
    %v2318 = vld [vmem:[%s2313 + $0x20] sm:$0xff]
    %v2319 = vld [vmem:[%s2313 + $0x28] sm:$0xff]
    %v2320 = vld [vmem:[%s2313 + $0x30] sm:$0xff]
    %v2321 = vld [vmem:[%s2313 + $0x38] sm:$0xff]
    %s2322 = scalar_lea.vmem [#allocation4], 2
    %v2323 = vld [vmem:[%s2322] sm:$0x3]
    %v2325 = vlaneseq
    %v2326 = vshrl.u32 %v2325, 7
    %v2327 = vsub.s32 0, %v2326
    %v2328 = vrot.slane %v2323, %v2327
    %v2329 = vlaneseq
    %v2330 = vshrl.u32 %v2329, 7
    %v2331 = vsub.s32 1, %v2330
    %v2332 = vrot.slane %v2323, %v2331
    %v2343 = vunpack.c.l.b16 %v2314
    %v2344 = vunpack.c.h.b16 %v2314
    %v2345 = vunpack.c.l.b16 %v2315
    %v2346 = vunpack.c.h.b16 %v2315
    %v2347 = vunpack.c.l.b16 %v2316
    %v2348 = vunpack.c.h.b16 %v2316
    %v2349 = vunpack.c.l.b16 %v2317
    %v2350 = vunpack.c.h.b16 %v2317
    %v2351 = vunpack.c.l.b16 %v2318
    %v2352 = vunpack.c.h.b16 %v2318
    %v2353 = vunpack.c.l.b16 %v2319
    %v2354 = vunpack.c.h.b16 %v2319
    %v2355 = vunpack.c.l.b16 %v2320
    %v2356 = vunpack.c.h.b16 %v2320
    %v2357 = vunpack.c.l.b16 %v2321
    %v2358 = vunpack.c.h.b16 %v2321
    %v2359 = vpack.c.b16 %v2345, %v2343
    %v2360 = vpack.c.b16 %v2346, %v2344
    %v2361 = vpack.c.b16 %v2349, %v2347
    %v2362 = vpack.c.b16 %v2350, %v2348
    %v2363 = vpack.c.b16 %v2353, %v2351
    %v2364 = vpack.c.b16 %v2354, %v2352
    %v2365 = vpack.c.b16 %v2357, %v2355
    %v2366 = vpack.c.b16 %v2358, %v2356
    %v2376 = vsel %vm418, %v2309, 0
    %v2379 = vsel %vm418, %v2310, 0
    %v2382 = vsel %vm418, %v2311, 0
    %v2385 = vsel %vm418, %v2312, 0
    %2387 = vmatprep.subr.bf16.mxu0 %v2360
    %2388 = vmatpush1.bf16.msra.mxu0 %v2359
    %2389 = vmatprep.subr.bf16.mxu0 %v2362
    %2390 = vmatpush1.bf16.msra.mxu0 %v2361
    %2391 = vmatprep.subr.bf16.mxu0 %v2364
    %2392 = vmatpush1.bf16.msra.mxu0 %v2363
    %2393 = vmatprep.subr.bf16.mxu0 %v2366
    %2394 = vmatpush1.bf16.msra.mxu0 %v2365
    %2395 = vmatprep.subr.bf16.mxu0 0
    %2396 = vmatpush1.bf16.msra.mxu0 0
    %2397 = vmatprep.subr.bf16.mxu0 0
    %2398 = vmatpush1.bf16.msra.mxu0 0
    %2399 = vmatprep.subr.bf16.mxu0 0
    %2400 = vmatpush1.bf16.msra.mxu0 0
    %2401 = vmatprep.subr.bf16.mxu0 0
    %2402 = vmatpush1.bf16.msra.mxu0 0
    %2403 = vmatprep.subr.bf16.mxu0 0
    %2404 = vmatpush1.bf16.msra.mxu0 0
    %2405 = vmatprep.subr.bf16.mxu0 0
    %2406 = vmatpush1.bf16.msra.mxu0 0
    %2407 = vmatprep.subr.bf16.mxu0 0
    %2408 = vmatpush1.bf16.msra.mxu0 0
    %2409 = vmatprep.subr.bf16.mxu0 0
    %2410 = vmatpush1.bf16.msra.mxu0 0
    %2411 = vmatprep.subr.bf16.mxu0 0
    %2412 = vmatpush1.bf16.msra.mxu0 0
    %2413 = vmatprep.subr.bf16.mxu0 0
    %2414 = vmatpush1.bf16.msra.mxu0 0
    %2415 = vmatprep.subr.bf16.mxu0 0
    %2416 = vmatpush1.bf16.msra.mxu0 0
    %2417 = vmatprep.subr.bf16.mxu0 0
    %2418 = vmatpush1.bf16.msra.mxu0 0
    %2419 = vmatprep.mubr.bf16.mxu0 0
    %2420 = vmatmul.mubr.bf16.gmra.mrb[0].mxu0 %v2376
    %v2421 = vpop.f32.mrb[0].mxu0
    %v2422 = vadd.f32 %v2328, %v2421
    %v2423 = vpop.f32.mrb[0].mxu0
    %v2424 = vadd.f32 %v2332, %v2423
    %v2425 = vpop.f32.mrb[0].mxu0
    %v2426 = vadd.f32 %v2328, %v2425
    %v2427 = vpop.f32.mrb[0].mxu0
    %v2428 = vadd.f32 %v2332, %v2427
    %2429 = vmatprep.mubr.bf16.mxu0 0
    %2430 = vmatmul.mubr.bf16.gmra.mrb[0].mxu0 %v2379
    %v2431 = vpop.f32.mrb[0].mxu0
    %v2432 = vadd.f32 %v2328, %v2431
    %v2433 = vpop.f32.mrb[0].mxu0
    %v2434 = vadd.f32 %v2332, %v2433
    %v2435 = vpop.f32.mrb[0].mxu0
    %v2436 = vadd.f32 %v2328, %v2435
    %v2437 = vpop.f32.mrb[0].mxu0
    %v2438 = vadd.f32 %v2332, %v2437
    %2439 = vmatprep.mubr.bf16.mxu0 0
    %2440 = vmatmul.mubr.bf16.gmra.mrb[0].mxu0 %v2382
    %v2441 = vpop.f32.mrb[0].mxu0
    %v2442 = vadd.f32 %v2328, %v2441
    %v2443 = vpop.f32.mrb[0].mxu0
    %v2444 = vadd.f32 %v2332, %v2443
    %v2445 = vpop.f32.mrb[0].mxu0
    %v2446 = vadd.f32 %v2328, %v2445
    %v2447 = vpop.f32.mrb[0].mxu0
    %v2448 = vadd.f32 %v2332, %v2447
    %2449 = vmatprep.mubr.bf16.mxu0 0
    %2450 = vmatmul.mubr.bf16.gmra.mrb[0].mxu0 %v2385
    %v2451 = vpop.f32.mrb[0].mxu0
    %v2452 = vadd.f32 %v2328, %v2451
    %v2453 = vpop.f32.mrb[0].mxu0
    %v2454 = vadd.f32 %v2332, %v2453
    %v2455 = vpop.f32.mrb[0].mxu0
    %v2456 = vadd.f32 %v2328, %v2455
    %v2457 = vpop.f32.mrb[0].mxu0
    %v2458 = vadd.f32 %v2332, %v2457
    %2459 = vdwg.mxu0
    %v2460 = vmul.f32 %v2422, 0.25
    %v2461 = vmul.f32 %v2426, 0.25
    %v2462 = vmul.f32 %v2432, 0.25
    %v2463 = vmul.f32 %v2436, 0.25
    %v2464 = vmul.f32 %v2442, 0.25
    %v2465 = vmul.f32 %v2446, 0.25
    %v2466 = vmul.f32 %v2452, 0.25
    %v2467 = vmul.f32 %v2456, 0.25
    %v2468 = vpack.c.bf16 %v2461, %v2460
    %v2469 = vpack.c.bf16 %v2463, %v2462
    %v2470 = vpack.c.bf16 %v2465, %v2464
    %v2471 = vpack.c.bf16 %v2467, %v2466
    %v2472 = vpack.c.bf16 %v2426, %v2422
    %v2473 = vpack.c.bf16 %v2436, %v2432
    %v2474 = vpack.c.bf16 %v2446, %v2442
    %v2475 = vpack.c.bf16 %v2456, %v2452
    %v2476 = vpack.c.bf16 %v2428, %v2424
    %v2477 = vpack.c.bf16 %v2438, %v2434
    %v2478 = vpack.c.bf16 %v2448, %v2444
    %v2479 = vpack.c.bf16 %v2458, %v2454
    %v2484 = vunpack.c.l.b16 %v2468
    %v2485 = vunpack.c.h.b16 %v2468
    %v2486 = vunpack.c.l.b16 %v2469
    %v2487 = vunpack.c.h.b16 %v2469
    %v2488 = vunpack.c.l.b16 %v2470
    %v2489 = vunpack.c.h.b16 %v2470
    %v2490 = vunpack.c.l.b16 %v2471
    %v2491 = vunpack.c.h.b16 %v2471
    %v2492 = vpack.c.b16 %v2484, %v2484
    %v2493 = vpack.c.b16 %v2485, %v2485
    %v2494 = vpack.c.b16 %v2486, %v2486
    %v2495 = vpack.c.b16 %v2487, %v2487
    %v2496 = vpack.c.b16 %v2488, %v2488
    %v2497 = vpack.c.b16 %v2489, %v2489
    %v2498 = vpack.c.b16 %v2490, %v2490
    %v2499 = vpack.c.b16 %v2491, %v2491
    %v2504 = vunpack.c.l.b16 %v2472
    %v2505 = vunpack.c.h.b16 %v2472
    %v2506 = vunpack.c.l.b16 %v2473
    %v2507 = vunpack.c.h.b16 %v2473
    %v2508 = vunpack.c.l.b16 %v2474
    %v2509 = vunpack.c.h.b16 %v2474
    %v2510 = vunpack.c.l.b16 %v2475
    %v2511 = vunpack.c.h.b16 %v2475
    %v2512 = vpack.c.b16 %v2504, %v2504
    %v2513 = vpack.c.b16 %v2505, %v2505
    %v2514 = vpack.c.b16 %v2506, %v2506
    %v2515 = vpack.c.b16 %v2507, %v2507
    %v2516 = vpack.c.b16 %v2508, %v2508
    %v2517 = vpack.c.b16 %v2509, %v2509
    %v2518 = vpack.c.b16 %v2510, %v2510
    %v2519 = vpack.c.b16 %v2511, %v2511
    %v2524 = vunpack.c.l.b16 %v2476
    %v2525 = vunpack.c.h.b16 %v2476
    %v2526 = vunpack.c.l.b16 %v2477
    %v2527 = vunpack.c.h.b16 %v2477
    %v2528 = vunpack.c.l.b16 %v2478
    %v2529 = vunpack.c.h.b16 %v2478
    %v2530 = vunpack.c.l.b16 %v2479
    %v2531 = vunpack.c.h.b16 %v2479
    %v2532 = vpack.c.b16 %v2524, %v2524
    %v2533 = vpack.c.b16 %v2525, %v2525
    %v2534 = vpack.c.b16 %v2526, %v2526
    %v2535 = vpack.c.b16 %v2527, %v2527
    %v2536 = vpack.c.b16 %v2528, %v2528
    %v2537 = vpack.c.b16 %v2529, %v2529
    %v2538 = vpack.c.b16 %v2530, %v2530
    %v2539 = vpack.c.b16 %v2531, %v2531
    %v2541 = vsel %vm584, %v2512, %v2512
    %v2544 = vsel %vm584, %v2513, %v2513
    %v2547 = vsel %vm584, %v2514, %v2514
    %v2550 = vsel %vm584, %v2515, %v2515
    %v2553 = vsel %vm584, %v2516, %v2516
    %v2556 = vsel %vm584, %v2517, %v2517
    %v2559 = vsel %vm584, %v2518, %v2518
    %v2562 = vsel %vm584, %v2519, %v2519
    %v2564 = vmul.bf16 %v2541, %v620
    %v2565 = vmul.bf16 %v2541, %v622
    %v2566 = vmul.bf16 %v2544, %v620
    %v2567 = vmul.bf16 %v2544, %v622
    %v2568 = vmul.bf16 %v2547, %v620
    %v2569 = vmul.bf16 %v2547, %v622
    %v2570 = vmul.bf16 %v2550, %v620
    %v2571 = vmul.bf16 %v2550, %v622
    %v2572 = vmul.bf16 %v2553, %v620
    %v2573 = vmul.bf16 %v2553, %v622
    %v2574 = vmul.bf16 %v2556, %v620
    %v2575 = vmul.bf16 %v2556, %v622
    %v2576 = vmul.bf16 %v2559, %v620
    %v2577 = vmul.bf16 %v2559, %v622
    %v2578 = vmul.bf16 %v2562, %v620
    %v2579 = vmul.bf16 %v2562, %v622
    %v2581 = vsel %vm584, %v2532, %v2532
    %v2584 = vsel %vm584, %v2533, %v2533
    %v2587 = vsel %vm584, %v2534, %v2534
    %v2590 = vsel %vm584, %v2535, %v2535
    %v2593 = vsel %vm584, %v2536, %v2536
    %v2596 = vsel %vm584, %v2537, %v2537
    %v2599 = vsel %vm584, %v2538, %v2538
    %v2602 = vsel %vm584, %v2539, %v2539
    %v2604 = vmul.bf16 %v2581, %v617
    %v2605 = vmul.bf16 %v2581, %v618
    %v2606 = vmul.bf16 %v2584, %v617
    %v2607 = vmul.bf16 %v2584, %v618
    %v2608 = vmul.bf16 %v2587, %v617
    %v2609 = vmul.bf16 %v2587, %v618
    %v2610 = vmul.bf16 %v2590, %v617
    %v2611 = vmul.bf16 %v2590, %v618
    %v2612 = vmul.bf16 %v2593, %v617
    %v2613 = vmul.bf16 %v2593, %v618
    %v2614 = vmul.bf16 %v2596, %v617
    %v2615 = vmul.bf16 %v2596, %v618
    %v2616 = vmul.bf16 %v2599, %v617
    %v2617 = vmul.bf16 %v2599, %v618
    %v2618 = vmul.bf16 %v2602, %v617
    %v2619 = vmul.bf16 %v2602, %v618
    %2622 = vrot.lane.b32.xlu0 %v2564, 64
    %v2623 = vpop.permute.xlu0 %2622
    %2624 = vrot.lane.b32.xlu0 %v2565, 64
    %v2625 = vpop.permute.xlu0 %2624
    %v2627 = vsel %vm418, %v2492, 0
    %v2630 = vsel %vm418, %v2623, 0
    %v2633 = vsel %vm418, %v2625, 0
    %2635 = vmatprep.subr.bf16.mxu0 0
    %2636 = vmatpush1.bf16.xpose.msra.mxu0 %v2630
    %2637 = vmatprep.subr.bf16.mxu0 0
    %2638 = vmatpush1.bf16.xpose.msra.mxu0 %v2633
    %2639 = vmatprep.subr.bf16.mxu0 0
    %2640 = vmatpush1.bf16.xpose.msra.mxu0 0
    %2641 = vmatprep.subr.bf16.mxu0 0
    %2642 = vmatpush1.bf16.xpose.msra.mxu0 0
    %2643 = vmatprep.subr.bf16.mxu0 0
    %2644 = vmatpush1.bf16.xpose.msra.mxu0 0
    %2645 = vmatprep.subr.bf16.mxu0 0
    %2646 = vmatpush1.bf16.xpose.msra.mxu0 0
    %2647 = vmatprep.subr.bf16.mxu0 0
    %2648 = vmatpush1.bf16.xpose.msra.mxu0 0
    %2649 = vmatprep.subr.bf16.mxu0 0
    %2650 = vmatpush1.bf16.xpose.msra.mxu0 0
    %2651 = vmatprep.subr.bf16.mxu0 0
    %2652 = vmatpush1.bf16.xpose.msra.mxu0 0
    %2653 = vmatprep.subr.bf16.mxu0 0
    %2654 = vmatpush1.bf16.xpose.msra.mxu0 0
    %2655 = vmatprep.subr.bf16.mxu0 0
    %2656 = vmatpush1.bf16.xpose.msra.mxu0 0
    %2657 = vmatprep.subr.bf16.mxu0 0
    %2658 = vmatpush1.bf16.xpose.msra.mxu0 0
    %2659 = vmatprep.subr.bf16.mxu0 0
    %2660 = vmatpush1.bf16.xpose.msra.mxu0 0
    %2661 = vmatprep.subr.bf16.mxu0 0
    %2662 = vmatpush1.bf16.xpose.msra.mxu0 0
    %2663 = vmatprep.subr.bf16.mxu0 0
    %2664 = vmatpush1.bf16.xpose.msra.mxu0 0
    %2665 = vmatprep.subr.bf16.mxu0 0
    %2666 = vmatpush1.bf16.xpose.msra.mxu0 0
    %2667 = vmatprep.mubr.bf16.mxu0 0
    %2668 = vmatmul.mubr.bf16.gmra.mrb[0].mxu0 %v2627
    %v2669 = vpop.f32.mrb[0].mxu0
    %v2670 = vadd.f32 0.0, %v2669
    %v2671 = vpop.f32.mrb[0].mxu0
    %v2672 = vpop.f32.mrb[0].mxu0
    %v2673 = vpop.f32.mrb[0].mxu0
    %2674 = vdwg.mxu0
    %2677 = vrot.lane.b32.xlu0 %v2566, 64
    %v2678 = vpop.permute.xlu0 %2677
    %2679 = vrot.lane.b32.xlu0 %v2567, 64
    %v2680 = vpop.permute.xlu0 %2679
    %v2682 = vsel %vm418, %v2493, 0
    %v2685 = vsel %vm418, %v2678, 0
    %v2688 = vsel %vm418, %v2680, 0
    %2690 = vmatprep.subr.bf16.mxu0 0
    %2691 = vmatpush1.bf16.xpose.msra.mxu0 %v2685
    %2692 = vmatprep.subr.bf16.mxu0 0
    %2693 = vmatpush1.bf16.xpose.msra.mxu0 %v2688
    %2694 = vmatprep.subr.bf16.mxu0 0
    %2695 = vmatpush1.bf16.xpose.msra.mxu0 0
    %2696 = vmatprep.subr.bf16.mxu0 0
    %2697 = vmatpush1.bf16.xpose.msra.mxu0 0
    %2698 = vmatprep.subr.bf16.mxu0 0
    %2699 = vmatpush1.bf16.xpose.msra.mxu0 0
    %2700 = vmatprep.subr.bf16.mxu0 0
    %2701 = vmatpush1.bf16.xpose.msra.mxu0 0
    %2702 = vmatprep.subr.bf16.mxu0 0
    %2703 = vmatpush1.bf16.xpose.msra.mxu0 0
    %2704 = vmatprep.subr.bf16.mxu0 0
    %2705 = vmatpush1.bf16.xpose.msra.mxu0 0
    %2706 = vmatprep.subr.bf16.mxu0 0
    %2707 = vmatpush1.bf16.xpose.msra.mxu0 0
    %2708 = vmatprep.subr.bf16.mxu0 0
    %2709 = vmatpush1.bf16.xpose.msra.mxu0 0
    %2710 = vmatprep.subr.bf16.mxu0 0
    %2711 = vmatpush1.bf16.xpose.msra.mxu0 0
    %2712 = vmatprep.subr.bf16.mxu0 0
    %2713 = vmatpush1.bf16.xpose.msra.mxu0 0
    %2714 = vmatprep.subr.bf16.mxu0 0
    %2715 = vmatpush1.bf16.xpose.msra.mxu0 0
    %2716 = vmatprep.subr.bf16.mxu0 0
    %2717 = vmatpush1.bf16.xpose.msra.mxu0 0
    %2718 = vmatprep.subr.bf16.mxu0 0
    %2719 = vmatpush1.bf16.xpose.msra.mxu0 0
    %2720 = vmatprep.subr.bf16.mxu0 0
    %2721 = vmatpush1.bf16.xpose.msra.mxu0 0
    %2722 = vmatprep.mubr.bf16.mxu0 0
    %2723 = vmatmul.mubr.bf16.gmra.mrb[0].mxu0 %v2682
    %v2724 = vpop.f32.mrb[0].mxu0
    %v2725 = vadd.f32 0.0, %v2724
    %v2726 = vpop.f32.mrb[0].mxu0
    %v2727 = vpop.f32.mrb[0].mxu0
    %v2728 = vpop.f32.mrb[0].mxu0
    %2729 = vdwg.mxu0
    %2732 = vrot.lane.b32.xlu0 %v2568, 64
    %v2733 = vpop.permute.xlu0 %2732
    %2734 = vrot.lane.b32.xlu0 %v2569, 64
    %v2735 = vpop.permute.xlu0 %2734
    %v2737 = vsel %vm418, %v2494, 0
    %v2740 = vsel %vm418, %v2733, 0
    %v2743 = vsel %vm418, %v2735, 0
    %2745 = vmatprep.subr.bf16.mxu0 0
    %2746 = vmatpush1.bf16.xpose.msra.mxu0 %v2740
    %2747 = vmatprep.subr.bf16.mxu0 0
    %2748 = vmatpush1.bf16.xpose.msra.mxu0 %v2743
    %2749 = vmatprep.subr.bf16.mxu0 0
    %2750 = vmatpush1.bf16.xpose.msra.mxu0 0
    %2751 = vmatprep.subr.bf16.mxu0 0
    %2752 = vmatpush1.bf16.xpose.msra.mxu0 0
    %2753 = vmatprep.subr.bf16.mxu0 0
    %2754 = vmatpush1.bf16.xpose.msra.mxu0 0
    %2755 = vmatprep.subr.bf16.mxu0 0
    %2756 = vmatpush1.bf16.xpose.msra.mxu0 0
    %2757 = vmatprep.subr.bf16.mxu0 0
    %2758 = vmatpush1.bf16.xpose.msra.mxu0 0
    %2759 = vmatprep.subr.bf16.mxu0 0
    %2760 = vmatpush1.bf16.xpose.msra.mxu0 0
    %2761 = vmatprep.subr.bf16.mxu0 0
    %2762 = vmatpush1.bf16.xpose.msra.mxu0 0
    %2763 = vmatprep.subr.bf16.mxu0 0
    %2764 = vmatpush1.bf16.xpose.msra.mxu0 0
    %2765 = vmatprep.subr.bf16.mxu0 0
    %2766 = vmatpush1.bf16.xpose.msra.mxu0 0
    %2767 = vmatprep.subr.bf16.mxu0 0
    %2768 = vmatpush1.bf16.xpose.msra.mxu0 0
    %2769 = vmatprep.subr.bf16.mxu0 0
    %2770 = vmatpush1.bf16.xpose.msra.mxu0 0
    %2771 = vmatprep.subr.bf16.mxu0 0
    %2772 = vmatpush1.bf16.xpose.msra.mxu0 0
    %2773 = vmatprep.subr.bf16.mxu0 0
    %2774 = vmatpush1.bf16.xpose.msra.mxu0 0
    %2775 = vmatprep.subr.bf16.mxu0 0
    %2776 = vmatpush1.bf16.xpose.msra.mxu0 0
    %2777 = vmatprep.mubr.bf16.mxu0 0
    %2778 = vmatmul.mubr.bf16.gmra.mrb[0].mxu0 %v2737
    %v2779 = vpop.f32.mrb[0].mxu0
    %v2780 = vadd.f32 0.0, %v2779
    %v2781 = vpop.f32.mrb[0].mxu0
    %v2782 = vpop.f32.mrb[0].mxu0
    %v2783 = vpop.f32.mrb[0].mxu0
    %2784 = vdwg.mxu0
    %2787 = vrot.lane.b32.xlu0 %v2570, 64
    %v2788 = vpop.permute.xlu0 %2787
    %2789 = vrot.lane.b32.xlu0 %v2571, 64
    %v2790 = vpop.permute.xlu0 %2789
    %v2792 = vsel %vm418, %v2495, 0
    %v2795 = vsel %vm418, %v2788, 0
    %v2798 = vsel %vm418, %v2790, 0
    %2800 = vmatprep.subr.bf16.mxu0 0
    %2801 = vmatpush1.bf16.xpose.msra.mxu0 %v2795
    %2802 = vmatprep.subr.bf16.mxu0 0
    %2803 = vmatpush1.bf16.xpose.msra.mxu0 %v2798
    %2804 = vmatprep.subr.bf16.mxu0 0
    %2805 = vmatpush1.bf16.xpose.msra.mxu0 0
    %2806 = vmatprep.subr.bf16.mxu0 0
    %2807 = vmatpush1.bf16.xpose.msra.mxu0 0
    %2808 = vmatprep.subr.bf16.mxu0 0
    %2809 = vmatpush1.bf16.xpose.msra.mxu0 0
    %2810 = vmatprep.subr.bf16.mxu0 0
    %2811 = vmatpush1.bf16.xpose.msra.mxu0 0
    %2812 = vmatprep.subr.bf16.mxu0 0
    %2813 = vmatpush1.bf16.xpose.msra.mxu0 0
    %2814 = vmatprep.subr.bf16.mxu0 0
    %2815 = vmatpush1.bf16.xpose.msra.mxu0 0
    %2816 = vmatprep.subr.bf16.mxu0 0
    %2817 = vmatpush1.bf16.xpose.msra.mxu0 0
    %2818 = vmatprep.subr.bf16.mxu0 0
    %2819 = vmatpush1.bf16.xpose.msra.mxu0 0
    %2820 = vmatprep.subr.bf16.mxu0 0
    %2821 = vmatpush1.bf16.xpose.msra.mxu0 0
    %2822 = vmatprep.subr.bf16.mxu0 0
    %2823 = vmatpush1.bf16.xpose.msra.mxu0 0
    %2824 = vmatprep.subr.bf16.mxu0 0
    %2825 = vmatpush1.bf16.xpose.msra.mxu0 0
    %2826 = vmatprep.subr.bf16.mxu0 0
    %2827 = vmatpush1.bf16.xpose.msra.mxu0 0
    %2828 = vmatprep.subr.bf16.mxu0 0
    %2829 = vmatpush1.bf16.xpose.msra.mxu0 0
    %2830 = vmatprep.subr.bf16.mxu0 0
    %2831 = vmatpush1.bf16.xpose.msra.mxu0 0
    %2832 = vmatprep.mubr.bf16.mxu0 0
    %2833 = vmatmul.mubr.bf16.gmra.mrb[0].mxu0 %v2792
    %v2834 = vpop.f32.mrb[0].mxu0
    %v2835 = vadd.f32 0.0, %v2834
    %v2836 = vpop.f32.mrb[0].mxu0
    %v2837 = vpop.f32.mrb[0].mxu0
    %v2838 = vpop.f32.mrb[0].mxu0
    %2839 = vdwg.mxu0
    %2842 = vrot.lane.b32.xlu0 %v2572, 64
    %v2843 = vpop.permute.xlu0 %2842
    %2844 = vrot.lane.b32.xlu0 %v2573, 64
    %v2845 = vpop.permute.xlu0 %2844
    %v2847 = vsel %vm418, %v2496, 0
    %v2850 = vsel %vm418, %v2843, 0
    %v2853 = vsel %vm418, %v2845, 0
    %2855 = vmatprep.subr.bf16.mxu0 0
    %2856 = vmatpush1.bf16.xpose.msra.mxu0 %v2850
    %2857 = vmatprep.subr.bf16.mxu0 0
    %2858 = vmatpush1.bf16.xpose.msra.mxu0 %v2853
    %2859 = vmatprep.subr.bf16.mxu0 0
    %2860 = vmatpush1.bf16.xpose.msra.mxu0 0
    %2861 = vmatprep.subr.bf16.mxu0 0
    %2862 = vmatpush1.bf16.xpose.msra.mxu0 0
    %2863 = vmatprep.subr.bf16.mxu0 0
    %2864 = vmatpush1.bf16.xpose.msra.mxu0 0
    %2865 = vmatprep.subr.bf16.mxu0 0
    %2866 = vmatpush1.bf16.xpose.msra.mxu0 0
    %2867 = vmatprep.subr.bf16.mxu0 0
    %2868 = vmatpush1.bf16.xpose.msra.mxu0 0
    %2869 = vmatprep.subr.bf16.mxu0 0
    %2870 = vmatpush1.bf16.xpose.msra.mxu0 0
    %2871 = vmatprep.subr.bf16.mxu0 0
    %2872 = vmatpush1.bf16.xpose.msra.mxu0 0
    %2873 = vmatprep.subr.bf16.mxu0 0
    %2874 = vmatpush1.bf16.xpose.msra.mxu0 0
    %2875 = vmatprep.subr.bf16.mxu0 0
    %2876 = vmatpush1.bf16.xpose.msra.mxu0 0
    %2877 = vmatprep.subr.bf16.mxu0 0
    %2878 = vmatpush1.bf16.xpose.msra.mxu0 0
    %2879 = vmatprep.subr.bf16.mxu0 0
    %2880 = vmatpush1.bf16.xpose.msra.mxu0 0
    %2881 = vmatprep.subr.bf16.mxu0 0
    %2882 = vmatpush1.bf16.xpose.msra.mxu0 0
    %2883 = vmatprep.subr.bf16.mxu0 0
    %2884 = vmatpush1.bf16.xpose.msra.mxu0 0
    %2885 = vmatprep.subr.bf16.mxu0 0
    %2886 = vmatpush1.bf16.xpose.msra.mxu0 0
    %2887 = vmatprep.mubr.bf16.mxu0 0
    %2888 = vmatmul.mubr.bf16.gmra.mrb[0].mxu0 %v2847
    %v2889 = vpop.f32.mrb[0].mxu0
    %v2890 = vadd.f32 0.0, %v2889
    %v2891 = vpop.f32.mrb[0].mxu0
    %v2892 = vpop.f32.mrb[0].mxu0
    %v2893 = vpop.f32.mrb[0].mxu0
    %2894 = vdwg.mxu0
    %2897 = vrot.lane.b32.xlu0 %v2574, 64
    %v2898 = vpop.permute.xlu0 %2897
    %2899 = vrot.lane.b32.xlu0 %v2575, 64
    %v2900 = vpop.permute.xlu0 %2899
    %v2902 = vsel %vm418, %v2497, 0
    %v2905 = vsel %vm418, %v2898, 0
    %v2908 = vsel %vm418, %v2900, 0
    %2910 = vmatprep.subr.bf16.mxu0 0
    %2911 = vmatpush1.bf16.xpose.msra.mxu0 %v2905
    %2912 = vmatprep.subr.bf16.mxu0 0
    %2913 = vmatpush1.bf16.xpose.msra.mxu0 %v2908
    %2914 = vmatprep.subr.bf16.mxu0 0
    %2915 = vmatpush1.bf16.xpose.msra.mxu0 0
    %2916 = vmatprep.subr.bf16.mxu0 0
    %2917 = vmatpush1.bf16.xpose.msra.mxu0 0
    %2918 = vmatprep.subr.bf16.mxu0 0
    %2919 = vmatpush1.bf16.xpose.msra.mxu0 0
    %2920 = vmatprep.subr.bf16.mxu0 0
    %2921 = vmatpush1.bf16.xpose.msra.mxu0 0
    %2922 = vmatprep.subr.bf16.mxu0 0
    %2923 = vmatpush1.bf16.xpose.msra.mxu0 0
    %2924 = vmatprep.subr.bf16.mxu0 0
    %2925 = vmatpush1.bf16.xpose.msra.mxu0 0
    %2926 = vmatprep.subr.bf16.mxu0 0
    %2927 = vmatpush1.bf16.xpose.msra.mxu0 0
    %2928 = vmatprep.subr.bf16.mxu0 0
    %2929 = vmatpush1.bf16.xpose.msra.mxu0 0
    %2930 = vmatprep.subr.bf16.mxu0 0
    %2931 = vmatpush1.bf16.xpose.msra.mxu0 0
    %2932 = vmatprep.subr.bf16.mxu0 0
    %2933 = vmatpush1.bf16.xpose.msra.mxu0 0
    %2934 = vmatprep.subr.bf16.mxu0 0
    %2935 = vmatpush1.bf16.xpose.msra.mxu0 0
    %2936 = vmatprep.subr.bf16.mxu0 0
    %2937 = vmatpush1.bf16.xpose.msra.mxu0 0
    %2938 = vmatprep.subr.bf16.mxu0 0
    %2939 = vmatpush1.bf16.xpose.msra.mxu0 0
    %2940 = vmatprep.subr.bf16.mxu0 0
    %2941 = vmatpush1.bf16.xpose.msra.mxu0 0
    %2942 = vmatprep.mubr.bf16.mxu0 0
    %2943 = vmatmul.mubr.bf16.gmra.mrb[0].mxu0 %v2902
    %v2944 = vpop.f32.mrb[0].mxu0
    %v2945 = vadd.f32 0.0, %v2944
    %v2946 = vpop.f32.mrb[0].mxu0
    %v2947 = vpop.f32.mrb[0].mxu0
    %v2948 = vpop.f32.mrb[0].mxu0
    %2949 = vdwg.mxu0
    %2952 = vrot.lane.b32.xlu0 %v2576, 64
    %v2953 = vpop.permute.xlu0 %2952
    %2954 = vrot.lane.b32.xlu0 %v2577, 64
    %v2955 = vpop.permute.xlu0 %2954
    %v2957 = vsel %vm418, %v2498, 0
    %v2960 = vsel %vm418, %v2953, 0
    %v2963 = vsel %vm418, %v2955, 0
    %2965 = vmatprep.subr.bf16.mxu0 0
    %2966 = vmatpush1.bf16.xpose.msra.mxu0 %v2960
    %2967 = vmatprep.subr.bf16.mxu0 0
    %2968 = vmatpush1.bf16.xpose.msra.mxu0 %v2963
    %2969 = vmatprep.subr.bf16.mxu0 0
    %2970 = vmatpush1.bf16.xpose.msra.mxu0 0
    %2971 = vmatprep.subr.bf16.mxu0 0
    %2972 = vmatpush1.bf16.xpose.msra.mxu0 0
    %2973 = vmatprep.subr.bf16.mxu0 0
    %2974 = vmatpush1.bf16.xpose.msra.mxu0 0
    %2975 = vmatprep.subr.bf16.mxu0 0
    %2976 = vmatpush1.bf16.xpose.msra.mxu0 0
    %2977 = vmatprep.subr.bf16.mxu0 0
    %2978 = vmatpush1.bf16.xpose.msra.mxu0 0
    %2979 = vmatprep.subr.bf16.mxu0 0
    %2980 = vmatpush1.bf16.xpose.msra.mxu0 0
    %2981 = vmatprep.subr.bf16.mxu0 0
    %2982 = vmatpush1.bf16.xpose.msra.mxu0 0
    %2983 = vmatprep.subr.bf16.mxu0 0
    %2984 = vmatpush1.bf16.xpose.msra.mxu0 0
    %2985 = vmatprep.subr.bf16.mxu0 0
    %2986 = vmatpush1.bf16.xpose.msra.mxu0 0
    %2987 = vmatprep.subr.bf16.mxu0 0
    %2988 = vmatpush1.bf16.xpose.msra.mxu0 0
    %2989 = vmatprep.subr.bf16.mxu0 0
    %2990 = vmatpush1.bf16.xpose.msra.mxu0 0
    %2991 = vmatprep.subr.bf16.mxu0 0
    %2992 = vmatpush1.bf16.xpose.msra.mxu0 0
    %2993 = vmatprep.subr.bf16.mxu0 0
    %2994 = vmatpush1.bf16.xpose.msra.mxu0 0
    %2995 = vmatprep.subr.bf16.mxu0 0
    %2996 = vmatpush1.bf16.xpose.msra.mxu0 0
    %2997 = vmatprep.mubr.bf16.mxu0 0
    %2998 = vmatmul.mubr.bf16.gmra.mrb[0].mxu0 %v2957
    %v2999 = vpop.f32.mrb[0].mxu0
    %v3000 = vadd.f32 0.0, %v2999
    %v3001 = vpop.f32.mrb[0].mxu0
    %v3002 = vpop.f32.mrb[0].mxu0
    %v3003 = vpop.f32.mrb[0].mxu0
    %3004 = vdwg.mxu0
    %3007 = vrot.lane.b32.xlu0 %v2578, 64
    %v3008 = vpop.permute.xlu0 %3007
    %3009 = vrot.lane.b32.xlu0 %v2579, 64
    %v3010 = vpop.permute.xlu0 %3009
    %v3012 = vsel %vm418, %v2499, 0
    %v3015 = vsel %vm418, %v3008, 0
    %v3018 = vsel %vm418, %v3010, 0
    %3020 = vmatprep.subr.bf16.mxu0 0
    %3021 = vmatpush1.bf16.xpose.msra.mxu0 %v3015
    %3022 = vmatprep.subr.bf16.mxu0 0
    %3023 = vmatpush1.bf16.xpose.msra.mxu0 %v3018
    %3024 = vmatprep.subr.bf16.mxu0 0
    %3025 = vmatpush1.bf16.xpose.msra.mxu0 0
    %3026 = vmatprep.subr.bf16.mxu0 0
    %3027 = vmatpush1.bf16.xpose.msra.mxu0 0
    %3028 = vmatprep.subr.bf16.mxu0 0
    %3029 = vmatpush1.bf16.xpose.msra.mxu0 0
    %3030 = vmatprep.subr.bf16.mxu0 0
    %3031 = vmatpush1.bf16.xpose.msra.mxu0 0
    %3032 = vmatprep.subr.bf16.mxu0 0
    %3033 = vmatpush1.bf16.xpose.msra.mxu0 0
    %3034 = vmatprep.subr.bf16.mxu0 0
    %3035 = vmatpush1.bf16.xpose.msra.mxu0 0
    %3036 = vmatprep.subr.bf16.mxu0 0
    %3037 = vmatpush1.bf16.xpose.msra.mxu0 0
    %3038 = vmatprep.subr.bf16.mxu0 0
    %3039 = vmatpush1.bf16.xpose.msra.mxu0 0
    %3040 = vmatprep.subr.bf16.mxu0 0
    %3041 = vmatpush1.bf16.xpose.msra.mxu0 0
    %3042 = vmatprep.subr.bf16.mxu0 0
    %3043 = vmatpush1.bf16.xpose.msra.mxu0 0
    %3044 = vmatprep.subr.bf16.mxu0 0
    %3045 = vmatpush1.bf16.xpose.msra.mxu0 0
    %3046 = vmatprep.subr.bf16.mxu0 0
    %3047 = vmatpush1.bf16.xpose.msra.mxu0 0
    %3048 = vmatprep.subr.bf16.mxu0 0
    %3049 = vmatpush1.bf16.xpose.msra.mxu0 0
    %3050 = vmatprep.subr.bf16.mxu0 0
    %3051 = vmatpush1.bf16.xpose.msra.mxu0 0
    %3052 = vmatprep.mubr.bf16.mxu0 0
    %3053 = vmatmul.mubr.bf16.gmra.mrb[0].mxu0 %v3012
    %v3054 = vpop.f32.mrb[0].mxu0
    %v3055 = vadd.f32 0.0, %v3054
    %v3056 = vpop.f32.mrb[0].mxu0
    %v3057 = vpop.f32.mrb[0].mxu0
    %v3058 = vpop.f32.mrb[0].mxu0
    %3059 = vdwg.mxu0
    %v3060 = vsel %vm276, %v2670, -inf
    %3061 = vmax.xlane.f32.xlu0 %v3060
    %v3062 = vpop.xlane.xlu0 %3061
    %v3063 = vsel %vm276, %v2725, -inf
    %3064 = vmax.xlane.f32.xlu0 %v3063
    %v3065 = vpop.xlane.xlu0 %3064
    %v3066 = vsel %vm276, %v2780, -inf
    %3067 = vmax.xlane.f32.xlu0 %v3066
    %v3068 = vpop.xlane.xlu0 %3067
    %v3069 = vsel %vm276, %v2835, -inf
    %3070 = vmax.xlane.f32.xlu0 %v3069
    %v3071 = vpop.xlane.xlu0 %3070
    %v3072 = vsel %vm276, %v2890, -inf
    %3073 = vmax.xlane.f32.xlu0 %v3072
    %v3074 = vpop.xlane.xlu0 %3073
    %v3075 = vsel %vm276, %v2945, -inf
    %3076 = vmax.xlane.f32.xlu0 %v3075
    %v3077 = vpop.xlane.xlu0 %3076
    %v3078 = vsel %vm276, %v3000, -inf
    %3079 = vmax.xlane.f32.xlu0 %v3078
    %v3080 = vpop.xlane.xlu0 %3079
    %v3081 = vsel %vm276, %v3055, -inf
    %3082 = vmax.xlane.f32.xlu0 %v3081
    %v3083 = vpop.xlane.xlu0 %3082
    %v3084 = vsub.f32 %v2670, %v3062
    %v3085 = vsub.f32 %v2725, %v3065
    %v3086 = vsub.f32 %v2780, %v3068
    %v3087 = vsub.f32 %v2835, %v3071
    %v3088 = vsub.f32 %v2890, %v3074
    %v3089 = vsub.f32 %v2945, %v3077
    %v3090 = vsub.f32 %v3000, %v3080
    %v3091 = vsub.f32 %v3055, %v3083
    %v3092 = vmul.f32 %v3084, 1.442695
    %v3093 = vpow.pop %v3092
    %v3094 = vmul.f32 %v3085, 1.442695
    %v3095 = vpow.pop %v3094
    %v3096 = vmul.f32 %v3086, 1.442695
    %v3097 = vpow.pop %v3096
    %v3098 = vmul.f32 %v3087, 1.442695
    %v3099 = vpow.pop %v3098
    %v3100 = vmul.f32 %v3088, 1.442695
    %v3101 = vpow.pop %v3100
    %v3102 = vmul.f32 %v3089, 1.442695
    %v3103 = vpow.pop %v3102
    %v3104 = vmul.f32 %v3090, 1.442695
    %v3105 = vpow.pop %v3104
    %v3106 = vmul.f32 %v3091, 1.442695
    %v3107 = vpow.pop %v3106
    %v3108 = vpack.c.bf16 %v3093, %v3093
    %v3109 = vpack.c.bf16 %v3095, %v3095
    %v3110 = vpack.c.bf16 %v3097, %v3097
    %v3111 = vpack.c.bf16 %v3099, %v3099
    %v3112 = vpack.c.bf16 %v3101, %v3101
    %v3113 = vpack.c.bf16 %v3103, %v3103
    %v3114 = vpack.c.bf16 %v3105, %v3105
    %v3115 = vpack.c.bf16 %v3107, %v3107
    %v3124 = vunpack.c.l.b16 %v3108
    %v3125 = vunpack.c.l.b16 %v3109
    %v3126 = vunpack.c.l.b16 %v3110
    %v3127 = vunpack.c.l.b16 %v3111
    %v3128 = vunpack.c.l.b16 %v3112
    %v3129 = vunpack.c.l.b16 %v3113
    %v3130 = vunpack.c.l.b16 %v3114
    %v3131 = vunpack.c.l.b16 %v3115
    %v3132 = vpack.c.b16 %v3125, %v3124
    %v3133 = vpack.c.b16 %v3127, %v3126
    %v3134 = vpack.c.b16 %v3129, %v3128
    %v3135 = vpack.c.b16 %v3131, %v3130
    %v3137 = vsel %vm276, %v3132, 0
    %v3140 = vsel %vm276, %v3133, 0
    %v3143 = vsel %vm276, %v3134, 0
    %v3146 = vsel %vm276, %v3135, 0
    %3148 = vmatprep.subr.bf16.mxu0 0
    %3149 = vmatpush1.bf16.msra.mxu0 %v617
    %3150 = vmatprep.subr.bf16.mxu0 0
    %3151 = vmatpush1.bf16.msra.mxu0 %v618
    %3152 = vmatprep.subr.bf16.mxu0 0
    %3153 = vmatpush1.bf16.msra.mxu0 0
    %3154 = vmatprep.subr.bf16.mxu0 0
    %3155 = vmatpush1.bf16.msra.mxu0 0
    %3156 = vmatprep.subr.bf16.mxu0 0
    %3157 = vmatpush1.bf16.msra.mxu0 0
    %3158 = vmatprep.subr.bf16.mxu0 0
    %3159 = vmatpush1.bf16.msra.mxu0 0
    %3160 = vmatprep.subr.bf16.mxu0 0
    %3161 = vmatpush1.bf16.msra.mxu0 0
    %3162 = vmatprep.subr.bf16.mxu0 0
    %3163 = vmatpush1.bf16.msra.mxu0 0
    %3164 = vmatprep.subr.bf16.mxu0 0
    %3165 = vmatpush1.bf16.msra.mxu0 0
    %3166 = vmatprep.subr.bf16.mxu0 0
    %3167 = vmatpush1.bf16.msra.mxu0 0
    %3168 = vmatprep.subr.bf16.mxu0 0
    %3169 = vmatpush1.bf16.msra.mxu0 0
    %3170 = vmatprep.subr.bf16.mxu0 0
    %3171 = vmatpush1.bf16.msra.mxu0 0
    %3172 = vmatprep.subr.bf16.mxu0 0
    %3173 = vmatpush1.bf16.msra.mxu0 0
    %3174 = vmatprep.subr.bf16.mxu0 0
    %3175 = vmatpush1.bf16.msra.mxu0 0
    %3176 = vmatprep.subr.bf16.mxu0 0
    %3177 = vmatpush1.bf16.msra.mxu0 0
    %3178 = vmatprep.subr.bf16.mxu0 0
    %3179 = vmatpush1.bf16.msra.mxu0 0
    %3180 = vmatprep.mubr.bf16.mxu0 0
    %3181 = vmatmul.mubr.bf16.gmra.mrb[0].mxu0 %v3137
    %v3182 = vpop.f32.mrb[0].mxu0
    %v3183 = vadd.f32 0.0, %v3182
    %v3184 = vpop.f32.mrb[0].mxu0
    %v3185 = vpop.f32.mrb[0].mxu0
    %v3186 = vadd.f32 0.0, %v3185
    %v3187 = vpop.f32.mrb[0].mxu0
    %3188 = vmatprep.mubr.bf16.mxu0 0
    %3189 = vmatmul.mubr.bf16.gmra.mrb[0].mxu0 %v3140
    %v3190 = vpop.f32.mrb[0].mxu0
    %v3191 = vadd.f32 0.0, %v3190
    %v3192 = vpop.f32.mrb[0].mxu0
    %v3193 = vpop.f32.mrb[0].mxu0
    %v3194 = vadd.f32 0.0, %v3193
    %v3195 = vpop.f32.mrb[0].mxu0
    %3196 = vmatprep.mubr.bf16.mxu0 0
    %3197 = vmatmul.mubr.bf16.gmra.mrb[0].mxu0 %v3143
    %v3198 = vpop.f32.mrb[0].mxu0
    %v3199 = vadd.f32 0.0, %v3198
    %v3200 = vpop.f32.mrb[0].mxu0
    %v3201 = vpop.f32.mrb[0].mxu0
    %v3202 = vadd.f32 0.0, %v3201
    %v3203 = vpop.f32.mrb[0].mxu0
    %3204 = vmatprep.mubr.bf16.mxu0 0
    %3205 = vmatmul.mubr.bf16.gmra.mrb[0].mxu0 %v3146
    %v3206 = vpop.f32.mrb[0].mxu0
    %v3207 = vadd.f32 0.0, %v3206
    %v3208 = vpop.f32.mrb[0].mxu0
    %v3209 = vpop.f32.mrb[0].mxu0
    %v3210 = vadd.f32 0.0, %v3209
    %v3211 = vpop.f32.mrb[0].mxu0
    %3212 = vdwg.mxu0
    %v3214 = vsel %vm276, %v3108, 0
    %3216 = vmatprep.subr.bf16.mxu0 0
    %3217 = vmatpush1.bf16.msra.mxu0 %v2604
    %3218 = vmatprep.subr.bf16.mxu0 0
    %3219 = vmatpush1.bf16.msra.mxu0 %v2605
    %3220 = vmatprep.subr.bf16.mxu0 0
    %3221 = vmatpush1.bf16.msra.mxu0 0
    %3222 = vmatprep.subr.bf16.mxu0 0
    %3223 = vmatpush1.bf16.msra.mxu0 0
    %3224 = vmatprep.subr.bf16.mxu0 0
    %3225 = vmatpush1.bf16.msra.mxu0 0
    %3226 = vmatprep.subr.bf16.mxu0 0
    %3227 = vmatpush1.bf16.msra.mxu0 0
    %3228 = vmatprep.subr.bf16.mxu0 0
    %3229 = vmatpush1.bf16.msra.mxu0 0
    %3230 = vmatprep.subr.bf16.mxu0 0
    %3231 = vmatpush1.bf16.msra.mxu0 0
    %3232 = vmatprep.subr.bf16.mxu0 0
    %3233 = vmatpush1.bf16.msra.mxu0 0
    %3234 = vmatprep.subr.bf16.mxu0 0
    %3235 = vmatpush1.bf16.msra.mxu0 0
    %3236 = vmatprep.subr.bf16.mxu0 0
    %3237 = vmatpush1.bf16.msra.mxu0 0
    %3238 = vmatprep.subr.bf16.mxu0 0
    %3239 = vmatpush1.bf16.msra.mxu0 0
    %3240 = vmatprep.subr.bf16.mxu0 0
    %3241 = vmatpush1.bf16.msra.mxu0 0
    %3242 = vmatprep.subr.bf16.mxu0 0
    %3243 = vmatpush1.bf16.msra.mxu0 0
    %3244 = vmatprep.subr.bf16.mxu0 0
    %3245 = vmatpush1.bf16.msra.mxu0 0
    %3246 = vmatprep.subr.bf16.mxu0 0
    %3247 = vmatpush1.bf16.msra.mxu0 0
    %3248 = vmatprep.mubr.bf16.mxu0 0
    %3249 = vmatmul.mubr.bf16.gmra.mrb[0].mxu0 %v3214
    %v3250 = vpop.f32.mrb[0].mxu0
    %v3251 = vadd.f32 0.0, %v3250
    %v3252 = vpop.f32.mrb[0].mxu0
    %v3253 = vpop.f32.mrb[0].mxu0
    %v3254 = vpop.f32.mrb[0].mxu0
    %3255 = vdwg.mxu0
    %v3257 = vsel %vm276, %v3109, 0
    %3259 = vmatprep.subr.bf16.mxu0 0
    %3260 = vmatpush1.bf16.msra.mxu0 %v2606
    %3261 = vmatprep.subr.bf16.mxu0 0
    %3262 = vmatpush1.bf16.msra.mxu0 %v2607
    %3263 = vmatprep.subr.bf16.mxu0 0
    %3264 = vmatpush1.bf16.msra.mxu0 0
    %3265 = vmatprep.subr.bf16.mxu0 0
    %3266 = vmatpush1.bf16.msra.mxu0 0
    %3267 = vmatprep.subr.bf16.mxu0 0
    %3268 = vmatpush1.bf16.msra.mxu0 0
    %3269 = vmatprep.subr.bf16.mxu0 0
    %3270 = vmatpush1.bf16.msra.mxu0 0
    %3271 = vmatprep.subr.bf16.mxu0 0
    %3272 = vmatpush1.bf16.msra.mxu0 0
    %3273 = vmatprep.subr.bf16.mxu0 0
    %3274 = vmatpush1.bf16.msra.mxu0 0
    %3275 = vmatprep.subr.bf16.mxu0 0
    %3276 = vmatpush1.bf16.msra.mxu0 0
    %3277 = vmatprep.subr.bf16.mxu0 0
    %3278 = vmatpush1.bf16.msra.mxu0 0
    %3279 = vmatprep.subr.bf16.mxu0 0
    %3280 = vmatpush1.bf16.msra.mxu0 0
    %3281 = vmatprep.subr.bf16.mxu0 0
    %3282 = vmatpush1.bf16.msra.mxu0 0
    %3283 = vmatprep.subr.bf16.mxu0 0
    %3284 = vmatpush1.bf16.msra.mxu0 0
    %3285 = vmatprep.subr.bf16.mxu0 0
    %3286 = vmatpush1.bf16.msra.mxu0 0
    %3287 = vmatprep.subr.bf16.mxu0 0
    %3288 = vmatpush1.bf16.msra.mxu0 0
    %3289 = vmatprep.subr.bf16.mxu0 0
    %3290 = vmatpush1.bf16.msra.mxu0 0
    %3291 = vmatprep.mubr.bf16.mxu0 0
    %3292 = vmatmul.mubr.bf16.gmra.mrb[0].mxu0 %v3257
    %v3293 = vpop.f32.mrb[0].mxu0
    %v3294 = vadd.f32 0.0, %v3293
    %v3295 = vpop.f32.mrb[0].mxu0
    %v3296 = vpop.f32.mrb[0].mxu0
    %v3297 = vpop.f32.mrb[0].mxu0
    %3298 = vdwg.mxu0
    %v3300 = vsel %vm276, %v3110, 0
    %3302 = vmatprep.subr.bf16.mxu0 0
    %3303 = vmatpush1.bf16.msra.mxu0 %v2608
    %3304 = vmatprep.subr.bf16.mxu0 0
    %3305 = vmatpush1.bf16.msra.mxu0 %v2609
    %3306 = vmatprep.subr.bf16.mxu0 0
    %3307 = vmatpush1.bf16.msra.mxu0 0
    %3308 = vmatprep.subr.bf16.mxu0 0
    %3309 = vmatpush1.bf16.msra.mxu0 0
    %3310 = vmatprep.subr.bf16.mxu0 0
    %3311 = vmatpush1.bf16.msra.mxu0 0
    %3312 = vmatprep.subr.bf16.mxu0 0
    %3313 = vmatpush1.bf16.msra.mxu0 0
    %3314 = vmatprep.subr.bf16.mxu0 0
    %3315 = vmatpush1.bf16.msra.mxu0 0
    %3316 = vmatprep.subr.bf16.mxu0 0
    %3317 = vmatpush1.bf16.msra.mxu0 0
    %3318 = vmatprep.subr.bf16.mxu0 0
    %3319 = vmatpush1.bf16.msra.mxu0 0
    %3320 = vmatprep.subr.bf16.mxu0 0
    %3321 = vmatpush1.bf16.msra.mxu0 0
    %3322 = vmatprep.subr.bf16.mxu0 0
    %3323 = vmatpush1.bf16.msra.mxu0 0
    %3324 = vmatprep.subr.bf16.mxu0 0
    %3325 = vmatpush1.bf16.msra.mxu0 0
    %3326 = vmatprep.subr.bf16.mxu0 0
    %3327 = vmatpush1.bf16.msra.mxu0 0
    %3328 = vmatprep.subr.bf16.mxu0 0
    %3329 = vmatpush1.bf16.msra.mxu0 0
    %3330 = vmatprep.subr.bf16.mxu0 0
    %3331 = vmatpush1.bf16.msra.mxu0 0
    %3332 = vmatprep.subr.bf16.mxu0 0
    %3333 = vmatpush1.bf16.msra.mxu0 0
    %3334 = vmatprep.mubr.bf16.mxu0 0
    %3335 = vmatmul.mubr.bf16.gmra.mrb[0].mxu0 %v3300
    %v3336 = vpop.f32.mrb[0].mxu0
    %v3337 = vadd.f32 0.0, %v3336
    %v3338 = vpop.f32.mrb[0].mxu0
    %v3339 = vpop.f32.mrb[0].mxu0
    %v3340 = vpop.f32.mrb[0].mxu0
    %3341 = vdwg.mxu0
    %v3343 = vsel %vm276, %v3111, 0
    %3345 = vmatprep.subr.bf16.mxu0 0
    %3346 = vmatpush1.bf16.msra.mxu0 %v2610
    %3347 = vmatprep.subr.bf16.mxu0 0
    %3348 = vmatpush1.bf16.msra.mxu0 %v2611
    %3349 = vmatprep.subr.bf16.mxu0 0
    %3350 = vmatpush1.bf16.msra.mxu0 0
    %3351 = vmatprep.subr.bf16.mxu0 0
    %3352 = vmatpush1.bf16.msra.mxu0 0
    %3353 = vmatprep.subr.bf16.mxu0 0
    %3354 = vmatpush1.bf16.msra.mxu0 0
    %3355 = vmatprep.subr.bf16.mxu0 0
    %3356 = vmatpush1.bf16.msra.mxu0 0
    %3357 = vmatprep.subr.bf16.mxu0 0
    %3358 = vmatpush1.bf16.msra.mxu0 0
    %3359 = vmatprep.subr.bf16.mxu0 0
    %3360 = vmatpush1.bf16.msra.mxu0 0
    %3361 = vmatprep.subr.bf16.mxu0 0
    %3362 = vmatpush1.bf16.msra.mxu0 0
    %3363 = vmatprep.subr.bf16.mxu0 0
    %3364 = vmatpush1.bf16.msra.mxu0 0
    %3365 = vmatprep.subr.bf16.mxu0 0
    %3366 = vmatpush1.bf16.msra.mxu0 0
    %3367 = vmatprep.subr.bf16.mxu0 0
    %3368 = vmatpush1.bf16.msra.mxu0 0
    %3369 = vmatprep.subr.bf16.mxu0 0
    %3370 = vmatpush1.bf16.msra.mxu0 0
    %3371 = vmatprep.subr.bf16.mxu0 0
    %3372 = vmatpush1.bf16.msra.mxu0 0
    %3373 = vmatprep.subr.bf16.mxu0 0
    %3374 = vmatpush1.bf16.msra.mxu0 0
    %3375 = vmatprep.subr.bf16.mxu0 0
    %3376 = vmatpush1.bf16.msra.mxu0 0
    %3377 = vmatprep.mubr.bf16.mxu0 0
    %3378 = vmatmul.mubr.bf16.gmra.mrb[0].mxu0 %v3343
    %v3379 = vpop.f32.mrb[0].mxu0
    %v3380 = vadd.f32 0.0, %v3379
    %v3381 = vpop.f32.mrb[0].mxu0
    %v3382 = vpop.f32.mrb[0].mxu0
    %v3383 = vpop.f32.mrb[0].mxu0
    %3384 = vdwg.mxu0
    %v3386 = vsel %vm276, %v3112, 0
    %3388 = vmatprep.subr.bf16.mxu0 0
    %3389 = vmatpush1.bf16.msra.mxu0 %v2612
    %3390 = vmatprep.subr.bf16.mxu0 0
    %3391 = vmatpush1.bf16.msra.mxu0 %v2613
    %3392 = vmatprep.subr.bf16.mxu0 0
    %3393 = vmatpush1.bf16.msra.mxu0 0
    %3394 = vmatprep.subr.bf16.mxu0 0
    %3395 = vmatpush1.bf16.msra.mxu0 0
    %3396 = vmatprep.subr.bf16.mxu0 0
    %3397 = vmatpush1.bf16.msra.mxu0 0
    %3398 = vmatprep.subr.bf16.mxu0 0
    %3399 = vmatpush1.bf16.msra.mxu0 0
    %3400 = vmatprep.subr.bf16.mxu0 0
    %3401 = vmatpush1.bf16.msra.mxu0 0
    %3402 = vmatprep.subr.bf16.mxu0 0
    %3403 = vmatpush1.bf16.msra.mxu0 0
    %3404 = vmatprep.subr.bf16.mxu0 0
    %3405 = vmatpush1.bf16.msra.mxu0 0
    %3406 = vmatprep.subr.bf16.mxu0 0
    %3407 = vmatpush1.bf16.msra.mxu0 0
    %3408 = vmatprep.subr.bf16.mxu0 0
    %3409 = vmatpush1.bf16.msra.mxu0 0
    %3410 = vmatprep.subr.bf16.mxu0 0
    %3411 = vmatpush1.bf16.msra.mxu0 0
    %3412 = vmatprep.subr.bf16.mxu0 0
    %3413 = vmatpush1.bf16.msra.mxu0 0
    %3414 = vmatprep.subr.bf16.mxu0 0
    %3415 = vmatpush1.bf16.msra.mxu0 0
    %3416 = vmatprep.subr.bf16.mxu0 0
    %3417 = vmatpush1.bf16.msra.mxu0 0
    %3418 = vmatprep.subr.bf16.mxu0 0
    %3419 = vmatpush1.bf16.msra.mxu0 0
    %3420 = vmatprep.mubr.bf16.mxu0 0
    %3421 = vmatmul.mubr.bf16.gmra.mrb[0].mxu0 %v3386
    %v3422 = vpop.f32.mrb[0].mxu0
    %v3423 = vadd.f32 0.0, %v3422
    %v3424 = vpop.f32.mrb[0].mxu0
    %v3425 = vpop.f32.mrb[0].mxu0
    %v3426 = vpop.f32.mrb[0].mxu0
    %3427 = vdwg.mxu0
    %v3429 = vsel %vm276, %v3113, 0
    %3431 = vmatprep.subr.bf16.mxu0 0
    %3432 = vmatpush1.bf16.msra.mxu0 %v2614
    %3433 = vmatprep.subr.bf16.mxu0 0
    %3434 = vmatpush1.bf16.msra.mxu0 %v2615
    %3435 = vmatprep.subr.bf16.mxu0 0
    %3436 = vmatpush1.bf16.msra.mxu0 0
    %3437 = vmatprep.subr.bf16.mxu0 0
    %3438 = vmatpush1.bf16.msra.mxu0 0
    %3439 = vmatprep.subr.bf16.mxu0 0
    %3440 = vmatpush1.bf16.msra.mxu0 0
    %3441 = vmatprep.subr.bf16.mxu0 0
    %3442 = vmatpush1.bf16.msra.mxu0 0
    %3443 = vmatprep.subr.bf16.mxu0 0
    %3444 = vmatpush1.bf16.msra.mxu0 0
    %3445 = vmatprep.subr.bf16.mxu0 0
    %3446 = vmatpush1.bf16.msra.mxu0 0
    %3447 = vmatprep.subr.bf16.mxu0 0
    %3448 = vmatpush1.bf16.msra.mxu0 0
    %3449 = vmatprep.subr.bf16.mxu0 0
    %3450 = vmatpush1.bf16.msra.mxu0 0
    %3451 = vmatprep.subr.bf16.mxu0 0
    %3452 = vmatpush1.bf16.msra.mxu0 0
    %3453 = vmatprep.subr.bf16.mxu0 0
    %3454 = vmatpush1.bf16.msra.mxu0 0
    %3455 = vmatprep.subr.bf16.mxu0 0
    %3456 = vmatpush1.bf16.msra.mxu0 0
    %3457 = vmatprep.subr.bf16.mxu0 0
    %3458 = vmatpush1.bf16.msra.mxu0 0
    %3459 = vmatprep.subr.bf16.mxu0 0
    %3460 = vmatpush1.bf16.msra.mxu0 0
    %3461 = vmatprep.subr.bf16.mxu0 0
    %3462 = vmatpush1.bf16.msra.mxu0 0
    %3463 = vmatprep.mubr.bf16.mxu0 0
    %3464 = vmatmul.mubr.bf16.gmra.mrb[0].mxu0 %v3429
    %v3465 = vpop.f32.mrb[0].mxu0
    %v3466 = vadd.f32 0.0, %v3465
    %v3467 = vpop.f32.mrb[0].mxu0
    %v3468 = vpop.f32.mrb[0].mxu0
    %v3469 = vpop.f32.mrb[0].mxu0
    %3470 = vdwg.mxu0
    %v3472 = vsel %vm276, %v3114, 0
    %3474 = vmatprep.subr.bf16.mxu0 0
    %3475 = vmatpush1.bf16.msra.mxu0 %v2616
    %3476 = vmatprep.subr.bf16.mxu0 0
    %3477 = vmatpush1.bf16.msra.mxu0 %v2617
    %3478 = vmatprep.subr.bf16.mxu0 0
    %3479 = vmatpush1.bf16.msra.mxu0 0
    %3480 = vmatprep.subr.bf16.mxu0 0
    %3481 = vmatpush1.bf16.msra.mxu0 0
    %3482 = vmatprep.subr.bf16.mxu0 0
    %3483 = vmatpush1.bf16.msra.mxu0 0
    %3484 = vmatprep.subr.bf16.mxu0 0
    %3485 = vmatpush1.bf16.msra.mxu0 0
    %3486 = vmatprep.subr.bf16.mxu0 0
    %3487 = vmatpush1.bf16.msra.mxu0 0
    %3488 = vmatprep.subr.bf16.mxu0 0
    %3489 = vmatpush1.bf16.msra.mxu0 0
    %3490 = vmatprep.subr.bf16.mxu0 0
    %3491 = vmatpush1.bf16.msra.mxu0 0
    %3492 = vmatprep.subr.bf16.mxu0 0
    %3493 = vmatpush1.bf16.msra.mxu0 0
    %3494 = vmatprep.subr.bf16.mxu0 0
    %3495 = vmatpush1.bf16.msra.mxu0 0
    %3496 = vmatprep.subr.bf16.mxu0 0
    %3497 = vmatpush1.bf16.msra.mxu0 0
    %3498 = vmatprep.subr.bf16.mxu0 0
    %3499 = vmatpush1.bf16.msra.mxu0 0
    %3500 = vmatprep.subr.bf16.mxu0 0
    %3501 = vmatpush1.bf16.msra.mxu0 0
    %3502 = vmatprep.subr.bf16.mxu0 0
    %3503 = vmatpush1.bf16.msra.mxu0 0
    %3504 = vmatprep.subr.bf16.mxu0 0
    %3505 = vmatpush1.bf16.msra.mxu0 0
    %3506 = vmatprep.mubr.bf16.mxu0 0
    %3507 = vmatmul.mubr.bf16.gmra.mrb[0].mxu0 %v3472
    %v3508 = vpop.f32.mrb[0].mxu0
    %v3509 = vadd.f32 0.0, %v3508
    %v3510 = vpop.f32.mrb[0].mxu0
    %v3511 = vpop.f32.mrb[0].mxu0
    %v3512 = vpop.f32.mrb[0].mxu0
    %3513 = vdwg.mxu0
    %v3515 = vsel %vm276, %v3115, 0
    %3517 = vmatprep.subr.bf16.mxu0 0
    %3518 = vmatpush1.bf16.msra.mxu0 %v2618
    %3519 = vmatprep.subr.bf16.mxu0 0
    %3520 = vmatpush1.bf16.msra.mxu0 %v2619
    %3521 = vmatprep.subr.bf16.mxu0 0
    %3522 = vmatpush1.bf16.msra.mxu0 0
    %3523 = vmatprep.subr.bf16.mxu0 0
    %3524 = vmatpush1.bf16.msra.mxu0 0
    %3525 = vmatprep.subr.bf16.mxu0 0
    %3526 = vmatpush1.bf16.msra.mxu0 0
    %3527 = vmatprep.subr.bf16.mxu0 0
    %3528 = vmatpush1.bf16.msra.mxu0 0
    %3529 = vmatprep.subr.bf16.mxu0 0
    %3530 = vmatpush1.bf16.msra.mxu0 0
    %3531 = vmatprep.subr.bf16.mxu0 0
    %3532 = vmatpush1.bf16.msra.mxu0 0
    %3533 = vmatprep.subr.bf16.mxu0 0
    %3534 = vmatpush1.bf16.msra.mxu0 0
    %3535 = vmatprep.subr.bf16.mxu0 0
    %3536 = vmatpush1.bf16.msra.mxu0 0
    %3537 = vmatprep.subr.bf16.mxu0 0
    %3538 = vmatpush1.bf16.msra.mxu0 0
    %3539 = vmatprep.subr.bf16.mxu0 0
    %3540 = vmatpush1.bf16.msra.mxu0 0
    %3541 = vmatprep.subr.bf16.mxu0 0
    %3542 = vmatpush1.bf16.msra.mxu0 0
    %3543 = vmatprep.subr.bf16.mxu0 0
    %3544 = vmatpush1.bf16.msra.mxu0 0
    %3545 = vmatprep.subr.bf16.mxu0 0
    %3546 = vmatpush1.bf16.msra.mxu0 0
    %3547 = vmatprep.subr.bf16.mxu0 0
    %3548 = vmatpush1.bf16.msra.mxu0 0
    %3549 = vmatprep.mubr.bf16.mxu0 0
    %3550 = vmatmul.mubr.bf16.gmra.mrb[0].mxu0 %v3515
    %v3551 = vpop.f32.mrb[0].mxu0
    %v3552 = vadd.f32 0.0, %v3551
    %v3553 = vpop.f32.mrb[0].mxu0
    %v3554 = vpop.f32.mrb[0].mxu0
    %v3555 = vpop.f32.mrb[0].mxu0
    %3556 = vdwg.mxu0
    %v3557 = vrcp.pop %v3183
    %v3558 = vmul.f32 %v3251, %v3557
    %v3559 = vrcp.pop %v3186
    %v3560 = vmul.f32 %v3294, %v3559
    %v3561 = vrcp.pop %v3191
    %v3562 = vmul.f32 %v3337, %v3561
    %v3563 = vrcp.pop %v3194
    %v3564 = vmul.f32 %v3380, %v3563
    %v3565 = vrcp.pop %v3199
    %v3566 = vmul.f32 %v3423, %v3565
    %v3567 = vrcp.pop %v3202
    %v3568 = vmul.f32 %v3466, %v3567
    %v3569 = vrcp.pop %v3207
    %v3570 = vmul.f32 %v3509, %v3569
    %v3571 = vrcp.pop %v3210
    %v3572 = vmul.f32 %v3552, %v3571
    %v3573 = vpack.c.bf16 %v3560, %v3558
    %v3574 = vpack.c.bf16 %v3564, %v3562
    %v3575 = vpack.c.bf16 %v3568, %v3566
    %v3576 = vpack.c.bf16 %v3572, %v3570
    %s3577 = scalar_lea.vmem %s4, 32
    %v3578 = vld [vmem:[%s3577] sm:$0xf]
    %v3579 = vld [vmem:[%s3577 + $0x4] sm:$0xf]
    %v3580 = vld [vmem:[%s3577 + $0x8] sm:$0xf]
    %v3581 = vld [vmem:[%s3577 + $0xc] sm:$0xf]
    %v3582 = vld [vmem:[%s3577 + $0x10] sm:$0xf]
    %v3583 = vld [vmem:[%s3577 + $0x14] sm:$0xf]
    %v3584 = vld [vmem:[%s3577 + $0x18] sm:$0xf]
    %v3585 = vld [vmem:[%s3577 + $0x1c] sm:$0xf]
    %s3586 = scalar_lea.vmem [#allocation6], 1
    %v3587 = vld [vmem:[%s3586] sm:$0x1]
    %v3589 = vlaneseq
    %v3590 = vshrl.u32 %v3589, 7
    %v3591 = vsub.s32 0, %v3590
    %v3592 = vrot.slane %v3587, %v3591
    %v3602 = vunpack.c.l.b16 %v3578
    %v3603 = vunpack.c.l.b16 %v3579
    %v3604 = vunpack.c.l.b16 %v3580
    %v3605 = vunpack.c.l.b16 %v3581
    %v3606 = vunpack.c.l.b16 %v3582
    %v3607 = vunpack.c.l.b16 %v3583
    %v3608 = vunpack.c.l.b16 %v3584
    %v3609 = vunpack.c.l.b16 %v3585
    %v3610 = vpack.c.b16 %v3603, %v3602
    %v3611 = vpack.c.b16 %v3605, %v3604
    %v3612 = vpack.c.b16 %v3607, %v3606
    %v3613 = vpack.c.b16 %v3609, %v3608
    %v3619 = vsel %vm418, %v3573, 0
    %v3622 = vsel %vm418, %v3574, 0
    %v3625 = vsel %vm418, %v3575, 0
    %v3628 = vsel %vm418, %v3576, 0
    %3630 = vmatprep.subr.bf16.mxu0 0
    %3631 = vmatpush1.bf16.msra.mxu0 %v3610
    %3632 = vmatprep.subr.bf16.mxu0 0
    %3633 = vmatpush1.bf16.msra.mxu0 %v3611
    %3634 = vmatprep.subr.bf16.mxu0 0
    %3635 = vmatpush1.bf16.msra.mxu0 %v3612
    %3636 = vmatprep.subr.bf16.mxu0 0
    %3637 = vmatpush1.bf16.msra.mxu0 %v3613
    %3638 = vmatprep.subr.bf16.mxu0 0
    %3639 = vmatpush1.bf16.msra.mxu0 0
    %3640 = vmatprep.subr.bf16.mxu0 0
    %3641 = vmatpush1.bf16.msra.mxu0 0
    %3642 = vmatprep.subr.bf16.mxu0 0
    %3643 = vmatpush1.bf16.msra.mxu0 0
    %3644 = vmatprep.subr.bf16.mxu0 0
    %3645 = vmatpush1.bf16.msra.mxu0 0
    %3646 = vmatprep.subr.bf16.mxu0 0
    %3647 = vmatpush1.bf16.msra.mxu0 0
    %3648 = vmatprep.subr.bf16.mxu0 0
    %3649 = vmatpush1.bf16.msra.mxu0 0
    %3650 = vmatprep.subr.bf16.mxu0 0
    %3651 = vmatpush1.bf16.msra.mxu0 0
    %3652 = vmatprep.subr.bf16.mxu0 0
    %3653 = vmatpush1.bf16.msra.mxu0 0
    %3654 = vmatprep.subr.bf16.mxu0 0
    %3655 = vmatpush1.bf16.msra.mxu0 0
    %3656 = vmatprep.subr.bf16.mxu0 0
    %3657 = vmatpush1.bf16.msra.mxu0 0
    %3658 = vmatprep.subr.bf16.mxu0 0
    %3659 = vmatpush1.bf16.msra.mxu0 0
    %3660 = vmatprep.subr.bf16.mxu0 0
    %3661 = vmatpush1.bf16.msra.mxu0 0
    %3662 = vmatprep.mubr.bf16.mxu0 0
    %3663 = vmatmul.mubr.bf16.gmra.mrb[0].mxu0 %v3619
    %v3664 = vpop.f32.mrb[0].mxu0
    %v3665 = vadd.f32 %v3592, %v3664
    %v3666 = vpop.f32.mrb[0].mxu0
    %v3667 = vpop.f32.mrb[0].mxu0
    %v3668 = vadd.f32 %v3592, %v3667
    %v3669 = vpop.f32.mrb[0].mxu0
    %3670 = vmatprep.mubr.bf16.mxu0 0
    %3671 = vmatmul.mubr.bf16.gmra.mrb[0].mxu0 %v3622
    %v3672 = vpop.f32.mrb[0].mxu0
    %v3673 = vadd.f32 %v3592, %v3672
    %v3674 = vpop.f32.mrb[0].mxu0
    %v3675 = vpop.f32.mrb[0].mxu0
    %v3676 = vadd.f32 %v3592, %v3675
    %v3677 = vpop.f32.mrb[0].mxu0
    %3678 = vmatprep.mubr.bf16.mxu0 0
    %3679 = vmatmul.mubr.bf16.gmra.mrb[0].mxu0 %v3625
    %v3680 = vpop.f32.mrb[0].mxu0
    %v3681 = vadd.f32 %v3592, %v3680
    %v3682 = vpop.f32.mrb[0].mxu0
    %v3683 = vpop.f32.mrb[0].mxu0
    %v3684 = vadd.f32 %v3592, %v3683
    %v3685 = vpop.f32.mrb[0].mxu0
    %3686 = vmatprep.mubr.bf16.mxu0 0
    %3687 = vmatmul.mubr.bf16.gmra.mrb[0].mxu0 %v3628
    %v3688 = vpop.f32.mrb[0].mxu0
    %v3689 = vadd.f32 %v3592, %v3688
    %v3690 = vpop.f32.mrb[0].mxu0
    %v3691 = vpop.f32.mrb[0].mxu0
    %v3692 = vadd.f32 %v3592, %v3691
    %v3693 = vpop.f32.mrb[0].mxu0
    %3694 = vdwg.mxu0
    %v3695 = vadd.f32 %v2301, %v3665
    %v3696 = vadd.f32 %v2302, %v3668
    %v3697 = vadd.f32 %v2303, %v3673
    %v3698 = vadd.f32 %v2304, %v3676
    %v3699 = vadd.f32 %v2305, %v3681
    %v3700 = vadd.f32 %v2306, %v3684
    %v3701 = vadd.f32 %v2307, %v3689
    %v3702 = vadd.f32 %v2308, %v3692
    %s3703 = scalar_lea.vmem [#allocation7], 1
    %v3704 = vld [vmem:[%s3703] sm:$0x1]
    %s3705 = scalar_lea.vmem [#allocation9], 1
    %v3706 = vld [vmem:[%s3705] sm:$0x1]
    %v3707 = vsel %vm418, %v3695, 0.0
    %3708 = vadd.xlane.f32.xlu0 %v3707
    %v3709 = vpop.xlane.xlu0 %3708
    %v3710 = vsel %vm418, %v3696, 0.0
    %3711 = vadd.xlane.f32.xlu0 %v3710
    %v3712 = vpop.xlane.xlu0 %3711
    %v3713 = vsel %vm418, %v3697, 0.0
    %3714 = vadd.xlane.f32.xlu0 %v3713
    %v3715 = vpop.xlane.xlu0 %3714
    %v3716 = vsel %vm418, %v3698, 0.0
    %3717 = vadd.xlane.f32.xlu0 %v3716
    %v3718 = vpop.xlane.xlu0 %3717
    %v3719 = vsel %vm418, %v3699, 0.0
    %3720 = vadd.xlane.f32.xlu0 %v3719
    %v3721 = vpop.xlane.xlu0 %3720
    %v3722 = vsel %vm418, %v3700, 0.0
    %3723 = vadd.xlane.f32.xlu0 %v3722
    %v3724 = vpop.xlane.xlu0 %3723
    %v3725 = vsel %vm418, %v3701, 0.0
    %3726 = vadd.xlane.f32.xlu0 %v3725
    %v3727 = vpop.xlane.xlu0 %3726
    %v3728 = vsel %vm418, %v3702, 0.0
    %3729 = vadd.xlane.f32.xlu0 %v3728
    %v3730 = vpop.xlane.xlu0 %3729
    %v3731 = vmul.f32 %v3709, %v1790
    %v3732 = vmul.f32 %v3712, %v1790
    %v3733 = vmul.f32 %v3715, %v1790
    %v3734 = vmul.f32 %v3718, %v1790
    %v3735 = vmul.f32 %v3721, %v1790
    %v3736 = vmul.f32 %v3724, %v1790
    %v3737 = vmul.f32 %v3727, %v1790
    %v3738 = vmul.f32 %v3730, %v1790
    %v3739 = vsub.f32 %v3695, %v3731
    %v3740 = vsub.f32 %v3696, %v3732
    %v3741 = vsub.f32 %v3697, %v3733
    %v3742 = vsub.f32 %v3698, %v3734
    %v3743 = vsub.f32 %v3699, %v3735
    %v3744 = vsub.f32 %v3700, %v3736
    %v3745 = vsub.f32 %v3701, %v3737
    %v3746 = vsub.f32 %v3702, %v3738
    %v3747 = vmul.f32 %v3739, %v3739
    %v3748 = vmul.f32 %v3740, %v3740
    %v3749 = vmul.f32 %v3741, %v3741
    %v3750 = vmul.f32 %v3742, %v3742
    %v3751 = vmul.f32 %v3743, %v3743
    %v3752 = vmul.f32 %v3744, %v3744
    %v3753 = vmul.f32 %v3745, %v3745
    %v3754 = vmul.f32 %v3746, %v3746
    %v3755 = vsel %vm418, %v3747, 0.0
    %3756 = vadd.xlane.f32.xlu0 %v3755
    %v3757 = vpop.xlane.xlu0 %3756
    %v3758 = vsel %vm418, %v3748, 0.0
    %3759 = vadd.xlane.f32.xlu0 %v3758
    %v3760 = vpop.xlane.xlu0 %3759
    %v3761 = vsel %vm418, %v3749, 0.0
    %3762 = vadd.xlane.f32.xlu0 %v3761
    %v3763 = vpop.xlane.xlu0 %3762
    %v3764 = vsel %vm418, %v3750, 0.0
    %3765 = vadd.xlane.f32.xlu0 %v3764
    %v3766 = vpop.xlane.xlu0 %3765
    %v3767 = vsel %vm418, %v3751, 0.0
    %3768 = vadd.xlane.f32.xlu0 %v3767
    %v3769 = vpop.xlane.xlu0 %3768
    %v3770 = vsel %vm418, %v3752, 0.0
    %3771 = vadd.xlane.f32.xlu0 %v3770
    %v3772 = vpop.xlane.xlu0 %3771
    %v3773 = vsel %vm418, %v3753, 0.0
    %3774 = vadd.xlane.f32.xlu0 %v3773
    %v3775 = vpop.xlane.xlu0 %3774
    %v3776 = vsel %vm418, %v3754, 0.0
    %3777 = vadd.xlane.f32.xlu0 %v3776
    %v3778 = vpop.xlane.xlu0 %3777
    %v3779 = vmul.f32 %v3757, %v1790
    %v3780 = vmul.f32 %v3760, %v1790
    %v3781 = vmul.f32 %v3763, %v1790
    %v3782 = vmul.f32 %v3766, %v1790
    %v3783 = vmul.f32 %v3769, %v1790
    %v3784 = vmul.f32 %v3772, %v1790
    %v3785 = vmul.f32 %v3775, %v1790
    %v3786 = vmul.f32 %v3778, %v1790
    %v3787 = vadd.f32 %v3779, 1e-05
    %v3788 = vadd.f32 %v3780, 1e-05
    %v3789 = vadd.f32 %v3781, 1e-05
    %v3790 = vadd.f32 %v3782, 1e-05
    %v3791 = vadd.f32 %v3783, 1e-05
    %v3792 = vadd.f32 %v3784, 1e-05
    %v3793 = vadd.f32 %v3785, 1e-05
    %v3794 = vadd.f32 %v3786, 1e-05
    %v3795 = vrsqrt.pop %v3787
    %v3796 = vrsqrt.pop %v3788
    %v3797 = vrsqrt.pop %v3789
    %v3798 = vrsqrt.pop %v3790
    %v3799 = vrsqrt.pop %v3791
    %v3800 = vrsqrt.pop %v3792
    %v3801 = vrsqrt.pop %v3793
    %v3802 = vrsqrt.pop %v3794
    %v3803 = vmul.f32 %v3739, %v3795
    %v3804 = vmul.f32 %v3740, %v3796
    %v3805 = vmul.f32 %v3741, %v3797
    %v3806 = vmul.f32 %v3742, %v3798
    %v3807 = vmul.f32 %v3743, %v3799
    %v3808 = vmul.f32 %v3744, %v3800
    %v3809 = vmul.f32 %v3745, %v3801
    %v3810 = vmul.f32 %v3746, %v3802
    %v3812 = vlaneseq
    %v3813 = vshrl.u32 %v3812, 7
    %v3814 = vsub.s32 0, %v3813
    %v3815 = vrot.slane %v3704, %v3814
    %v3817 = vmul.f32 %v3803, %v3815
    %v3818 = vmul.f32 %v3804, %v3815
    %v3819 = vmul.f32 %v3805, %v3815
    %v3820 = vmul.f32 %v3806, %v3815
    %v3821 = vmul.f32 %v3807, %v3815
    %v3822 = vmul.f32 %v3808, %v3815
    %v3823 = vmul.f32 %v3809, %v3815
    %v3824 = vmul.f32 %v3810, %v3815
    %v3826 = vlaneseq
    %v3827 = vshrl.u32 %v3826, 7
    %v3828 = vsub.s32 0, %v3827
    %v3829 = vrot.slane %v3706, %v3828
    %v3831 = vadd.f32 %v3817, %v3829
    %v3832 = vadd.f32 %v3818, %v3829
    %v3833 = vadd.f32 %v3819, %v3829
    %v3834 = vadd.f32 %v3820, %v3829
    %v3835 = vadd.f32 %v3821, %v3829
    %v3836 = vadd.f32 %v3822, %v3829
    %v3837 = vadd.f32 %v3823, %v3829
    %v3838 = vadd.f32 %v3824, %v3829
    %v3839 = vpack.c.bf16 %v3832, %v3831
    %v3840 = vpack.c.bf16 %v3834, %v3833
    %v3841 = vpack.c.bf16 %v3836, %v3835
    %v3842 = vpack.c.bf16 %v3838, %v3837
    %s3843 = scalar_lea.vmem %s8, 32
    %v3844 = vld [vmem:[%s3843] sm:$0xf]
    %v3845 = vld [vmem:[%s3843 + $0x4] sm:$0xf]
    %v3846 = vld [vmem:[%s3843 + $0x8] sm:$0xf]
    %v3847 = vld [vmem:[%s3843 + $0xc] sm:$0xf]
    %v3848 = vld [vmem:[%s3843 + $0x10] sm:$0xf]
    %v3849 = vld [vmem:[%s3843 + $0x14] sm:$0xf]
    %v3850 = vld [vmem:[%s3843 + $0x18] sm:$0xf]
    %v3851 = vld [vmem:[%s3843 + $0x1c] sm:$0xf]
    %s3852 = scalar_lea.vmem [#allocation10], 1
    %v3853 = vld [vmem:[%s3852] sm:$0x1]
    %v3855 = vlaneseq
    %v3856 = vshrl.u32 %v3855, 7
    %v3857 = vsub.s32 0, %v3856
    %v3858 = vrot.slane %v3853, %v3857
    %v3868 = vunpack.c.l.b16 %v3844
    %v3869 = vunpack.c.l.b16 %v3845
    %v3870 = vunpack.c.l.b16 %v3846
    %v3871 = vunpack.c.l.b16 %v3847
    %v3872 = vunpack.c.l.b16 %v3848
    %v3873 = vunpack.c.l.b16 %v3849
    %v3874 = vunpack.c.l.b16 %v3850
    %v3875 = vunpack.c.l.b16 %v3851
    %v3876 = vpack.c.b16 %v3869, %v3868
    %v3877 = vpack.c.b16 %v3871, %v3870
    %v3878 = vpack.c.b16 %v3873, %v3872
    %v3879 = vpack.c.b16 %v3875, %v3874
    %v3885 = vsel %vm418, %v3839, 0
    %v3888 = vsel %vm418, %v3840, 0
    %v3891 = vsel %vm418, %v3841, 0
    %v3894 = vsel %vm418, %v3842, 0
    %3896 = vmatprep.subr.bf16.mxu0 0
    %3897 = vmatpush1.bf16.msra.mxu0 %v3876
    %3898 = vmatprep.subr.bf16.mxu0 0
    %3899 = vmatpush1.bf16.msra.mxu0 %v3877
    %3900 = vmatprep.subr.bf16.mxu0 0
    %3901 = vmatpush1.bf16.msra.mxu0 %v3878
    %3902 = vmatprep.subr.bf16.mxu0 0
    %3903 = vmatpush1.bf16.msra.mxu0 %v3879
    %3904 = vmatprep.subr.bf16.mxu0 0
    %3905 = vmatpush1.bf16.msra.mxu0 0
    %3906 = vmatprep.subr.bf16.mxu0 0
    %3907 = vmatpush1.bf16.msra.mxu0 0
    %3908 = vmatprep.subr.bf16.mxu0 0
    %3909 = vmatpush1.bf16.msra.mxu0 0
    %3910 = vmatprep.subr.bf16.mxu0 0
    %3911 = vmatpush1.bf16.msra.mxu0 0
    %3912 = vmatprep.subr.bf16.mxu0 0
    %3913 = vmatpush1.bf16.msra.mxu0 0
    %3914 = vmatprep.subr.bf16.mxu0 0
    %3915 = vmatpush1.bf16.msra.mxu0 0
    %3916 = vmatprep.subr.bf16.mxu0 0
    %3917 = vmatpush1.bf16.msra.mxu0 0
    %3918 = vmatprep.subr.bf16.mxu0 0
    %3919 = vmatpush1.bf16.msra.mxu0 0
    %3920 = vmatprep.subr.bf16.mxu0 0
    %3921 = vmatpush1.bf16.msra.mxu0 0
    %3922 = vmatprep.subr.bf16.mxu0 0
    %3923 = vmatpush1.bf16.msra.mxu0 0
    %3924 = vmatprep.subr.bf16.mxu0 0
    %3925 = vmatpush1.bf16.msra.mxu0 0
    %3926 = vmatprep.subr.bf16.mxu0 0
    %3927 = vmatpush1.bf16.msra.mxu0 0
    %3928 = vmatprep.mubr.bf16.mxu0 0
    %3929 = vmatmul.mubr.bf16.gmra.mrb[0].mxu0 %v3885
    %v3930 = vpop.f32.mrb[0].mxu0
    %v3931 = vadd.f32 %v3858, %v3930
    %v3932 = vpop.f32.mrb[0].mxu0
    %v3933 = vpop.f32.mrb[0].mxu0
    %v3934 = vadd.f32 %v3858, %v3933
    %v3935 = vpop.f32.mrb[0].mxu0
    %3936 = vmatprep.mubr.bf16.mxu0 0
    %3937 = vmatmul.mubr.bf16.gmra.mrb[0].mxu0 %v3888
    %v3938 = vpop.f32.mrb[0].mxu0
    %v3939 = vadd.f32 %v3858, %v3938
    %v3940 = vpop.f32.mrb[0].mxu0
    %v3941 = vpop.f32.mrb[0].mxu0
    %v3942 = vadd.f32 %v3858, %v3941
    %v3943 = vpop.f32.mrb[0].mxu0
    %3944 = vmatprep.mubr.bf16.mxu0 0
    %3945 = vmatmul.mubr.bf16.gmra.mrb[0].mxu0 %v3891
    %v3946 = vpop.f32.mrb[0].mxu0
    %v3947 = vadd.f32 %v3858, %v3946
    %v3948 = vpop.f32.mrb[0].mxu0
    %v3949 = vpop.f32.mrb[0].mxu0
    %v3950 = vadd.f32 %v3858, %v3949
    %v3951 = vpop.f32.mrb[0].mxu0
    %3952 = vmatprep.mubr.bf16.mxu0 0
    %3953 = vmatmul.mubr.bf16.gmra.mrb[0].mxu0 %v3894
    %v3954 = vpop.f32.mrb[0].mxu0
    %v3955 = vadd.f32 %v3858, %v3954
    %v3956 = vpop.f32.mrb[0].mxu0
    %v3957 = vpop.f32.mrb[0].mxu0
    %v3958 = vadd.f32 %v3858, %v3957
    %v3959 = vpop.f32.mrb[0].mxu0
    %3960 = vdwg.mxu0
    %v3961 = vmax.f32 %v3931, 0.0
    %v3962 = vmax.f32 %v3934, 0.0
    %v3963 = vmax.f32 %v3939, 0.0
    %v3964 = vmax.f32 %v3942, 0.0
    %v3965 = vmax.f32 %v3947, 0.0
    %v3966 = vmax.f32 %v3950, 0.0
    %v3967 = vmax.f32 %v3955, 0.0
    %v3968 = vmax.f32 %v3958, 0.0
    %v3969 = vpack.c.bf16 %v3962, %v3961
    %v3970 = vpack.c.bf16 %v3964, %v3963
    %v3971 = vpack.c.bf16 %v3966, %v3965
    %v3972 = vpack.c.bf16 %v3968, %v3967
    %s3973 = scalar_lea.vmem %s10, 64
    %v3974 = vld [vmem:[%s3973] sm:$0xf]
    %v3975 = vld [vmem:[%s3973 + $0x4] sm:$0xf]
    %v3976 = vld [vmem:[%s3973 + $0x8] sm:$0xf]
    %v3977 = vld [vmem:[%s3973 + $0xc] sm:$0xf]
    %v3978 = vld [vmem:[%s3973 + $0x10] sm:$0xf]
    %v3979 = vld [vmem:[%s3973 + $0x14] sm:$0xf]
    %v3980 = vld [vmem:[%s3973 + $0x18] sm:$0xf]
    %v3981 = vld [vmem:[%s3973 + $0x1c] sm:$0xf]
    %v3982 = vld [vmem:[%s3973 + $0x20] sm:$0xf]
    %v3983 = vld [vmem:[%s3973 + $0x24] sm:$0xf]
    %v3984 = vld [vmem:[%s3973 + $0x28] sm:$0xf]
    %v3985 = vld [vmem:[%s3973 + $0x2c] sm:$0xf]
    %v3986 = vld [vmem:[%s3973 + $0x30] sm:$0xf]
    %v3987 = vld [vmem:[%s3973 + $0x34] sm:$0xf]
    %v3988 = vld [vmem:[%s3973 + $0x38] sm:$0xf]
    %v3989 = vld [vmem:[%s3973 + $0x3c] sm:$0xf]
    %s3990 = scalar_lea.vmem [#allocation12], 1
    %v3991 = vld [vmem:[%s3990] sm:$0x1]
    %v3993 = vlaneseq
    %v3994 = vshrl.u32 %v3993, 7
    %v3995 = vsub.s32 0, %v3994
    %v3996 = vrot.slane %v3991, %v3995
    %v4014 = vunpack.c.l.b16 %v3974
    %v4015 = vunpack.c.l.b16 %v3975
    %v4016 = vunpack.c.l.b16 %v3976
    %v4017 = vunpack.c.l.b16 %v3977
    %v4018 = vunpack.c.l.b16 %v3978
    %v4019 = vunpack.c.l.b16 %v3979
    %v4020 = vunpack.c.l.b16 %v3980
    %v4021 = vunpack.c.l.b16 %v3981
    %v4022 = vunpack.c.l.b16 %v3982
    %v4023 = vunpack.c.l.b16 %v3983
    %v4024 = vunpack.c.l.b16 %v3984
    %v4025 = vunpack.c.l.b16 %v3985
    %v4026 = vunpack.c.l.b16 %v3986
    %v4027 = vunpack.c.l.b16 %v3987
    %v4028 = vunpack.c.l.b16 %v3988
    %v4029 = vunpack.c.l.b16 %v3989
    %v4030 = vpack.c.b16 %v4015, %v4014
    %v4031 = vpack.c.b16 %v4017, %v4016
    %v4032 = vpack.c.b16 %v4019, %v4018
    %v4033 = vpack.c.b16 %v4021, %v4020
    %v4034 = vpack.c.b16 %v4023, %v4022
    %v4035 = vpack.c.b16 %v4025, %v4024
    %v4036 = vpack.c.b16 %v4027, %v4026
    %v4037 = vpack.c.b16 %v4029, %v4028
    %4046 = vmatprep.subr.bf16.mxu0 0
    %4047 = vmatpush1.bf16.msra.mxu0 %v4030
    %4048 = vmatprep.subr.bf16.mxu0 0
    %4049 = vmatpush1.bf16.msra.mxu0 %v4031
    %4050 = vmatprep.subr.bf16.mxu0 0
    %4051 = vmatpush1.bf16.msra.mxu0 %v4032
    %4052 = vmatprep.subr.bf16.mxu0 0
    %4053 = vmatpush1.bf16.msra.mxu0 %v4033
    %4054 = vmatprep.subr.bf16.mxu0 0
    %4055 = vmatpush1.bf16.msra.mxu0 %v4034
    %4056 = vmatprep.subr.bf16.mxu0 0
    %4057 = vmatpush1.bf16.msra.mxu0 %v4035
    %4058 = vmatprep.subr.bf16.mxu0 0
    %4059 = vmatpush1.bf16.msra.mxu0 %v4036
    %4060 = vmatprep.subr.bf16.mxu0 0
    %4061 = vmatpush1.bf16.msra.mxu0 %v4037
    %4062 = vmatprep.subr.bf16.mxu0 0
    %4063 = vmatpush1.bf16.msra.mxu0 0
    %4064 = vmatprep.subr.bf16.mxu0 0
    %4065 = vmatpush1.bf16.msra.mxu0 0
    %4066 = vmatprep.subr.bf16.mxu0 0
    %4067 = vmatpush1.bf16.msra.mxu0 0
    %4068 = vmatprep.subr.bf16.mxu0 0
    %4069 = vmatpush1.bf16.msra.mxu0 0
    %4070 = vmatprep.subr.bf16.mxu0 0
    %4071 = vmatpush1.bf16.msra.mxu0 0
    %4072 = vmatprep.subr.bf16.mxu0 0
    %4073 = vmatpush1.bf16.msra.mxu0 0
    %4074 = vmatprep.subr.bf16.mxu0 0
    %4075 = vmatpush1.bf16.msra.mxu0 0
    %4076 = vmatprep.subr.bf16.mxu0 0
    %4077 = vmatpush1.bf16.msra.mxu0 0
    %4078 = vmatprep.mubr.bf16.mxu0 0
    %4079 = vmatmul.mubr.bf16.gmra.mrb[0].mxu0 %v3969
    %v4080 = vpop.f32.mrb[0].mxu0
    %v4081 = vadd.f32 %v3996, %v4080
    %v4082 = vpop.f32.mrb[0].mxu0
    %v4083 = vpop.f32.mrb[0].mxu0
    %v4084 = vadd.f32 %v3996, %v4083
    %v4085 = vpop.f32.mrb[0].mxu0
    %4086 = vmatprep.mubr.bf16.mxu0 0
    %4087 = vmatmul.mubr.bf16.gmra.mrb[0].mxu0 %v3970
    %v4088 = vpop.f32.mrb[0].mxu0
    %v4089 = vadd.f32 %v3996, %v4088
    %v4090 = vpop.f32.mrb[0].mxu0
    %v4091 = vpop.f32.mrb[0].mxu0
    %v4092 = vadd.f32 %v3996, %v4091
    %v4093 = vpop.f32.mrb[0].mxu0
    %4094 = vmatprep.mubr.bf16.mxu0 0
    %4095 = vmatmul.mubr.bf16.gmra.mrb[0].mxu0 %v3971
    %v4096 = vpop.f32.mrb[0].mxu0
    %v4097 = vadd.f32 %v3996, %v4096
    %v4098 = vpop.f32.mrb[0].mxu0
    %v4099 = vpop.f32.mrb[0].mxu0
    %v4100 = vadd.f32 %v3996, %v4099
    %v4101 = vpop.f32.mrb[0].mxu0
    %4102 = vmatprep.mubr.bf16.mxu0 0
    %4103 = vmatmul.mubr.bf16.gmra.mrb[0].mxu0 %v3972
    %v4104 = vpop.f32.mrb[0].mxu0
    %v4105 = vadd.f32 %v3996, %v4104
    %v4106 = vpop.f32.mrb[0].mxu0
    %v4107 = vpop.f32.mrb[0].mxu0
    %v4108 = vadd.f32 %v3996, %v4107
    %v4109 = vpop.f32.mrb[0].mxu0
    %4110 = vdwg.mxu0
    %v4111 = vadd.f32 %v3831, %v4081
    %v4112 = vadd.f32 %v3832, %v4084
    %v4113 = vadd.f32 %v3833, %v4089
    %v4114 = vadd.f32 %v3834, %v4092
    %v4115 = vadd.f32 %v3835, %v4097
    %v4116 = vadd.f32 %v3836, %v4100
    %v4117 = vadd.f32 %v3837, %v4105
    %v4118 = vadd.f32 %v3838, %v4108
    %s4119 = scalar_lea.vmem [#allocation13], 1
    %v4120 = vld [vmem:[%s4119] sm:$0x1]
    %s4121 = scalar_lea.vmem [#allocation15], 1
    %v4122 = vld [vmem:[%s4121] sm:$0x1]
    %v4123 = vsel %vm418, %v4111, 0.0
    %4124 = vadd.xlane.f32.xlu0 %v4123
    %v4125 = vpop.xlane.xlu0 %4124
    %v4126 = vsel %vm418, %v4112, 0.0
    %4127 = vadd.xlane.f32.xlu0 %v4126
    %v4128 = vpop.xlane.xlu0 %4127
    %v4129 = vsel %vm418, %v4113, 0.0
    %4130 = vadd.xlane.f32.xlu0 %v4129
    %v4131 = vpop.xlane.xlu0 %4130
    %v4132 = vsel %vm418, %v4114, 0.0
    %4133 = vadd.xlane.f32.xlu0 %v4132
    %v4134 = vpop.xlane.xlu0 %4133
    %v4135 = vsel %vm418, %v4115, 0.0
    %4136 = vadd.xlane.f32.xlu0 %v4135
    %v4137 = vpop.xlane.xlu0 %4136
    %v4138 = vsel %vm418, %v4116, 0.0
    %4139 = vadd.xlane.f32.xlu0 %v4138
    %v4140 = vpop.xlane.xlu0 %4139
    %v4141 = vsel %vm418, %v4117, 0.0
    %4142 = vadd.xlane.f32.xlu0 %v4141
    %v4143 = vpop.xlane.xlu0 %4142
    %v4144 = vsel %vm418, %v4118, 0.0
    %4145 = vadd.xlane.f32.xlu0 %v4144
    %v4146 = vpop.xlane.xlu0 %4145
    %v4147 = vmul.f32 %v4125, %v1790
    %v4148 = vmul.f32 %v4128, %v1790
    %v4149 = vmul.f32 %v4131, %v1790
    %v4150 = vmul.f32 %v4134, %v1790
    %v4151 = vmul.f32 %v4137, %v1790
    %v4152 = vmul.f32 %v4140, %v1790
    %v4153 = vmul.f32 %v4143, %v1790
    %v4154 = vmul.f32 %v4146, %v1790
    %v4155 = vsub.f32 %v4111, %v4147
    %v4156 = vsub.f32 %v4112, %v4148
    %v4157 = vsub.f32 %v4113, %v4149
    %v4158 = vsub.f32 %v4114, %v4150
    %v4159 = vsub.f32 %v4115, %v4151
    %v4160 = vsub.f32 %v4116, %v4152
    %v4161 = vsub.f32 %v4117, %v4153
    %v4162 = vsub.f32 %v4118, %v4154
    %v4163 = vmul.f32 %v4155, %v4155
    %v4164 = vmul.f32 %v4156, %v4156
    %v4165 = vmul.f32 %v4157, %v4157
    %v4166 = vmul.f32 %v4158, %v4158
    %v4167 = vmul.f32 %v4159, %v4159
    %v4168 = vmul.f32 %v4160, %v4160
    %v4169 = vmul.f32 %v4161, %v4161
    %v4170 = vmul.f32 %v4162, %v4162
    %v4171 = vsel %vm418, %v4163, 0.0
    %4172 = vadd.xlane.f32.xlu0 %v4171
    %v4173 = vpop.xlane.xlu0 %4172
    %v4174 = vsel %vm418, %v4164, 0.0
    %4175 = vadd.xlane.f32.xlu0 %v4174
    %v4176 = vpop.xlane.xlu0 %4175
    %v4177 = vsel %vm418, %v4165, 0.0
    %4178 = vadd.xlane.f32.xlu0 %v4177
    %v4179 = vpop.xlane.xlu0 %4178
    %v4180 = vsel %vm418, %v4166, 0.0
    %4181 = vadd.xlane.f32.xlu0 %v4180
    %v4182 = vpop.xlane.xlu0 %4181
    %v4183 = vsel %vm418, %v4167, 0.0
    %4184 = vadd.xlane.f32.xlu0 %v4183
    %v4185 = vpop.xlane.xlu0 %4184
    %v4186 = vsel %vm418, %v4168, 0.0
    %4187 = vadd.xlane.f32.xlu0 %v4186
    %v4188 = vpop.xlane.xlu0 %4187
    %v4189 = vsel %vm418, %v4169, 0.0
    %4190 = vadd.xlane.f32.xlu0 %v4189
    %v4191 = vpop.xlane.xlu0 %4190
    %v4192 = vsel %vm418, %v4170, 0.0
    %4193 = vadd.xlane.f32.xlu0 %v4192
    %v4194 = vpop.xlane.xlu0 %4193
    %v4195 = vmul.f32 %v4173, %v1790
    %v4196 = vmul.f32 %v4176, %v1790
    %v4197 = vmul.f32 %v4179, %v1790
    %v4198 = vmul.f32 %v4182, %v1790
    %v4199 = vmul.f32 %v4185, %v1790
    %v4200 = vmul.f32 %v4188, %v1790
    %v4201 = vmul.f32 %v4191, %v1790
    %v4202 = vmul.f32 %v4194, %v1790
    %v4203 = vadd.f32 %v4195, 1e-05
    %v4204 = vadd.f32 %v4196, 1e-05
    %v4205 = vadd.f32 %v4197, 1e-05
    %v4206 = vadd.f32 %v4198, 1e-05
    %v4207 = vadd.f32 %v4199, 1e-05
    %v4208 = vadd.f32 %v4200, 1e-05
    %v4209 = vadd.f32 %v4201, 1e-05
    %v4210 = vadd.f32 %v4202, 1e-05
    %v4211 = vrsqrt.pop %v4203
    %v4212 = vrsqrt.pop %v4204
    %v4213 = vrsqrt.pop %v4205
    %v4214 = vrsqrt.pop %v4206
    %v4215 = vrsqrt.pop %v4207
    %v4216 = vrsqrt.pop %v4208
    %v4217 = vrsqrt.pop %v4209
    %v4218 = vrsqrt.pop %v4210
    %v4219 = vmul.f32 %v4155, %v4211
    %v4220 = vmul.f32 %v4156, %v4212
    %v4221 = vmul.f32 %v4157, %v4213
    %v4222 = vmul.f32 %v4158, %v4214
    %v4223 = vmul.f32 %v4159, %v4215
    %v4224 = vmul.f32 %v4160, %v4216
    %v4225 = vmul.f32 %v4161, %v4217
    %v4226 = vmul.f32 %v4162, %v4218
    %v4228 = vlaneseq
    %v4229 = vshrl.u32 %v4228, 7
    %v4230 = vsub.s32 0, %v4229
    %v4231 = vrot.slane %v4120, %v4230
    %v4233 = vmul.f32 %v4219, %v4231
    %v4234 = vmul.f32 %v4220, %v4231
    %v4235 = vmul.f32 %v4221, %v4231
    %v4236 = vmul.f32 %v4222, %v4231
    %v4237 = vmul.f32 %v4223, %v4231
    %v4238 = vmul.f32 %v4224, %v4231
    %v4239 = vmul.f32 %v4225, %v4231
    %v4240 = vmul.f32 %v4226, %v4231
    %v4242 = vlaneseq
    %v4243 = vshrl.u32 %v4242, 7
    %v4244 = vsub.s32 0, %v4243
    %v4245 = vrot.slane %v4122, %v4244
    %v4247 = vadd.f32 %v4233, %v4245
    %v4248 = vadd.f32 %v4234, %v4245
    %v4249 = vadd.f32 %v4235, %v4245
    %v4250 = vadd.f32 %v4236, %v4245
    %v4251 = vadd.f32 %v4237, %v4245
    %v4252 = vadd.f32 %v4238, %v4245
    %v4253 = vadd.f32 %v4239, %v4245
    %v4254 = vadd.f32 %v4240, %v4245
    %v4255 = vpack.c.bf16 %v4247, %v4247
    %v4256 = vpack.c.bf16 %v4248, %v4248
    %v4257 = vpack.c.bf16 %v4249, %v4249
    %v4258 = vpack.c.bf16 %v4250, %v4250
    %v4259 = vpack.c.bf16 %v4251, %v4251
    %v4260 = vpack.c.bf16 %v4252, %v4252
    %v4261 = vpack.c.bf16 %v4253, %v4253
    %v4262 = vpack.c.bf16 %v4254, %v4254
    %v4263 = vld [vmem:[#allocation16] sm:$0xf]
    %v4264 = vld [vmem:[#allocation16 + $0x4] sm:$0xf]
    %v4265 = vld [vmem:[#allocation16 + $0x8] sm:$0xf]
    %v4266 = vld [vmem:[#allocation16 + $0xc] sm:$0xf]
    %v4267 = vld [vmem:[#allocation16 + $0x10] sm:$0xf]
    %v4268 = vld [vmem:[#allocation16 + $0x14] sm:$0xf]
    %v4269 = vld [vmem:[#allocation16 + $0x18] sm:$0xf]
    %v4270 = vld [vmem:[#allocation16 + $0x1c] sm:$0xf]
    %v4271 = vld [vmem:[#allocation18] sm:$0x1]
    %v4273 = vlaneseq
    %v4274 = vshrl.u32 %v4273, 7
    %v4275 = vsub.s32 0, %v4274
    %v4276 = vrot.slane %v4271, %v4275
    %v4286 = vunpack.c.l.b16 %v4255
    %v4287 = vunpack.c.l.b16 %v4256
    %v4288 = vunpack.c.l.b16 %v4257
    %v4289 = vunpack.c.l.b16 %v4258
    %v4290 = vunpack.c.l.b16 %v4259
    %v4291 = vunpack.c.l.b16 %v4260
    %v4292 = vunpack.c.l.b16 %v4261
    %v4293 = vunpack.c.l.b16 %v4262
    %v4294 = vrot.slane %v4287, 7
    %vm4295 = vcmask 1041409
    %v4296 = vsel %vm4295, %v4294, %v4286
    %v4297 = vrot.slane %v4288, 6
    %vm4298 = vcmask 1042434
    %v4299 = vsel %vm4298, %v4297, %v4296
    %v4300 = vrot.slane %v4289, 5
    %vm4301 = vcmask 1043459
    %v4302 = vsel %vm4301, %v4300, %v4299
    %v4303 = vrot.slane %v4290, 4
    %vm4304 = vcmask 1044484
    %v4305 = vsel %vm4304, %v4303, %v4302
    %v4306 = vrot.slane %v4291, 3
    %vm4307 = vcmask 1045509
    %v4308 = vsel %vm4307, %v4306, %v4305
    %v4309 = vrot.slane %v4292, 2
    %vm4310 = vcmask 1046534
    %v4311 = vsel %vm4310, %v4309, %v4308
    %v4312 = vrot.slane %v4293, 1
    %vm4313 = vcmask 1047559
    %v4314 = vsel %vm4313, %v4312, %v4311
    %v4315 = vpack.c.b16 %v4314, %v4314
    %v4324 = vunpack.c.l.b16 %v4263
    %v4325 = vunpack.c.l.b16 %v4264
    %v4326 = vunpack.c.l.b16 %v4265
    %v4327 = vunpack.c.l.b16 %v4266
    %v4328 = vunpack.c.l.b16 %v4267
    %v4329 = vunpack.c.l.b16 %v4268
    %v4330 = vunpack.c.l.b16 %v4269
    %v4331 = vunpack.c.l.b16 %v4270
    %v4332 = vpack.c.b16 %v4325, %v4324
    %v4333 = vpack.c.b16 %v4327, %v4326
    %v4334 = vpack.c.b16 %v4329, %v4328
    %v4335 = vpack.c.b16 %v4331, %v4330
    %v4341 = vsel %vm418, %v4315, 0
    %4343 = vmatprep.subr.bf16.mxu0 0
    %4344 = vmatpush1.bf16.msra.mxu0 %v4332
    %4345 = vmatprep.subr.bf16.mxu0 0
    %4346 = vmatpush1.bf16.msra.mxu0 %v4333
    %4347 = vmatprep.subr.bf16.mxu0 0
    %4348 = vmatpush1.bf16.msra.mxu0 %v4334
    %4349 = vmatprep.subr.bf16.mxu0 0
    %4350 = vmatpush1.bf16.msra.mxu0 %v4335
    %4351 = vmatprep.subr.bf16.mxu0 0
    %4352 = vmatpush1.bf16.msra.mxu0 0
    %4353 = vmatprep.subr.bf16.mxu0 0
    %4354 = vmatpush1.bf16.msra.mxu0 0
    %4355 = vmatprep.subr.bf16.mxu0 0
    %4356 = vmatpush1.bf16.msra.mxu0 0
    %4357 = vmatprep.subr.bf16.mxu0 0
    %4358 = vmatpush1.bf16.msra.mxu0 0
    %4359 = vmatprep.subr.bf16.mxu0 0
    %4360 = vmatpush1.bf16.msra.mxu0 0
    %4361 = vmatprep.subr.bf16.mxu0 0
    %4362 = vmatpush1.bf16.msra.mxu0 0
    %4363 = vmatprep.subr.bf16.mxu0 0
    %4364 = vmatpush1.bf16.msra.mxu0 0
    %4365 = vmatprep.subr.bf16.mxu0 0
    %4366 = vmatpush1.bf16.msra.mxu0 0
    %4367 = vmatprep.subr.bf16.mxu0 0
    %4368 = vmatpush1.bf16.msra.mxu0 0
    %4369 = vmatprep.subr.bf16.mxu0 0
    %4370 = vmatpush1.bf16.msra.mxu0 0
    %4371 = vmatprep.subr.bf16.mxu0 0
    %4372 = vmatpush1.bf16.msra.mxu0 0
    %4373 = vmatprep.subr.bf16.mxu0 0
    %4374 = vmatpush1.bf16.msra.mxu0 0
    %4375 = vmatprep.mubr.bf16.mxu0 0
    %4376 = vmatmul.mubr.bf16.gmra.mrb[0].mxu0 %v4341
    %v4377 = vpop.f32.mrb[0].mxu0
    %v4378 = vadd.f32 %v4276, %v4377
    %v4379 = vpop.f32.mrb[0].mxu0
    %v4380 = vpop.f32.mrb[0].mxu0
    %v4381 = vpop.f32.mrb[0].mxu0
    %4382 = vdwg.mxu0
    %4383 = vst [vmem:[%s17] sm:$0xff] %v4378
    // Predicated region
    $region114: #{_forward_padded.1} parent=1 // pred_check
      _
    $region115: #{_forward_padded.1} parent=1 // pred_check_branch
      %4385 = sbr.rel (0) target = $region117
    $region116: #{_forward_padded.1} parent=1 // pred_region
      _
    $region117: #{_forward_padded.1} parent=1 // pred_fallthru
      _
    // Predicated region
    $region118: #{_forward_padded.1} parent=1 // pred_check
      _
    $region119: #{_forward_padded.1} parent=1 // pred_check_branch
      %4387 = sbr.rel (0) target = $region121
    $region120: #{_forward_padded.1} parent=1 // pred_region
      _
    $region121: #{_forward_padded.1} parent=1 // pred_fallthru
      _
    %4388 = vsyncpa [#allocation3], 1
    %4389 = vsyncpa [#allocation5], 1
    %4390 = vsyncpa [#allocation8], 1
    %4391 = vsyncpa [#allocation11], 1
    %4392 = vsyncpa [#allocation14], 1
    %4393 = vsyncpa [#allocation17], 1

</llo_original>
